<compile_context>
chip_gen: v7x
topology: tpu7x:2x2x1
jax: 0.10.0
libtpu: 0.0.40
codegen_flags: <defaults>
</compile_context>

<pallas_src>
import math
import functools

import jax
import jax.numpy as jnp
from jax import lax
from jax.experimental import pallas as pl
from jax.experimental.pallas import tpu as pltpu

LANE = 128  # MXU / vreg lane width; conv output channels padded to this


def _output_proj_kernel(x_ref, w_ref, b_ref, o_ref, *, H, W, C):
    """One batch image per grid step.

    x_ref: (1, H+2, W+2, C)  bf16  spatially zero-padded NHWC activation
    w_ref: (9, C, LANE)      bf16  conv weight, indexed by kh*3+kw, cout padded
    b_ref: (1, LANE)         f32   bias (lane padded)
    o_ref: (1, H*W, LANE)    f32   output (lane-padded channels)
    """
    acc = jnp.zeros((H * W, LANE), jnp.float32)
    # 3x3 conv = sum of 9 shifted GEMMs; patches are built in VMEM/vregs only,
    # never materialized in HBM (no 9x im2col traffic).
    for kh in range(3):
        for kw in range(3):
            a = x_ref[0, kh:kh + H, kw:kw + W, :].reshape(H * W, C)
            acc += jnp.dot(a, w_ref[kh * 3 + kw],
                           preferred_element_type=jnp.float32)
    acc = acc + b_ref[...]          # f32 bias add (broadcast over rows)
    o_ref[0] = acc                  # final module output stays f32


def output_proj(x_blc, w, b):
    """OutputProj.forward.  x: (B, L, C), w: (Cout, Cin, 3, 3), b: (Cout,)."""
    B, L, C = x_blc.shape
    H = int(math.sqrt(L))
    W = int(math.sqrt(L))
    Cout = w.shape[0]
    assert H * W == L and w.shape == (Cout, C, 3, 3)

    # (B, L, C) -> NHWC (same values as torch's transpose(1,2).view(B,C,H,W)),
    # zero-pad spatially (padding=1), cast activation to bf16 for the MXU/DMA.
    x_nhwc = x_blc.reshape(B, H, W, C)
    x_pad = jnp.pad(x_nhwc, ((0, 0), (1, 1), (1, 1), (0, 0))).astype(jnp.bfloat16)

    # Pack weights once: (Cout, Cin, kh, kw) -> (kh*3+kw, Cin, LANE), bf16.
    w_k = jnp.transpose(w, (2, 3, 1, 0)).reshape(9, C, Cout)
    w_k = jnp.pad(w_k, ((0, 0), (0, 0), (0, LANE - Cout))).astype(jnp.bfloat16)
    b_p = jnp.pad(b.astype(jnp.float32), (0, LANE - Cout)).reshape(1, LANE)

    kernel = functools.partial(_output_proj_kernel, H=H, W=W, C=C)

    flops = 2 * B * H * W * 9 * C * LANE
    bytes_accessed = (x_pad.size * 2 + w_k.size * 2 + b_p.size * 4
                      + B * H * W * LANE * 4)

    out = pl.pallas_call(
        kernel,
        out_shape=jax.ShapeDtypeStruct((B, H * W, LANE), jnp.float32),
        grid_spec=pltpu.PrefetchScalarGridSpec(
            num_scalar_prefetch=0,
            grid=(B,),
            in_specs=[
                pl.BlockSpec((1, H + 2, W + 2, C), lambda bb: (bb, 0, 0, 0)),
                pl.BlockSpec((9, C, LANE), lambda bb: (0, 0, 0)),
                pl.BlockSpec((1, LANE), lambda bb: (0, 0)),
            ],
            out_specs=pl.BlockSpec((1, H * W, LANE), lambda bb: (bb, 0, 0)),
        ),
        compiler_params=pltpu.CompilerParams(
            dimension_semantics=("parallel",),
            vmem_limit_bytes=32 * 1024 * 1024,
        ),
        cost_estimate=pl.CostEstimate(
            flops=flops, transcendentals=0, bytes_accessed=bytes_accessed),
    )(x_pad, w_k, b_p)

    out = out[:, :, :Cout]                    # drop lane padding -> (B, H*W, Cout)
    out = jnp.transpose(out, (0, 2, 1))       # (B, Cout, H*W)
    return out.reshape(B, Cout, H, W)

    # TODO(synk): optional act_layer / norm_layer (None by default in the module)
    # are not implemented; would be a fused epilogue on `acc` if ever needed.


def _reference(x_blc, w, b):
    """Pure-JAX reference (operands rounded to bf16 to match kernel inputs)."""
    B, L, C = x_blc.shape
    H = W = int(math.sqrt(L))
    x_nchw = jnp.transpose(x_blc, (0, 2, 1)).reshape(B, C, H, W)
    xb = x_nchw.astype(jnp.bfloat16).astype(jnp.float32)
    wb = w.astype(jnp.bfloat16).astype(jnp.float32)
    out = lax.conv_general_dilated(
        xb, wb, window_strides=(1, 1), padding=((1, 1), (1, 1)),
        dimension_numbers=("NCHW", "OIHW", "NCHW"),
        precision=lax.Precision.HIGHEST)
    return out + b[None, :, None, None]


if __name__ == "__main__":
    key = jax.random.PRNGKey(0)
    kx, kw_, kb = jax.random.split(key, 3)

    B, H, W, Cin, Cout = 2, 16, 16, 32, 3
    x = jax.random.normal(kx, (B, H * W, Cin), jnp.float32)     # (B, L, C)
    bound = 1.0 / math.sqrt(Cin * 3 * 3)
    w = jax.random.uniform(kw_, (Cout, Cin, 3, 3), jnp.float32, -bound, bound)
    b = jax.random.uniform(kb, (Cout,), jnp.float32, -bound, bound)

    fwd = jax.jit(output_proj)
    out = jax.block_until_ready(fwd(x, w, b))

    assert out.shape == (B, Cout, H, W), out.shape
    assert bool(jnp.all(jnp.isfinite(out)))

    ref = _reference(x, w, b)
    max_err = float(jnp.max(jnp.abs(out - ref)))
    assert max_err < 2e-2, f"max abs err {max_err}"

    print("KERNEL_OK")
</pallas_src>

<mosaic_0001>
module attributes {stable_mosaic.version = 11 : i64} {
  func.func @_output_proj_kernel(%arg0: i32, %arg1: memref<1x18x18x32xbf16, #tpu.memory_space<vmem>>, %arg2: memref<9x32x128xbf16, #tpu.memory_space<vmem>>, %arg3: memref<1x128xf32, #tpu.memory_space<vmem>>, %arg4: memref<1x256x128xf32, #tpu.memory_space<vmem>>) attributes {dimension_semantics = [#tpu.dimension_semantics<parallel>], iteration_bounds = array<i64: 2>, scalar_prefetch = 0 : i64, scratch_operands = 0 : i64, tpu.core_type = #tpu.core_type<tc>, window_params = [{transform_indices = @transform_0, window_bounds = array<i64: 1, 18, 18, 32>}, {pipeline_mode = #tpu.pipeline_mode<synchronous>, transform_indices = @transform_1, window_bounds = array<i64: 9, 32, 128>}, {pipeline_mode = #tpu.pipeline_mode<synchronous>, transform_indices = @transform_2, window_bounds = array<i64: 1, 128>}, {transform_indices = @transform_3, window_bounds = array<i64: 1, 256, 128>}]} {
    %cst = arith.constant 0.000000e+00 : f32
    %0 = vector.broadcast %cst : f32 to vector<256x128xf32>
    %c0 = arith.constant 0 : index
    %c0_0 = arith.constant 0 : index
    %c0_1 = arith.constant 0 : index
    %c0_2 = arith.constant 0 : index
    %1 = vector.load %arg1[%c0, %c0_0, %c0_1, %c0_2] : memref<1x18x18x32xbf16, #tpu.memory_space<vmem>>, vector<1x16x16x32xbf16>
    %2 = vector.shape_cast %1 : vector<1x16x16x32xbf16> to vector<16x16x32xbf16>
    %3 = vector.shape_cast %2 : vector<16x16x32xbf16> to vector<256x32xbf16>
    %c0_3 = arith.constant 0 : index
    %c0_4 = arith.constant 0 : index
    %c0_5 = arith.constant 0 : index
    %4 = vector.load %arg2[%c0_3, %c0_4, %c0_5] : memref<9x32x128xbf16, #tpu.memory_space<vmem>>, vector<1x32x128xbf16>
    %5 = vector.shape_cast %4 : vector<1x32x128xbf16> to vector<32x128xbf16>
    %cst_6 = arith.constant dense<0.000000e+00> : vector<256x128xf32>
    %6 = tpu.matmul %3, %5, %cst_6 {dimension_numbers = #tpu.dot_dimension_numbers<[1], [0], [0], [1], [0, 0, 1, 1], [], []>} : vector<256x32xbf16>, vector<32x128xbf16>, vector<256x128xf32> -> vector<256x128xf32>
    %7 = arith.addf %0, %6 : vector<256x128xf32>
    %c0_7 = arith.constant 0 : index
    %c0_8 = arith.constant 0 : index
    %c1 = arith.constant 1 : index
    %c0_9 = arith.constant 0 : index
    %8 = vector.load %arg1[%c0_7, %c0_8, %c1, %c0_9] : memref<1x18x18x32xbf16, #tpu.memory_space<vmem>>, vector<1x16x16x32xbf16>
    %9 = vector.shape_cast %8 : vector<1x16x16x32xbf16> to vector<16x16x32xbf16>
    %10 = vector.shape_cast %9 : vector<16x16x32xbf16> to vector<256x32xbf16>
    %c1_10 = arith.constant 1 : index
    %c0_11 = arith.constant 0 : index
    %c0_12 = arith.constant 0 : index
    %11 = vector.load %arg2[%c1_10, %c0_11, %c0_12] : memref<9x32x128xbf16, #tpu.memory_space<vmem>>, vector<1x32x128xbf16>
    %12 = vector.shape_cast %11 : vector<1x32x128xbf16> to vector<32x128xbf16>
    %cst_13 = arith.constant dense<0.000000e+00> : vector<256x128xf32>
    %13 = tpu.matmul %10, %12, %cst_13 {dimension_numbers = #tpu.dot_dimension_numbers<[1], [0], [0], [1], [0, 0, 1, 1], [], []>} : vector<256x32xbf16>, vector<32x128xbf16>, vector<256x128xf32> -> vector<256x128xf32>
    %14 = arith.addf %7, %13 : vector<256x128xf32>
    %c0_14 = arith.constant 0 : index
    %c0_15 = arith.constant 0 : index
    %c2 = arith.constant 2 : index
    %c0_16 = arith.constant 0 : index
    %15 = vector.load %arg1[%c0_14, %c0_15, %c2, %c0_16] : memref<1x18x18x32xbf16, #tpu.memory_space<vmem>>, vector<1x16x16x32xbf16>
    %16 = vector.shape_cast %15 : vector<1x16x16x32xbf16> to vector<16x16x32xbf16>
    %17 = vector.shape_cast %16 : vector<16x16x32xbf16> to vector<256x32xbf16>
    %c2_17 = arith.constant 2 : index
    %c0_18 = arith.constant 0 : index
    %c0_19 = arith.constant 0 : index
    %18 = vector.load %arg2[%c2_17, %c0_18, %c0_19] : memref<9x32x128xbf16, #tpu.memory_space<vmem>>, vector<1x32x128xbf16>
    %19 = vector.shape_cast %18 : vector<1x32x128xbf16> to vector<32x128xbf16>
    %cst_20 = arith.constant dense<0.000000e+00> : vector<256x128xf32>
    %20 = tpu.matmul %17, %19, %cst_20 {dimension_numbers = #tpu.dot_dimension_numbers<[1], [0], [0], [1], [0, 0, 1, 1], [], []>} : vector<256x32xbf16>, vector<32x128xbf16>, vector<256x128xf32> -> vector<256x128xf32>
    %21 = arith.addf %14, %20 : vector<256x128xf32>
    %c0_21 = arith.constant 0 : index
    %c1_22 = arith.constant 1 : index
    %c0_23 = arith.constant 0 : index
    %c0_24 = arith.constant 0 : index
    %22 = vector.load %arg1[%c0_21, %c1_22, %c0_23, %c0_24] : memref<1x18x18x32xbf16, #tpu.memory_space<vmem>>, vector<1x16x16x32xbf16>
    %23 = vector.shape_cast %22 : vector<1x16x16x32xbf16> to vector<16x16x32xbf16>
    %24 = vector.shape_cast %23 : vector<16x16x32xbf16> to vector<256x32xbf16>
    %c3 = arith.constant 3 : index
    %c0_25 = arith.constant 0 : index
    %c0_26 = arith.constant 0 : index
    %25 = vector.load %arg2[%c3, %c0_25, %c0_26] : memref<9x32x128xbf16, #tpu.memory_space<vmem>>, vector<1x32x128xbf16>
    %26 = vector.shape_cast %25 : vector<1x32x128xbf16> to vector<32x128xbf16>
    %cst_27 = arith.constant dense<0.000000e+00> : vector<256x128xf32>
    %27 = tpu.matmul %24, %26, %cst_27 {dimension_numbers = #tpu.dot_dimension_numbers<[1], [0], [0], [1], [0, 0, 1, 1], [], []>} : vector<256x32xbf16>, vector<32x128xbf16>, vector<256x128xf32> -> vector<256x128xf32>
    %28 = arith.addf %21, %27 : vector<256x128xf32>
    %c0_28 = arith.constant 0 : index
    %c1_29 = arith.constant 1 : index
    %c1_30 = arith.constant 1 : index
    %c0_31 = arith.constant 0 : index
    %29 = vector.load %arg1[%c0_28, %c1_29, %c1_30, %c0_31] : memref<1x18x18x32xbf16, #tpu.memory_space<vmem>>, vector<1x16x16x32xbf16>
    %30 = vector.shape_cast %29 : vector<1x16x16x32xbf16> to vector<16x16x32xbf16>
    %31 = vector.shape_cast %30 : vector<16x16x32xbf16> to vector<256x32xbf16>
    %c4 = arith.constant 4 : index
    %c0_32 = arith.constant 0 : index
    %c0_33 = arith.constant 0 : index
    %32 = vector.load %arg2[%c4, %c0_32, %c0_33] : memref<9x32x128xbf16, #tpu.memory_space<vmem>>, vector<1x32x128xbf16>
    %33 = vector.shape_cast %32 : vector<1x32x128xbf16> to vector<32x128xbf16>
    %cst_34 = arith.constant dense<0.000000e+00> : vector<256x128xf32>
    %34 = tpu.matmul %31, %33, %cst_34 {dimension_numbers = #tpu.dot_dimension_numbers<[1], [0], [0], [1], [0, 0, 1, 1], [], []>} : vector<256x32xbf16>, vector<32x128xbf16>, vector<256x128xf32> -> vector<256x128xf32>
    %35 = arith.addf %28, %34 : vector<256x128xf32>
    %c0_35 = arith.constant 0 : index
    %c1_36 = arith.constant 1 : index
    %c2_37 = arith.constant 2 : index
    %c0_38 = arith.constant 0 : index
    %36 = vector.load %arg1[%c0_35, %c1_36, %c2_37, %c0_38] : memref<1x18x18x32xbf16, #tpu.memory_space<vmem>>, vector<1x16x16x32xbf16>
    %37 = vector.shape_cast %36 : vector<1x16x16x32xbf16> to vector<16x16x32xbf16>
    %38 = vector.shape_cast %37 : vector<16x16x32xbf16> to vector<256x32xbf16>
    %c5 = arith.constant 5 : index
    %c0_39 = arith.constant 0 : index
    %c0_40 = arith.constant 0 : index
    %39 = vector.load %arg2[%c5, %c0_39, %c0_40] : memref<9x32x128xbf16, #tpu.memory_space<vmem>>, vector<1x32x128xbf16>
    %40 = vector.shape_cast %39 : vector<1x32x128xbf16> to vector<32x128xbf16>
    %cst_41 = arith.constant dense<0.000000e+00> : vector<256x128xf32>
    %41 = tpu.matmul %38, %40, %cst_41 {dimension_numbers = #tpu.dot_dimension_numbers<[1], [0], [0], [1], [0, 0, 1, 1], [], []>} : vector<256x32xbf16>, vector<32x128xbf16>, vector<256x128xf32> -> vector<256x128xf32>
    %42 = arith.addf %35, %41 : vector<256x128xf32>
    %c0_42 = arith.constant 0 : index
    %c2_43 = arith.constant 2 : index
    %c0_44 = arith.constant 0 : index
    %c0_45 = arith.constant 0 : index
    %43 = vector.load %arg1[%c0_42, %c2_43, %c0_44, %c0_45] : memref<1x18x18x32xbf16, #tpu.memory_space<vmem>>, vector<1x16x16x32xbf16>
    %44 = vector.shape_cast %43 : vector<1x16x16x32xbf16> to vector<16x16x32xbf16>
    %45 = vector.shape_cast %44 : vector<16x16x32xbf16> to vector<256x32xbf16>
    %c6 = arith.constant 6 : index
    %c0_46 = arith.constant 0 : index
    %c0_47 = arith.constant 0 : index
    %46 = vector.load %arg2[%c6, %c0_46, %c0_47] : memref<9x32x128xbf16, #tpu.memory_space<vmem>>, vector<1x32x128xbf16>
    %47 = vector.shape_cast %46 : vector<1x32x128xbf16> to vector<32x128xbf16>
    %cst_48 = arith.constant dense<0.000000e+00> : vector<256x128xf32>
    %48 = tpu.matmul %45, %47, %cst_48 {dimension_numbers = #tpu.dot_dimension_numbers<[1], [0], [0], [1], [0, 0, 1, 1], [], []>} : vector<256x32xbf16>, vector<32x128xbf16>, vector<256x128xf32> -> vector<256x128xf32>
    %49 = arith.addf %42, %48 : vector<256x128xf32>
    %c0_49 = arith.constant 0 : index
    %c2_50 = arith.constant 2 : index
    %c1_51 = arith.constant 1 : index
    %c0_52 = arith.constant 0 : index
    %50 = vector.load %arg1[%c0_49, %c2_50, %c1_51, %c0_52] : memref<1x18x18x32xbf16, #tpu.memory_space<vmem>>, vector<1x16x16x32xbf16>
    %51 = vector.shape_cast %50 : vector<1x16x16x32xbf16> to vector<16x16x32xbf16>
    %52 = vector.shape_cast %51 : vector<16x16x32xbf16> to vector<256x32xbf16>
    %c7 = arith.constant 7 : index
    %c0_53 = arith.constant 0 : index
    %c0_54 = arith.constant 0 : index
    %53 = vector.load %arg2[%c7, %c0_53, %c0_54] : memref<9x32x128xbf16, #tpu.memory_space<vmem>>, vector<1x32x128xbf16>
    %54 = vector.shape_cast %53 : vector<1x32x128xbf16> to vector<32x128xbf16>
    %cst_55 = arith.constant dense<0.000000e+00> : vector<256x128xf32>
    %55 = tpu.matmul %52, %54, %cst_55 {dimension_numbers = #tpu.dot_dimension_numbers<[1], [0], [0], [1], [0, 0, 1, 1], [], []>} : vector<256x32xbf16>, vector<32x128xbf16>, vector<256x128xf32> -> vector<256x128xf32>
    %56 = arith.addf %49, %55 : vector<256x128xf32>
    %c0_56 = arith.constant 0 : index
    %c2_57 = arith.constant 2 : index
    %c2_58 = arith.constant 2 : index
    %c0_59 = arith.constant 0 : index
    %57 = vector.load %arg1[%c0_56, %c2_57, %c2_58, %c0_59] : memref<1x18x18x32xbf16, #tpu.memory_space<vmem>>, vector<1x16x16x32xbf16>
    %58 = vector.shape_cast %57 : vector<1x16x16x32xbf16> to vector<16x16x32xbf16>
    %59 = vector.shape_cast %58 : vector<16x16x32xbf16> to vector<256x32xbf16>
    %c8 = arith.constant 8 : index
    %c0_60 = arith.constant 0 : index
    %c0_61 = arith.constant 0 : index
    %60 = vector.load %arg2[%c8, %c0_60, %c0_61] : memref<9x32x128xbf16, #tpu.memory_space<vmem>>, vector<1x32x128xbf16>
    %61 = vector.shape_cast %60 : vector<1x32x128xbf16> to vector<32x128xbf16>
    %cst_62 = arith.constant dense<0.000000e+00> : vector<256x128xf32>
    %62 = tpu.matmul %59, %61, %cst_62 {dimension_numbers = #tpu.dot_dimension_numbers<[1], [0], [0], [1], [0, 0, 1, 1], [], []>} : vector<256x32xbf16>, vector<32x128xbf16>, vector<256x128xf32> -> vector<256x128xf32>
    %63 = arith.addf %56, %62 : vector<256x128xf32>
    %c0_63 = arith.constant 0 : index
    %c0_64 = arith.constant 0 : index
    %64 = vector.load %arg3[%c0_63, %c0_64] : memref<1x128xf32, #tpu.memory_space<vmem>>, vector<1x128xf32>
    %65 = vector.broadcast %64 : vector<1x128xf32> to vector<256x128xf32>
    %66 = arith.addf %63, %65 : vector<256x128xf32>
    %c0_65 = arith.constant 0 : index
    %c0_66 = arith.constant 0 : index
    %c0_67 = arith.constant 0 : index
    %67 = vector.load %arg4[%c0_65, %c0_66, %c0_67] : memref<1x256x128xf32, #tpu.memory_space<vmem>>, vector<1x256x128xf32>
    %68 = vector.shape_cast %67 : vector<1x256x128xf32> to vector<256x128xf32>
    %69 = vector.shape_cast %66 : vector<256x128xf32> to vector<1x256x128xf32>
    tpu.vector_store %arg4[%c0_65, %c0_66, %c0_67], %69 {strides = array<i32>} : memref<1x256x128xf32, #tpu.memory_space<vmem>>, vector<1x256x128xf32>,
    return
  }
  func.func @transform_0(%arg0: i32) -> (i32, i32, i32, i32) {
    %c0_i32 = arith.constant 0 : i32
    %c0_i32_0 = arith.constant 0 : i32
    %c0_i32_1 = arith.constant 0 : i32
    %c0_i32_2 = arith.constant 0 : i32
    return %arg0, %c0_i32, %c0_i32_0, %c0_i32_1 : i32, i32, i32, i32
  }
  func.func @transform_1(%arg0: i32) -> (i32, i32, i32) {
    %c0_i32 = arith.constant 0 : i32
    %c0_i32_0 = arith.constant 0 : i32
    %c0_i32_1 = arith.constant 0 : i32
    %c0_i32_2 = arith.constant 0 : i32
    return %c0_i32, %c0_i32_0, %c0_i32_1 : i32, i32, i32
  }
  func.func @transform_2(%arg0: i32) -> (i32, i32) {
    %c0_i32 = arith.constant 0 : i32
    %c0_i32_0 = arith.constant 0 : i32
    %c0_i32_1 = arith.constant 0 : i32
    return %c0_i32, %c0_i32_0 : i32, i32
  }
  func.func @transform_3(%arg0: i32) -> (i32, i32, i32) {
    %c0_i32 = arith.constant 0 : i32
    %c0_i32_0 = arith.constant 0 : i32
    %c0_i32_1 = arith.constant 0 : i32
    return %arg0, %c0_i32, %c0_i32_0 : i32, i32, i32
  }
}

</mosaic_0001>

<llo_original>
// kernel: output_proj.1
$region0: #{output_proj.1}
  #allocation0 [shape = 'u32[]', space=smem, size = 0x4, offset = 0x4, fixed_abs, tag = 'smem constant byte address 0x4 - core index']
  #allocation1 [shape = 'u32[144,128]{1,0:T(1,128)}', space=vmem, size = 0x12000, scoped, tag = 'internal scratch']
  %s0 = inlined_call_operand.vmem [shape: bf16[2,18,18,32], index: 0, kind: input, shape index: {}]
  %s1 = inlined_call_operand.vmem [shape: bf16[9,32,128], index: 1, kind: input, shape index: {}]
  %s2 = inlined_call_operand.vmem [shape: f32[1,128], index: 2, kind: input, shape index: {}]
  %s3 = inlined_call_operand.vmem [shape: f32[2,256,128], index: 3, kind: output, shape index: {}]
  %s4 = sld [smem:[#allocation0]]
  $region45: #{output_proj.1} parent=0
    _
  %s6 = ssub.s32 1, %s4
  %s7 = scalar_select 0, %s6, %s4
  loop: start=0, step=1, limit=4
  $region2: #{output_proj.1} parent=0 // loop_pre_header
    _
  $region3: #{output_proj.1} parent=0 // loop_header
    %s9 = sphi 0, %s13
    %p10 = scmp.ge.s32.totalorder %s9, 4
    %s19 = sphi 0, %s21
    %s22 = sphi 0, %s19
    %s23 = sphi 0, %s22
    %s39 = sphi 0, %s23
    %s43 = sphi 0, %s43
    %s45 = sphi 0, %s43
    %s46 = sphi 0, %s45
    %s60 = sphi 0, %s46
    %s64 = sphi 0, %s64
    %s66 = sphi 0, %s64
    %s67 = sphi 0, %s66
    %s81 = sphi 0, %s67
    %s87 = sphi 0, %s89
    %s90 = sphi 0, %s87
    %s91 = sphi 0, %s90
    %s107 = sphi 0, %s91
  $region4: #{output_proj.1} parent=0 // loop_header_branch
    %12 = sbr.rel (%p10) target = $region8
  $region5: #{output_proj.1} parent=0 // loop_body
    %s14 = ssub.s32 %s9, 1
    %s15 = ssub.s32 %s9, 2
    %s16 = sadd.s32 %s9, 1
    %s17 = ssub.s32 %s9, %s16
    %p18 = scmp.eq.s32.totalorder %s17, 0
    %s20 = sadd.s32 %s19, 1
    %s21 = scalar_select %p18, %s19, %s20
    %p24 = pneg %p18
    %p25 = scmp.eq.s32.totalorder %s9, 1
    %p26 = por %p24, %p25
    %p27 = scmp.ne.s32.totalorder %s19, %s22
    %p28 = scmp.eq.s32.totalorder %s9, 0
    %p29 = por %p27, %p28
    %p30 = scmp.ne.s32.totalorder %s19, %s22
    %p31 = scmp.eq.s32.totalorder %s14, 1
    %p32 = por %p30, %p31
    %p33 = scmp.ne.s32.totalorder %s22, %s23
    %p34 = scmp.eq.s32.totalorder %s14, 0
    %p35 = por %p33, %p34
    %p36 = scmp.ne.s32.totalorder %s22, %s23
    %p37 = scmp.eq.s32.totalorder %s15, 1
    %p38 = por %p36, %p37
    %p40 = scmp.ne.s32.totalorder %s23, %s39
    %p41 = scmp.eq.s32.totalorder %s15, 0
    %p42 = por %p40, %p41
    %s44 = sadd.s32 %s43, 1
    %p47 = scmp.eq.s32.totalorder %s9, 1
    %p48 = scmp.ne.s32.totalorder %s43, %s45
    %p49 = scmp.eq.s32.totalorder %s9, 0
    %p50 = por %p48, %p49
    %p51 = scmp.ne.s32.totalorder %s43, %s45
    %p52 = scmp.eq.s32.totalorder %s14, 1
    %p53 = por %p51, %p52
    %p54 = scmp.ne.s32.totalorder %s45, %s46
    %p55 = scmp.eq.s32.totalorder %s14, 0
    %p56 = por %p54, %p55
    %p57 = scmp.ne.s32.totalorder %s45, %s46
    %p58 = scmp.eq.s32.totalorder %s15, 1
    %p59 = por %p57, %p58
    %p61 = scmp.ne.s32.totalorder %s46, %s60
    %p62 = scmp.eq.s32.totalorder %s15, 0
    %p63 = por %p61, %p62
    %s65 = sadd.s32 %s64, 1
    %p68 = scmp.eq.s32.totalorder %s9, 1
    %p69 = scmp.ne.s32.totalorder %s64, %s66
    %p70 = scmp.eq.s32.totalorder %s9, 0
    %p71 = por %p69, %p70
    %p72 = scmp.ne.s32.totalorder %s64, %s66
    %p73 = scmp.eq.s32.totalorder %s14, 1
    %p74 = por %p72, %p73
    %p75 = scmp.ne.s32.totalorder %s66, %s67
    %p76 = scmp.eq.s32.totalorder %s14, 0
    %p77 = por %p75, %p76
    %p78 = scmp.ne.s32.totalorder %s66, %s67
    %p79 = scmp.eq.s32.totalorder %s15, 1
    %p80 = por %p78, %p79
    %p82 = scmp.ne.s32.totalorder %s67, %s81
    %p83 = scmp.eq.s32.totalorder %s15, 0
    %p84 = por %p82, %p83
    %s85 = ssub.s32 %s9, %s16
    %p86 = scmp.eq.s32.totalorder %s85, 0
    %s88 = sadd.s32 %s87, 1
    %s89 = scalar_select %p86, %s87, %s88
    %p92 = pneg %p86
    %p93 = scmp.eq.s32.totalorder %s9, 1
    %p94 = por %p92, %p93
    %p95 = scmp.ne.s32.totalorder %s87, %s90
    %p96 = scmp.eq.s32.totalorder %s9, 0
    %p97 = por %p95, %p96
    %p98 = scmp.ne.s32.totalorder %s87, %s90
    %p99 = scmp.eq.s32.totalorder %s14, 1
    %p100 = por %p98, %p99
    %p101 = scmp.ne.s32.totalorder %s90, %s91
    %p102 = scmp.eq.s32.totalorder %s14, 0
    %p103 = por %p101, %p102
    %p104 = scmp.ne.s32.totalorder %s90, %s91
    %p105 = scmp.eq.s32.totalorder %s15, 1
    %p106 = por %p104, %p105
    %p108 = scmp.ne.s32.totalorder %s91, %s107
    %p109 = scmp.eq.s32.totalorder %s15, 0
    %p110 = por %p108, %p109
    %p111 = scmp.le.s32.totalorder 1, %s9
    %p112 = scmp.lt.s32.totalorder %s9, 3
    %p113 = pnand %p111, %p112
    %p114 = pneg %p113
    // Predicated region
    $region9: #{output_proj.1} parent=5 // pred_check
      _
    $region10: #{output_proj.1} parent=5 // pred_check_branch
      %116 = sbr.rel (%p113) target = $region12
    $region11: #{output_proj.1} parent=5 // pred_region
      %s117 = ssub.s32 %s9, 1
      // Predicated region
      $region13: #{output_proj.1} parent=11 // pred_check
        %p118 = pneg %p56
      $region14: #{output_proj.1} parent=11 // pred_check_branch
        %120 = sbr.rel (%p118) target = $region16
      $region15: #{output_proj.1} parent=11 // pred_region
        _
      $region16: #{output_proj.1} parent=11 // pred_fallthru
        _
      // Predicated region
      $region17: #{output_proj.1} parent=11 // pred_check
        %p121 = pneg %p77
      $region18: #{output_proj.1} parent=11 // pred_check_branch
        %123 = sbr.rel (%p121) target = $region20
      $region19: #{output_proj.1} parent=11 // pred_region
        _
      $region20: #{output_proj.1} parent=11 // pred_fallthru
        _
    $region12: #{output_proj.1} parent=5 // pred_fallthru
      _
    %p124 = scmp.lt.s32.totalorder %s9, 2
    // Predicated region
    $region21: #{output_proj.1} parent=5 // pred_check
      %p125 = pneg %p124
    $region22: #{output_proj.1} parent=5 // pred_check_branch
      %127 = sbr.rel (%p125) target = $region24
    $region23: #{output_proj.1} parent=5 // pred_region
      // Predicated region
      $region25: #{output_proj.1} parent=23 // pred_check
        %p128 = pneg %p29
      $region26: #{output_proj.1} parent=23 // pred_check_branch
        %130 = sbr.rel (%p128) target = $region28
      $region27: #{output_proj.1} parent=23 // pred_region
        %p131 = scmp.lt.s32.totalorder %s9, 1
        %s132 = scalar_select %p131, %s9, 1
        %s133 = smul.addr %s132, 54
        %s134 = smul.addr %s133, 4
        %s135 = scalar_lea.vmem %s0, %s134
      $region28: #{output_proj.1} parent=23 // pred_fallthru
        _
    $region24: #{output_proj.1} parent=5 // pred_fallthru
      _
    %p136 = scmp.le.s32.totalorder 1, %s9
    %p137 = scmp.lt.s32.totalorder %s9, 3
    %p138 = pnand %p136, %p137
    %p139 = pneg %p138
    // Predicated region
    $region29: #{output_proj.1} parent=5 // pred_check
      _
    $region30: #{output_proj.1} parent=5 // pred_check_branch
      %141 = sbr.rel (%p138) target = $region32
    $region31: #{output_proj.1} parent=5 // pred_region
      %s142 = ssub.s32 %s9, 1
      %p143 = scmp.lt.s32.totalorder %s14, 1
      %s144 = scalar_select %p143, %s14, 1
      %s145 = smul.addr %s144, 54
      %s146 = smul.addr %s145, 4
      %s147 = scalar_lea.vmem %s0, %s146
      %p148 = pneg %p35
      %p149 = pneg %p32
      %p150 = pneg %p56
      %p151 = pneg %p53
      %p152 = pneg %p77
      %p153 = pneg %p74
      %p154 = pneg %p103
      %p155 = pneg %p100
      %p156 = scmp.lt.s32.totalorder %s14, 1
      %s157 = scalar_select %p156, %s14, 1
      %s158 = smul.addr %s157, 32
      %s159 = smul.addr %s158, 8
      %s160 = scalar_lea.vmem %s3, %s159
      %p161 = scmp.lt.s32.totalorder %s14, 1
      %s162 = scalar_select %p161, %s14, 1
      %s163 = smul.addr %s162, 54
      %s164 = smul.addr %s163, 4
      %s165 = scalar_lea.vmem %s0, %s164
      %p166 = scmp.lt.s32.totalorder %s14, 1
      %s167 = scalar_select %p166, %s14, 1
      %s168 = smul.addr %s167, 32
      %s169 = smul.addr %s168, 8
      %s170 = scalar_lea.vmem %s3, %s169
      %v172 = vld [vmem:[%s165] sm:$0xf]
      %v173 = vld [vmem:[%s165 + $0x4] sm:$0xf]
      %v174 = vld [vmem:[%s165 + $0xc] sm:$0xf]
      %v175 = vld [vmem:[%s165 + $0x10] sm:$0xf]
      %v176 = vld [vmem:[%s165 + $0x18] sm:$0xf]
      %v177 = vld [vmem:[%s165 + $0x1c] sm:$0xf]
      %v178 = vld [vmem:[%s165 + $0x24] sm:$0xf]
      %v179 = vld [vmem:[%s165 + $0x28] sm:$0xf]
      %v180 = vld [vmem:[%s165 + $0x30] sm:$0xf]
      %v181 = vld [vmem:[%s165 + $0x34] sm:$0xf]
      %v182 = vld [vmem:[%s165 + $0x3c] sm:$0xf]
      %v183 = vld [vmem:[%s165 + $0x40] sm:$0xf]
      %v184 = vld [vmem:[%s165 + $0x48] sm:$0xf]
      %v185 = vld [vmem:[%s165 + $0x4c] sm:$0xf]
      %v186 = vld [vmem:[%s165 + $0x54] sm:$0xf]
      %v187 = vld [vmem:[%s165 + $0x58] sm:$0xf]
      %v188 = vld [vmem:[%s165 + $0x60] sm:$0xf]
      %v189 = vld [vmem:[%s165 + $0x64] sm:$0xf]
      %v190 = vld [vmem:[%s165 + $0x6c] sm:$0xf]
      %v191 = vld [vmem:[%s165 + $0x70] sm:$0xf]
      %v192 = vld [vmem:[%s165 + $0x78] sm:$0xf]
      %v193 = vld [vmem:[%s165 + $0x7c] sm:$0xf]
      %v194 = vld [vmem:[%s165 + $0x84] sm:$0xf]
      %v195 = vld [vmem:[%s165 + $0x88] sm:$0xf]
      %v196 = vld [vmem:[%s165 + $0x90] sm:$0xf]
      %v197 = vld [vmem:[%s165 + $0x94] sm:$0xf]
      %v198 = vld [vmem:[%s165 + $0x9c] sm:$0xf]
      %v199 = vld [vmem:[%s165 + $0xa0] sm:$0xf]
      %v200 = vld [vmem:[%s165 + $0xa8] sm:$0xf]
      %v201 = vld [vmem:[%s165 + $0xac] sm:$0xf]
      %v202 = vld [vmem:[%s165 + $0xb4] sm:$0xf]
      %v203 = vld [vmem:[%s165 + $0xb8] sm:$0xf]
      %v204 = vld [vmem:[%s1] sm:$0xf]
      %v205 = vld [vmem:[%s1 + $0x4] sm:$0xf]
      %v206 = vld [vmem:[%s1 + $0x8] sm:$0xf]
      %v207 = vld [vmem:[%s1 + $0xc] sm:$0xf]
      %v208 = vld [vmem:[%s165 + $0x8] sm:$0x1]
      %v209 = vld [vmem:[%s165 + $0x14] sm:$0x1]
      %v210 = vld [vmem:[%s165 + $0x20] sm:$0x1]
      %v211 = vld [vmem:[%s165 + $0x2c] sm:$0x1]
      %v212 = vld [vmem:[%s165 + $0x38] sm:$0x1]
      %v213 = vld [vmem:[%s165 + $0x44] sm:$0x1]
      %v214 = vld [vmem:[%s165 + $0x50] sm:$0x1]
      %v215 = vld [vmem:[%s165 + $0x5c] sm:$0x1]
      %v216 = vld [vmem:[%s165 + $0x68] sm:$0x1]
      %v217 = vld [vmem:[%s165 + $0x74] sm:$0x1]
      %v218 = vld [vmem:[%s165 + $0x80] sm:$0x1]
      %v219 = vld [vmem:[%s165 + $0x8c] sm:$0x1]
      %v220 = vld [vmem:[%s165 + $0x98] sm:$0x1]
      %v221 = vld [vmem:[%s165 + $0xa4] sm:$0x1]
      %v222 = vld [vmem:[%s165 + $0xb0] sm:$0x1]
      %v223 = vld [vmem:[%s165 + $0xbc] sm:$0x1]
      %vm224 = vsmask.f32 3328
      %vm225 = vsmask.f32 7440
      %vm226 = vmor %vm224, %vm225
      %v228 = vshrl.u32 %v172, 16
      %v230 = vrot.slane %v228, 4
      %v231 = vshll.u32 %v172, 16
      %v233 = vrot.slane %v231, 5
      %v234 = vor.u32 %v230, %v233
      %v235 = vrot.slane %v234, 4
      %v237 = vshll.u32 %v173, 16
      %v239 = vrot.slane %v237, 5
      %v240 = vsel %vm226, %v235, %v239
      %v241 = vshrl.u32 %v173, 16
      %v243 = vrot.slane %v241, 4
      %v244 = vor.u32 %v243, %v239
      %v245 = vrot.slane %v244, 4
      %v247 = vshll.u32 %v208, 16
      %v249 = vrot.slane %v247, 5
      %v250 = vsel %vm226, %v245, %v249
      %v252 = vshrl.u32 %v174, 16
      %v254 = vrot.slane %v252, 4
      %v255 = vshll.u32 %v174, 16
      %v257 = vrot.slane %v255, 5
      %v258 = vor.u32 %v254, %v257
      %v259 = vrot.slane %v258, 4
      %v261 = vshll.u32 %v175, 16
      %v263 = vrot.slane %v261, 5
      %v264 = vsel %vm226, %v259, %v263
      %v265 = vshrl.u32 %v175, 16
      %v267 = vrot.slane %v265, 4
      %v268 = vor.u32 %v267, %v263
      %v269 = vrot.slane %v268, 4
      %v271 = vshll.u32 %v209, 16
      %v273 = vrot.slane %v271, 5
      %v274 = vsel %vm226, %v269, %v273
      %v276 = vshrl.u32 %v176, 16
      %v278 = vrot.slane %v276, 4
      %v279 = vshll.u32 %v176, 16
      %v281 = vrot.slane %v279, 5
      %v282 = vor.u32 %v278, %v281
      %v283 = vrot.slane %v282, 4
      %v285 = vshll.u32 %v177, 16
      %v287 = vrot.slane %v285, 5
      %v288 = vsel %vm226, %v283, %v287
      %v289 = vshrl.u32 %v177, 16
      %v291 = vrot.slane %v289, 4
      %v292 = vor.u32 %v291, %v287
      %v293 = vrot.slane %v292, 4
      %v295 = vshll.u32 %v210, 16
      %v297 = vrot.slane %v295, 5
      %v298 = vsel %vm226, %v293, %v297
      %v300 = vshrl.u32 %v178, 16
      %v302 = vrot.slane %v300, 4
      %v303 = vshll.u32 %v178, 16
      %v305 = vrot.slane %v303, 5
      %v306 = vor.u32 %v302, %v305
      %v307 = vrot.slane %v306, 4
      %v309 = vshll.u32 %v179, 16
      %v311 = vrot.slane %v309, 5
      %v312 = vsel %vm226, %v307, %v311
      %v313 = vshrl.u32 %v179, 16
      %v315 = vrot.slane %v313, 4
      %v316 = vor.u32 %v315, %v311
      %v317 = vrot.slane %v316, 4
      %v319 = vshll.u32 %v211, 16
      %v321 = vrot.slane %v319, 5
      %v322 = vsel %vm226, %v317, %v321
      %v324 = vshrl.u32 %v180, 16
      %v326 = vrot.slane %v324, 4
      %v327 = vshll.u32 %v180, 16
      %v329 = vrot.slane %v327, 5
      %v330 = vor.u32 %v326, %v329
      %v331 = vrot.slane %v330, 4
      %v333 = vshll.u32 %v181, 16
      %v335 = vrot.slane %v333, 5
      %v336 = vsel %vm226, %v331, %v335
      %v337 = vshrl.u32 %v181, 16
      %v339 = vrot.slane %v337, 4
      %v340 = vor.u32 %v339, %v335
      %v341 = vrot.slane %v340, 4
      %v343 = vshll.u32 %v212, 16
      %v345 = vrot.slane %v343, 5
      %v346 = vsel %vm226, %v341, %v345
      %v348 = vshrl.u32 %v182, 16
      %v350 = vrot.slane %v348, 4
      %v351 = vshll.u32 %v182, 16
      %v353 = vrot.slane %v351, 5
      %v354 = vor.u32 %v350, %v353
      %v355 = vrot.slane %v354, 4
      %v357 = vshll.u32 %v183, 16
      %v359 = vrot.slane %v357, 5
      %v360 = vsel %vm226, %v355, %v359
      %v361 = vshrl.u32 %v183, 16
      %v363 = vrot.slane %v361, 4
      %v364 = vor.u32 %v363, %v359
      %v365 = vrot.slane %v364, 4
      %v367 = vshll.u32 %v213, 16
      %v369 = vrot.slane %v367, 5
      %v370 = vsel %vm226, %v365, %v369
      %v372 = vshrl.u32 %v184, 16
      %v374 = vrot.slane %v372, 4
      %v375 = vshll.u32 %v184, 16
      %v377 = vrot.slane %v375, 5
      %v378 = vor.u32 %v374, %v377
      %v379 = vrot.slane %v378, 4
      %v381 = vshll.u32 %v185, 16
      %v383 = vrot.slane %v381, 5
      %v384 = vsel %vm226, %v379, %v383
      %v385 = vshrl.u32 %v185, 16
      %v387 = vrot.slane %v385, 4
      %v388 = vor.u32 %v387, %v383
      %v389 = vrot.slane %v388, 4
      %v391 = vshll.u32 %v214, 16
      %v393 = vrot.slane %v391, 5
      %v394 = vsel %vm226, %v389, %v393
      %v396 = vshrl.u32 %v186, 16
      %v398 = vrot.slane %v396, 4
      %v399 = vshll.u32 %v186, 16
      %v401 = vrot.slane %v399, 5
      %v402 = vor.u32 %v398, %v401
      %v403 = vrot.slane %v402, 4
      %v405 = vshll.u32 %v187, 16
      %v407 = vrot.slane %v405, 5
      %v408 = vsel %vm226, %v403, %v407
      %v409 = vshrl.u32 %v187, 16
      %v411 = vrot.slane %v409, 4
      %v412 = vor.u32 %v411, %v407
      %v413 = vrot.slane %v412, 4
      %v415 = vshll.u32 %v215, 16
      %v417 = vrot.slane %v415, 5
      %v418 = vsel %vm226, %v413, %v417
      %v420 = vshrl.u32 %v188, 16
      %v422 = vrot.slane %v420, 4
      %v423 = vshll.u32 %v188, 16
      %v425 = vrot.slane %v423, 5
      %v426 = vor.u32 %v422, %v425
      %v427 = vrot.slane %v426, 4
      %v429 = vshll.u32 %v189, 16
      %v431 = vrot.slane %v429, 5
      %v432 = vsel %vm226, %v427, %v431
      %v433 = vshrl.u32 %v189, 16
      %v435 = vrot.slane %v433, 4
      %v436 = vor.u32 %v435, %v431
      %v437 = vrot.slane %v436, 4
      %v439 = vshll.u32 %v216, 16
      %v441 = vrot.slane %v439, 5
      %v442 = vsel %vm226, %v437, %v441
      %v444 = vshrl.u32 %v190, 16
      %v446 = vrot.slane %v444, 4
      %v447 = vshll.u32 %v190, 16
      %v449 = vrot.slane %v447, 5
      %v450 = vor.u32 %v446, %v449
      %v451 = vrot.slane %v450, 4
      %v453 = vshll.u32 %v191, 16
      %v455 = vrot.slane %v453, 5
      %v456 = vsel %vm226, %v451, %v455
      %v457 = vshrl.u32 %v191, 16
      %v459 = vrot.slane %v457, 4
      %v460 = vor.u32 %v459, %v455
      %v461 = vrot.slane %v460, 4
      %v463 = vshll.u32 %v217, 16
      %v465 = vrot.slane %v463, 5
      %v466 = vsel %vm226, %v461, %v465
      %v468 = vshrl.u32 %v192, 16
      %v470 = vrot.slane %v468, 4
      %v471 = vshll.u32 %v192, 16
      %v473 = vrot.slane %v471, 5
      %v474 = vor.u32 %v470, %v473
      %v475 = vrot.slane %v474, 4
      %v477 = vshll.u32 %v193, 16
      %v479 = vrot.slane %v477, 5
      %v480 = vsel %vm226, %v475, %v479
      %v481 = vshrl.u32 %v193, 16
      %v483 = vrot.slane %v481, 4
      %v484 = vor.u32 %v483, %v479
      %v485 = vrot.slane %v484, 4
      %v487 = vshll.u32 %v218, 16
      %v489 = vrot.slane %v487, 5
      %v490 = vsel %vm226, %v485, %v489
      %v492 = vshrl.u32 %v194, 16
      %v494 = vrot.slane %v492, 4
      %v495 = vshll.u32 %v194, 16
      %v497 = vrot.slane %v495, 5
      %v498 = vor.u32 %v494, %v497
      %v499 = vrot.slane %v498, 4
      %v501 = vshll.u32 %v195, 16
      %v503 = vrot.slane %v501, 5
      %v504 = vsel %vm226, %v499, %v503
      %v505 = vshrl.u32 %v195, 16
      %v507 = vrot.slane %v505, 4
      %v508 = vor.u32 %v507, %v503
      %v509 = vrot.slane %v508, 4
      %v511 = vshll.u32 %v219, 16
      %v513 = vrot.slane %v511, 5
      %v514 = vsel %vm226, %v509, %v513
      %v516 = vshrl.u32 %v196, 16
      %v518 = vrot.slane %v516, 4
      %v519 = vshll.u32 %v196, 16
      %v521 = vrot.slane %v519, 5
      %v522 = vor.u32 %v518, %v521
      %v523 = vrot.slane %v522, 4
      %v525 = vshll.u32 %v197, 16
      %v527 = vrot.slane %v525, 5
      %v528 = vsel %vm226, %v523, %v527
      %v529 = vshrl.u32 %v197, 16
      %v531 = vrot.slane %v529, 4
      %v532 = vor.u32 %v531, %v527
      %v533 = vrot.slane %v532, 4
      %v535 = vshll.u32 %v220, 16
      %v537 = vrot.slane %v535, 5
      %v538 = vsel %vm226, %v533, %v537
      %v540 = vshrl.u32 %v198, 16
      %v542 = vrot.slane %v540, 4
      %v543 = vshll.u32 %v198, 16
      %v545 = vrot.slane %v543, 5
      %v546 = vor.u32 %v542, %v545
      %v547 = vrot.slane %v546, 4
      %v549 = vshll.u32 %v199, 16
      %v551 = vrot.slane %v549, 5
      %v552 = vsel %vm226, %v547, %v551
      %v553 = vshrl.u32 %v199, 16
      %v555 = vrot.slane %v553, 4
      %v556 = vor.u32 %v555, %v551
      %v557 = vrot.slane %v556, 4
      %v559 = vshll.u32 %v221, 16
      %v561 = vrot.slane %v559, 5
      %v562 = vsel %vm226, %v557, %v561
      %v564 = vshrl.u32 %v200, 16
      %v566 = vrot.slane %v564, 4
      %v567 = vshll.u32 %v200, 16
      %v569 = vrot.slane %v567, 5
      %v570 = vor.u32 %v566, %v569
      %v571 = vrot.slane %v570, 4
      %v573 = vshll.u32 %v201, 16
      %v575 = vrot.slane %v573, 5
      %v576 = vsel %vm226, %v571, %v575
      %v577 = vshrl.u32 %v201, 16
      %v579 = vrot.slane %v577, 4
      %v580 = vor.u32 %v579, %v575
      %v581 = vrot.slane %v580, 4
      %v583 = vshll.u32 %v222, 16
      %v585 = vrot.slane %v583, 5
      %v586 = vsel %vm226, %v581, %v585
      %v588 = vshrl.u32 %v202, 16
      %v590 = vrot.slane %v588, 4
      %v591 = vshll.u32 %v202, 16
      %v593 = vrot.slane %v591, 5
      %v594 = vor.u32 %v590, %v593
      %v595 = vrot.slane %v594, 4
      %v597 = vshll.u32 %v203, 16
      %v599 = vrot.slane %v597, 5
      %v600 = vsel %vm226, %v595, %v599
      %v601 = vshrl.u32 %v203, 16
      %v603 = vrot.slane %v601, 4
      %v604 = vor.u32 %v603, %v599
      %v605 = vrot.slane %v604, 4
      %v607 = vshll.u32 %v223, 16
      %v609 = vrot.slane %v607, 5
      %v610 = vsel %vm226, %v605, %v609
      %s611 = scalar_lea.vmem %s1, 16
      %v612 = vld [vmem:[%s611] sm:$0xf]
      %v613 = vld [vmem:[%s611 + $0x4] sm:$0xf]
      %v614 = vld [vmem:[%s611 + $0x8] sm:$0xf]
      %v615 = vld [vmem:[%s611 + $0xc] sm:$0xf]
      %v616 = vunpack.c.l.b16 %v240
      %v617 = vunpack.c.l.b16 %v250
      %v618 = vunpack.c.l.b16 %v264
      %v619 = vunpack.c.l.b16 %v274
      %v620 = vunpack.c.l.b16 %v288
      %v621 = vunpack.c.l.b16 %v298
      %v622 = vunpack.c.l.b16 %v312
      %v623 = vunpack.c.l.b16 %v322
      %v624 = vunpack.c.l.b16 %v336
      %v625 = vunpack.c.l.b16 %v346
      %v626 = vunpack.c.l.b16 %v360
      %v627 = vunpack.c.l.b16 %v370
      %v628 = vunpack.c.l.b16 %v384
      %v629 = vunpack.c.l.b16 %v394
      %v630 = vunpack.c.l.b16 %v408
      %v631 = vunpack.c.l.b16 %v418
      %v632 = vunpack.c.l.b16 %v432
      %v633 = vunpack.c.l.b16 %v442
      %v634 = vunpack.c.l.b16 %v456
      %v635 = vunpack.c.l.b16 %v466
      %v636 = vunpack.c.l.b16 %v480
      %v637 = vunpack.c.l.b16 %v490
      %v638 = vunpack.c.l.b16 %v504
      %v639 = vunpack.c.l.b16 %v514
      %v640 = vunpack.c.l.b16 %v528
      %v641 = vunpack.c.l.b16 %v538
      %v642 = vunpack.c.l.b16 %v552
      %v643 = vunpack.c.l.b16 %v562
      %v644 = vunpack.c.l.b16 %v576
      %v645 = vunpack.c.l.b16 %v586
      %v646 = vunpack.c.l.b16 %v600
      %v647 = vunpack.c.l.b16 %v610
      %v648 = vpack.c.b16 %v617, %v616
      %v649 = vpack.c.b16 %v619, %v618
      %v650 = vpack.c.b16 %v621, %v620
      %v651 = vpack.c.b16 %v623, %v622
      %v652 = vpack.c.b16 %v625, %v624
      %v653 = vpack.c.b16 %v627, %v626
      %v654 = vpack.c.b16 %v629, %v628
      %v655 = vpack.c.b16 %v631, %v630
      %v656 = vpack.c.b16 %v633, %v632
      %v657 = vpack.c.b16 %v635, %v634
      %v658 = vpack.c.b16 %v637, %v636
      %v659 = vpack.c.b16 %v639, %v638
      %v660 = vpack.c.b16 %v641, %v640
      %v661 = vpack.c.b16 %v643, %v642
      %v662 = vpack.c.b16 %v645, %v644
      %v663 = vpack.c.b16 %v647, %v646
      %v668 = vunpack.c.l.b16 %v612
      %v669 = vunpack.c.l.b16 %v613
      %v670 = vunpack.c.l.b16 %v614
      %v671 = vunpack.c.l.b16 %v615
      %v672 = vpack.c.b16 %v669, %v668
      %v673 = vpack.c.b16 %v671, %v670
      %vm676 = vcmask 261120
      %v678 = vsel %vm676, %v648, 0
      %v681 = vsel %vm676, %v649, 0
      %v684 = vsel %vm676, %v650, 0
      %v687 = vsel %vm676, %v651, 0
      %v690 = vsel %vm676, %v652, 0
      %v693 = vsel %vm676, %v653, 0
      %v696 = vsel %vm676, %v654, 0
      %v699 = vsel %vm676, %v655, 0
      %v702 = vsel %vm676, %v656, 0
      %v705 = vsel %vm676, %v657, 0
      %v708 = vsel %vm676, %v658, 0
      %v711 = vsel %vm676, %v659, 0
      %v714 = vsel %vm676, %v660, 0
      %v717 = vsel %vm676, %v661, 0
      %v720 = vsel %vm676, %v662, 0
      %v723 = vsel %vm676, %v663, 0
      %725 = vmatprep.subr.bf16.mxu0 0
      %726 = vmatpush1.bf16.msra.mxu0 %v672
      %727 = vmatprep.subr.bf16.mxu0 0
      %728 = vmatpush1.bf16.msra.mxu0 %v673
      %729 = vmatprep.subr.bf16.mxu0 0
      %730 = vmatpush1.bf16.msra.mxu0 0
      %731 = vmatprep.subr.bf16.mxu0 0
      %732 = vmatpush1.bf16.msra.mxu0 0
      %733 = vmatprep.subr.bf16.mxu0 0
      %734 = vmatpush1.bf16.msra.mxu0 0
      %735 = vmatprep.subr.bf16.mxu0 0
      %736 = vmatpush1.bf16.msra.mxu0 0
      %737 = vmatprep.subr.bf16.mxu0 0
      %738 = vmatpush1.bf16.msra.mxu0 0
      %739 = vmatprep.subr.bf16.mxu0 0
      %740 = vmatpush1.bf16.msra.mxu0 0
      %741 = vmatprep.subr.bf16.mxu0 0
      %742 = vmatpush1.bf16.msra.mxu0 0
      %743 = vmatprep.subr.bf16.mxu0 0
      %744 = vmatpush1.bf16.msra.mxu0 0
      %745 = vmatprep.subr.bf16.mxu0 0
      %746 = vmatpush1.bf16.msra.mxu0 0
      %747 = vmatprep.subr.bf16.mxu0 0
      %748 = vmatpush1.bf16.msra.mxu0 0
      %749 = vmatprep.subr.bf16.mxu0 0
      %750 = vmatpush1.bf16.msra.mxu0 0
      %751 = vmatprep.subr.bf16.mxu0 0
      %752 = vmatpush1.bf16.msra.mxu0 0
      %753 = vmatprep.subr.bf16.mxu0 0
      %754 = vmatpush1.bf16.msra.mxu0 0
      %755 = vmatprep.subr.bf16.mxu0 0
      %756 = vmatpush1.bf16.msra.mxu0 0
      %757 = vmatprep.mubr.bf16.mxu0 0
      %758 = vmatmul.mubr.bf16.gmra.mrb[0].mxu0 %v678
      %v759 = vpop.f32.mrb[0].mxu0
      %v760 = vadd.f32 0.0, %v759
      %v761 = vpop.f32.mrb[0].mxu0
      %v762 = vpop.f32.mrb[0].mxu0
      %v763 = vadd.f32 0.0, %v762
      %v764 = vpop.f32.mrb[0].mxu0
      %765 = vmatprep.mubr.bf16.mxu0 0
      %766 = vmatmul.mubr.bf16.gmra.mrb[0].mxu0 %v681
      %v767 = vpop.f32.mrb[0].mxu0
      %v768 = vadd.f32 0.0, %v767
      %v769 = vpop.f32.mrb[0].mxu0
      %v770 = vpop.f32.mrb[0].mxu0
      %v771 = vadd.f32 0.0, %v770
      %v772 = vpop.f32.mrb[0].mxu0
      %773 = vmatprep.mubr.bf16.mxu0 0
      %774 = vmatmul.mubr.bf16.gmra.mrb[0].mxu0 %v684
      %v775 = vpop.f32.mrb[0].mxu0
      %v776 = vadd.f32 0.0, %v775
      %v777 = vpop.f32.mrb[0].mxu0
      %v778 = vpop.f32.mrb[0].mxu0
      %v779 = vadd.f32 0.0, %v778
      %v780 = vpop.f32.mrb[0].mxu0
      %781 = vmatprep.mubr.bf16.mxu0 0
      %782 = vmatmul.mubr.bf16.gmra.mrb[0].mxu0 %v687
      %v783 = vpop.f32.mrb[0].mxu0
      %v784 = vadd.f32 0.0, %v783
      %v785 = vpop.f32.mrb[0].mxu0
      %v786 = vpop.f32.mrb[0].mxu0
      %v787 = vadd.f32 0.0, %v786
      %v788 = vpop.f32.mrb[0].mxu0
      %789 = vmatprep.mubr.bf16.mxu0 0
      %790 = vmatmul.mubr.bf16.gmra.mrb[0].mxu0 %v690
      %v791 = vpop.f32.mrb[0].mxu0
      %v792 = vadd.f32 0.0, %v791
      %v793 = vpop.f32.mrb[0].mxu0
      %v794 = vpop.f32.mrb[0].mxu0
      %v795 = vadd.f32 0.0, %v794
      %v796 = vpop.f32.mrb[0].mxu0
      %797 = vmatprep.mubr.bf16.mxu0 0
      %798 = vmatmul.mubr.bf16.gmra.mrb[0].mxu0 %v693
      %v799 = vpop.f32.mrb[0].mxu0
      %v800 = vadd.f32 0.0, %v799
      %v801 = vpop.f32.mrb[0].mxu0
      %v802 = vpop.f32.mrb[0].mxu0
      %v803 = vadd.f32 0.0, %v802
      %v804 = vpop.f32.mrb[0].mxu0
      %805 = vmatprep.mubr.bf16.mxu0 0
      %806 = vmatmul.mubr.bf16.gmra.mrb[0].mxu0 %v696
      %v807 = vpop.f32.mrb[0].mxu0
      %v808 = vadd.f32 0.0, %v807
      %v809 = vpop.f32.mrb[0].mxu0
      %v810 = vpop.f32.mrb[0].mxu0
      %v811 = vadd.f32 0.0, %v810
      %v812 = vpop.f32.mrb[0].mxu0
      %813 = vmatprep.mubr.bf16.mxu0 0
      %814 = vmatmul.mubr.bf16.gmra.mrb[0].mxu0 %v699
      %v815 = vpop.f32.mrb[0].mxu0
      %v816 = vadd.f32 0.0, %v815
      %v817 = vpop.f32.mrb[0].mxu0
      %v818 = vpop.f32.mrb[0].mxu0
      %v819 = vadd.f32 0.0, %v818
      %v820 = vpop.f32.mrb[0].mxu0
      %821 = vmatprep.mubr.bf16.mxu0 0
      %822 = vmatmul.mubr.bf16.gmra.mrb[0].mxu0 %v702
      %v823 = vpop.f32.mrb[0].mxu0
      %v824 = vadd.f32 0.0, %v823
      %v825 = vpop.f32.mrb[0].mxu0
      %v826 = vpop.f32.mrb[0].mxu0
      %v827 = vadd.f32 0.0, %v826
      %v828 = vpop.f32.mrb[0].mxu0
      %829 = vmatprep.mubr.bf16.mxu0 0
      %830 = vmatmul.mubr.bf16.gmra.mrb[0].mxu0 %v705
      %v831 = vpop.f32.mrb[0].mxu0
      %v832 = vadd.f32 0.0, %v831
      %v833 = vpop.f32.mrb[0].mxu0
      %v834 = vpop.f32.mrb[0].mxu0
      %v835 = vadd.f32 0.0, %v834
      %v836 = vpop.f32.mrb[0].mxu0
      %837 = vmatprep.mubr.bf16.mxu0 0
      %838 = vmatmul.mubr.bf16.gmra.mrb[0].mxu0 %v708
      %v839 = vpop.f32.mrb[0].mxu0
      %v840 = vadd.f32 0.0, %v839
      %v841 = vpop.f32.mrb[0].mxu0
      %v842 = vpop.f32.mrb[0].mxu0
      %v843 = vadd.f32 0.0, %v842
      %v844 = vpop.f32.mrb[0].mxu0
      %845 = vmatprep.mubr.bf16.mxu0 0
      %846 = vmatmul.mubr.bf16.gmra.mrb[0].mxu0 %v711
      %v847 = vpop.f32.mrb[0].mxu0
      %v848 = vadd.f32 0.0, %v847
      %v849 = vpop.f32.mrb[0].mxu0
      %v850 = vpop.f32.mrb[0].mxu0
      %v851 = vadd.f32 0.0, %v850
      %v852 = vpop.f32.mrb[0].mxu0
      %853 = vmatprep.mubr.bf16.mxu0 0
      %854 = vmatmul.mubr.bf16.gmra.mrb[0].mxu0 %v714
      %v855 = vpop.f32.mrb[0].mxu0
      %v856 = vadd.f32 0.0, %v855
      %v857 = vpop.f32.mrb[0].mxu0
      %v858 = vpop.f32.mrb[0].mxu0
      %v859 = vadd.f32 0.0, %v858
      %v860 = vpop.f32.mrb[0].mxu0
      %861 = vmatprep.mubr.bf16.mxu0 0
      %862 = vmatmul.mubr.bf16.gmra.mrb[0].mxu0 %v717
      %v863 = vpop.f32.mrb[0].mxu0
      %v864 = vadd.f32 0.0, %v863
      %v865 = vpop.f32.mrb[0].mxu0
      %v866 = vpop.f32.mrb[0].mxu0
      %v867 = vadd.f32 0.0, %v866
      %v868 = vpop.f32.mrb[0].mxu0
      %869 = vmatprep.mubr.bf16.mxu0 0
      %870 = vmatmul.mubr.bf16.gmra.mrb[0].mxu0 %v720
      %v871 = vpop.f32.mrb[0].mxu0
      %v872 = vadd.f32 0.0, %v871
      %v873 = vpop.f32.mrb[0].mxu0
      %v874 = vpop.f32.mrb[0].mxu0
      %v875 = vadd.f32 0.0, %v874
      %v876 = vpop.f32.mrb[0].mxu0
      %877 = vmatprep.mubr.bf16.mxu0 0
      %878 = vmatmul.mubr.bf16.gmra.mrb[0].mxu0 %v723
      %v879 = vpop.f32.mrb[0].mxu0
      %v880 = vadd.f32 0.0, %v879
      %v881 = vpop.f32.mrb[0].mxu0
      %v882 = vpop.f32.mrb[0].mxu0
      %v883 = vadd.f32 0.0, %v882
      %v884 = vpop.f32.mrb[0].mxu0
      %885 = vdwg.mxu0
      %v918 = vunpack.c.l.b16 %v172
      %v919 = vunpack.c.l.b16 %v173
      %v920 = vunpack.c.l.b16 %v174
      %v921 = vunpack.c.l.b16 %v175
      %v922 = vunpack.c.l.b16 %v176
      %v923 = vunpack.c.l.b16 %v177
      %v924 = vunpack.c.l.b16 %v178
      %v925 = vunpack.c.l.b16 %v179
      %v926 = vunpack.c.l.b16 %v180
      %v927 = vunpack.c.l.b16 %v181
      %v928 = vunpack.c.l.b16 %v182
      %v929 = vunpack.c.l.b16 %v183
      %v930 = vunpack.c.l.b16 %v184
      %v931 = vunpack.c.l.b16 %v185
      %v932 = vunpack.c.l.b16 %v186
      %v933 = vunpack.c.l.b16 %v187
      %v934 = vunpack.c.l.b16 %v188
      %v935 = vunpack.c.l.b16 %v189
      %v936 = vunpack.c.l.b16 %v190
      %v937 = vunpack.c.l.b16 %v191
      %v938 = vunpack.c.l.b16 %v192
      %v939 = vunpack.c.l.b16 %v193
      %v940 = vunpack.c.l.b16 %v194
      %v941 = vunpack.c.l.b16 %v195
      %v942 = vunpack.c.l.b16 %v196
      %v943 = vunpack.c.l.b16 %v197
      %v944 = vunpack.c.l.b16 %v198
      %v945 = vunpack.c.l.b16 %v199
      %v946 = vunpack.c.l.b16 %v200
      %v947 = vunpack.c.l.b16 %v201
      %v948 = vunpack.c.l.b16 %v202
      %v949 = vunpack.c.l.b16 %v203
      %v950 = vpack.c.b16 %v919, %v918
      %v951 = vpack.c.b16 %v921, %v920
      %v952 = vpack.c.b16 %v923, %v922
      %v953 = vpack.c.b16 %v925, %v924
      %v954 = vpack.c.b16 %v927, %v926
      %v955 = vpack.c.b16 %v929, %v928
      %v956 = vpack.c.b16 %v931, %v930
      %v957 = vpack.c.b16 %v933, %v932
      %v958 = vpack.c.b16 %v935, %v934
      %v959 = vpack.c.b16 %v937, %v936
      %v960 = vpack.c.b16 %v939, %v938
      %v961 = vpack.c.b16 %v941, %v940
      %v962 = vpack.c.b16 %v943, %v942
      %v963 = vpack.c.b16 %v945, %v944
      %v964 = vpack.c.b16 %v947, %v946
      %v965 = vpack.c.b16 %v949, %v948
      %v970 = vunpack.c.l.b16 %v204
      %v971 = vunpack.c.l.b16 %v205
      %v972 = vunpack.c.l.b16 %v206
      %v973 = vunpack.c.l.b16 %v207
      %v974 = vpack.c.b16 %v971, %v970
      %v975 = vpack.c.b16 %v973, %v972
      %v979 = vsel %vm676, %v950, 0
      %v982 = vsel %vm676, %v951, 0
      %v985 = vsel %vm676, %v952, 0
      %v988 = vsel %vm676, %v953, 0
      %v991 = vsel %vm676, %v954, 0
      %v994 = vsel %vm676, %v955, 0
      %v997 = vsel %vm676, %v956, 0
      %v1000 = vsel %vm676, %v957, 0
      %v1003 = vsel %vm676, %v958, 0
      %v1006 = vsel %vm676, %v959, 0
      %v1009 = vsel %vm676, %v960, 0
      %v1012 = vsel %vm676, %v961, 0
      %v1015 = vsel %vm676, %v962, 0
      %v1018 = vsel %vm676, %v963, 0
      %v1021 = vsel %vm676, %v964, 0
      %v1024 = vsel %vm676, %v965, 0
      %1026 = vmatprep.subr.bf16.mxu0 0
      %1027 = vmatpush1.bf16.msra.mxu0 %v974
      %1028 = vmatprep.subr.bf16.mxu0 0
      %1029 = vmatpush1.bf16.msra.mxu0 %v975
      %1030 = vmatprep.subr.bf16.mxu0 0
      %1031 = vmatpush1.bf16.msra.mxu0 0
      %1032 = vmatprep.subr.bf16.mxu0 0
      %1033 = vmatpush1.bf16.msra.mxu0 0
      %1034 = vmatprep.subr.bf16.mxu0 0
      %1035 = vmatpush1.bf16.msra.mxu0 0
      %1036 = vmatprep.subr.bf16.mxu0 0
      %1037 = vmatpush1.bf16.msra.mxu0 0
      %1038 = vmatprep.subr.bf16.mxu0 0
      %1039 = vmatpush1.bf16.msra.mxu0 0
      %1040 = vmatprep.subr.bf16.mxu0 0
      %1041 = vmatpush1.bf16.msra.mxu0 0
      %1042 = vmatprep.subr.bf16.mxu0 0
      %1043 = vmatpush1.bf16.msra.mxu0 0
      %1044 = vmatprep.subr.bf16.mxu0 0
      %1045 = vmatpush1.bf16.msra.mxu0 0
      %1046 = vmatprep.subr.bf16.mxu0 0
      %1047 = vmatpush1.bf16.msra.mxu0 0
      %1048 = vmatprep.subr.bf16.mxu0 0
      %1049 = vmatpush1.bf16.msra.mxu0 0
      %1050 = vmatprep.subr.bf16.mxu0 0
      %1051 = vmatpush1.bf16.msra.mxu0 0
      %1052 = vmatprep.subr.bf16.mxu0 0
      %1053 = vmatpush1.bf16.msra.mxu0 0
      %1054 = vmatprep.subr.bf16.mxu0 0
      %1055 = vmatpush1.bf16.msra.mxu0 0
      %1056 = vmatprep.subr.bf16.mxu0 0
      %1057 = vmatpush1.bf16.msra.mxu0 0
      %1058 = vmatprep.mubr.bf16.mxu0 0
      %1059 = vmatmul.mubr.bf16.gmra.mrb[0].mxu0 %v979
      %v1060 = vpop.f32.mrb[0].mxu0
      %v1061 = vadd.f32 %v760, %v1060
      %v1062 = vpop.f32.mrb[0].mxu0
      %v1063 = vpop.f32.mrb[0].mxu0
      %v1064 = vadd.f32 %v763, %v1063
      %v1065 = vpop.f32.mrb[0].mxu0
      %1066 = vmatprep.mubr.bf16.mxu0 0
      %1067 = vmatmul.mubr.bf16.gmra.mrb[0].mxu0 %v982
      %v1068 = vpop.f32.mrb[0].mxu0
      %v1069 = vadd.f32 %v768, %v1068
      %v1070 = vpop.f32.mrb[0].mxu0
      %v1071 = vpop.f32.mrb[0].mxu0
      %v1072 = vadd.f32 %v771, %v1071
      %v1073 = vpop.f32.mrb[0].mxu0
      %1074 = vmatprep.mubr.bf16.mxu0 0
      %1075 = vmatmul.mubr.bf16.gmra.mrb[0].mxu0 %v985
      %v1076 = vpop.f32.mrb[0].mxu0
      %v1077 = vadd.f32 %v776, %v1076
      %v1078 = vpop.f32.mrb[0].mxu0
      %v1079 = vpop.f32.mrb[0].mxu0
      %v1080 = vadd.f32 %v779, %v1079
      %v1081 = vpop.f32.mrb[0].mxu0
      %1082 = vmatprep.mubr.bf16.mxu0 0
      %1083 = vmatmul.mubr.bf16.gmra.mrb[0].mxu0 %v988
      %v1084 = vpop.f32.mrb[0].mxu0
      %v1085 = vadd.f32 %v784, %v1084
      %v1086 = vpop.f32.mrb[0].mxu0
      %v1087 = vpop.f32.mrb[0].mxu0
      %v1088 = vadd.f32 %v787, %v1087
      %v1089 = vpop.f32.mrb[0].mxu0
      %1090 = vmatprep.mubr.bf16.mxu0 0
      %1091 = vmatmul.mubr.bf16.gmra.mrb[0].mxu0 %v991
      %v1092 = vpop.f32.mrb[0].mxu0
      %v1093 = vadd.f32 %v792, %v1092
      %v1094 = vpop.f32.mrb[0].mxu0
      %v1095 = vpop.f32.mrb[0].mxu0
      %v1096 = vadd.f32 %v795, %v1095
      %v1097 = vpop.f32.mrb[0].mxu0
      %1098 = vmatprep.mubr.bf16.mxu0 0
      %1099 = vmatmul.mubr.bf16.gmra.mrb[0].mxu0 %v994
      %v1100 = vpop.f32.mrb[0].mxu0
      %v1101 = vadd.f32 %v800, %v1100
      %v1102 = vpop.f32.mrb[0].mxu0
      %v1103 = vpop.f32.mrb[0].mxu0
      %v1104 = vadd.f32 %v803, %v1103
      %v1105 = vpop.f32.mrb[0].mxu0
      %1106 = vmatprep.mubr.bf16.mxu0 0
      %1107 = vmatmul.mubr.bf16.gmra.mrb[0].mxu0 %v997
      %v1108 = vpop.f32.mrb[0].mxu0
      %v1109 = vadd.f32 %v808, %v1108
      %v1110 = vpop.f32.mrb[0].mxu0
      %v1111 = vpop.f32.mrb[0].mxu0
      %v1112 = vadd.f32 %v811, %v1111
      %v1113 = vpop.f32.mrb[0].mxu0
      %1114 = vmatprep.mubr.bf16.mxu0 0
      %1115 = vmatmul.mubr.bf16.gmra.mrb[0].mxu0 %v1000
      %v1116 = vpop.f32.mrb[0].mxu0
      %v1117 = vadd.f32 %v816, %v1116
      %v1118 = vpop.f32.mrb[0].mxu0
      %v1119 = vpop.f32.mrb[0].mxu0
      %v1120 = vadd.f32 %v819, %v1119
      %v1121 = vpop.f32.mrb[0].mxu0
      %1122 = vmatprep.mubr.bf16.mxu0 0
      %1123 = vmatmul.mubr.bf16.gmra.mrb[0].mxu0 %v1003
      %v1124 = vpop.f32.mrb[0].mxu0
      %v1125 = vadd.f32 %v824, %v1124
      %v1126 = vpop.f32.mrb[0].mxu0
      %v1127 = vpop.f32.mrb[0].mxu0
      %v1128 = vadd.f32 %v827, %v1127
      %v1129 = vpop.f32.mrb[0].mxu0
      %1130 = vmatprep.mubr.bf16.mxu0 0
      %1131 = vmatmul.mubr.bf16.gmra.mrb[0].mxu0 %v1006
      %v1132 = vpop.f32.mrb[0].mxu0
      %v1133 = vadd.f32 %v832, %v1132
      %v1134 = vpop.f32.mrb[0].mxu0
      %v1135 = vpop.f32.mrb[0].mxu0
      %v1136 = vadd.f32 %v835, %v1135
      %v1137 = vpop.f32.mrb[0].mxu0
      %1138 = vmatprep.mubr.bf16.mxu0 0
      %1139 = vmatmul.mubr.bf16.gmra.mrb[0].mxu0 %v1009
      %v1140 = vpop.f32.mrb[0].mxu0
      %v1141 = vadd.f32 %v840, %v1140
      %v1142 = vpop.f32.mrb[0].mxu0
      %v1143 = vpop.f32.mrb[0].mxu0
      %v1144 = vadd.f32 %v843, %v1143
      %v1145 = vpop.f32.mrb[0].mxu0
      %1146 = vmatprep.mubr.bf16.mxu0 0
      %1147 = vmatmul.mubr.bf16.gmra.mrb[0].mxu0 %v1012
      %v1148 = vpop.f32.mrb[0].mxu0
      %v1149 = vadd.f32 %v848, %v1148
      %v1150 = vpop.f32.mrb[0].mxu0
      %v1151 = vpop.f32.mrb[0].mxu0
      %v1152 = vadd.f32 %v851, %v1151
      %v1153 = vpop.f32.mrb[0].mxu0
      %1154 = vmatprep.mubr.bf16.mxu0 0
      %1155 = vmatmul.mubr.bf16.gmra.mrb[0].mxu0 %v1015
      %v1156 = vpop.f32.mrb[0].mxu0
      %v1157 = vadd.f32 %v856, %v1156
      %v1158 = vpop.f32.mrb[0].mxu0
      %v1159 = vpop.f32.mrb[0].mxu0
      %v1160 = vadd.f32 %v859, %v1159
      %v1161 = vpop.f32.mrb[0].mxu0
      %1162 = vmatprep.mubr.bf16.mxu0 0
      %1163 = vmatmul.mubr.bf16.gmra.mrb[0].mxu0 %v1018
      %v1164 = vpop.f32.mrb[0].mxu0
      %v1165 = vadd.f32 %v864, %v1164
      %v1166 = vpop.f32.mrb[0].mxu0
      %v1167 = vpop.f32.mrb[0].mxu0
      %v1168 = vadd.f32 %v867, %v1167
      %v1169 = vpop.f32.mrb[0].mxu0
      %1170 = vmatprep.mubr.bf16.mxu0 0
      %1171 = vmatmul.mubr.bf16.gmra.mrb[0].mxu0 %v1021
      %v1172 = vpop.f32.mrb[0].mxu0
      %v1173 = vadd.f32 %v872, %v1172
      %v1174 = vpop.f32.mrb[0].mxu0
      %v1175 = vpop.f32.mrb[0].mxu0
      %v1176 = vadd.f32 %v875, %v1175
      %v1177 = vpop.f32.mrb[0].mxu0
      %1178 = vmatprep.mubr.bf16.mxu0 0
      %1179 = vmatmul.mubr.bf16.gmra.mrb[0].mxu0 %v1024
      %v1180 = vpop.f32.mrb[0].mxu0
      %v1181 = vadd.f32 %v880, %v1180
      %v1182 = vpop.f32.mrb[0].mxu0
      %v1183 = vpop.f32.mrb[0].mxu0
      %v1184 = vadd.f32 %v883, %v1183
      %v1185 = vpop.f32.mrb[0].mxu0
      %1186 = vdwg.mxu0
      %v1187 = vld [vmem:[%s165] sm:$0xe]
      %v1188 = vld [vmem:[%s165 + $0xc] sm:$0xe]
      %v1189 = vld [vmem:[%s165 + $0x18] sm:$0xe]
      %v1190 = vld [vmem:[%s165 + $0x24] sm:$0xe]
      %v1191 = vld [vmem:[%s165 + $0x30] sm:$0xe]
      %v1192 = vld [vmem:[%s165 + $0x3c] sm:$0xe]
      %v1193 = vld [vmem:[%s165 + $0x48] sm:$0xe]
      %v1194 = vld [vmem:[%s165 + $0x54] sm:$0xe]
      %v1195 = vld [vmem:[%s165 + $0x60] sm:$0xe]
      %v1196 = vld [vmem:[%s165 + $0x6c] sm:$0xe]
      %v1197 = vld [vmem:[%s165 + $0x78] sm:$0xe]
      %v1198 = vld [vmem:[%s165 + $0x84] sm:$0xe]
      %v1199 = vld [vmem:[%s165 + $0x90] sm:$0xe]
      %v1200 = vld [vmem:[%s165 + $0x9c] sm:$0xe]
      %v1201 = vld [vmem:[%s165 + $0xa8] sm:$0xe]
      %v1202 = vld [vmem:[%s165 + $0xb4] sm:$0xe]
      %vm1235 = vcmask 1042432
      %vm1236 = vcmask 1046532
      %vm1237 = vmor %vm1235, %vm1236
      %v1238 = vrot.slane %v1187, 5
      %v1239 = vrot.slane %v1238, 4
      %v1240 = vrot.slane %v173, 5
      %v1241 = vsel %vm1237, %v1239, %v1240
      %v1242 = vrot.slane %v1240, 4
      %v1243 = vrot.slane %v208, 5
      %v1244 = vsel %vm1237, %v1242, %v1243
      %v1245 = vrot.slane %v1188, 5
      %v1246 = vrot.slane %v1245, 4
      %v1247 = vrot.slane %v175, 5
      %v1248 = vsel %vm1237, %v1246, %v1247
      %v1249 = vrot.slane %v1247, 4
      %v1250 = vrot.slane %v209, 5
      %v1251 = vsel %vm1237, %v1249, %v1250
      %v1252 = vrot.slane %v1189, 5
      %v1253 = vrot.slane %v1252, 4
      %v1254 = vrot.slane %v177, 5
      %v1255 = vsel %vm1237, %v1253, %v1254
      %v1256 = vrot.slane %v1254, 4
      %v1257 = vrot.slane %v210, 5
      %v1258 = vsel %vm1237, %v1256, %v1257
      %v1259 = vrot.slane %v1190, 5
      %v1260 = vrot.slane %v1259, 4
      %v1261 = vrot.slane %v179, 5
      %v1262 = vsel %vm1237, %v1260, %v1261
      %v1263 = vrot.slane %v1261, 4
      %v1264 = vrot.slane %v211, 5
      %v1265 = vsel %vm1237, %v1263, %v1264
      %v1266 = vrot.slane %v1191, 5
      %v1267 = vrot.slane %v1266, 4
      %v1268 = vrot.slane %v181, 5
      %v1269 = vsel %vm1237, %v1267, %v1268
      %v1270 = vrot.slane %v1268, 4
      %v1271 = vrot.slane %v212, 5
      %v1272 = vsel %vm1237, %v1270, %v1271
      %v1273 = vrot.slane %v1192, 5
      %v1274 = vrot.slane %v1273, 4
      %v1275 = vrot.slane %v183, 5
      %v1276 = vsel %vm1237, %v1274, %v1275
      %v1277 = vrot.slane %v1275, 4
      %v1278 = vrot.slane %v213, 5
      %v1279 = vsel %vm1237, %v1277, %v1278
      %v1280 = vrot.slane %v1193, 5
      %v1281 = vrot.slane %v1280, 4
      %v1282 = vrot.slane %v185, 5
      %v1283 = vsel %vm1237, %v1281, %v1282
      %v1284 = vrot.slane %v1282, 4
      %v1285 = vrot.slane %v214, 5
      %v1286 = vsel %vm1237, %v1284, %v1285
      %v1287 = vrot.slane %v1194, 5
      %v1288 = vrot.slane %v1287, 4
      %v1289 = vrot.slane %v187, 5
      %v1290 = vsel %vm1237, %v1288, %v1289
      %v1291 = vrot.slane %v1289, 4
      %v1292 = vrot.slane %v215, 5
      %v1293 = vsel %vm1237, %v1291, %v1292
      %v1294 = vrot.slane %v1195, 5
      %v1295 = vrot.slane %v1294, 4
      %v1296 = vrot.slane %v189, 5
      %v1297 = vsel %vm1237, %v1295, %v1296
      %v1298 = vrot.slane %v1296, 4
      %v1299 = vrot.slane %v216, 5
      %v1300 = vsel %vm1237, %v1298, %v1299
      %v1301 = vrot.slane %v1196, 5
      %v1302 = vrot.slane %v1301, 4
      %v1303 = vrot.slane %v191, 5
      %v1304 = vsel %vm1237, %v1302, %v1303
      %v1305 = vrot.slane %v1303, 4
      %v1306 = vrot.slane %v217, 5
      %v1307 = vsel %vm1237, %v1305, %v1306
      %v1308 = vrot.slane %v1197, 5
      %v1309 = vrot.slane %v1308, 4
      %v1310 = vrot.slane %v193, 5
      %v1311 = vsel %vm1237, %v1309, %v1310
      %v1312 = vrot.slane %v1310, 4
      %v1313 = vrot.slane %v218, 5
      %v1314 = vsel %vm1237, %v1312, %v1313
      %v1315 = vrot.slane %v1198, 5
      %v1316 = vrot.slane %v1315, 4
      %v1317 = vrot.slane %v195, 5
      %v1318 = vsel %vm1237, %v1316, %v1317
      %v1319 = vrot.slane %v1317, 4
      %v1320 = vrot.slane %v219, 5
      %v1321 = vsel %vm1237, %v1319, %v1320
      %v1322 = vrot.slane %v1199, 5
      %v1323 = vrot.slane %v1322, 4
      %v1324 = vrot.slane %v197, 5
      %v1325 = vsel %vm1237, %v1323, %v1324
      %v1326 = vrot.slane %v1324, 4
      %v1327 = vrot.slane %v220, 5
      %v1328 = vsel %vm1237, %v1326, %v1327
      %v1329 = vrot.slane %v1200, 5
      %v1330 = vrot.slane %v1329, 4
      %v1331 = vrot.slane %v199, 5
      %v1332 = vsel %vm1237, %v1330, %v1331
      %v1333 = vrot.slane %v1331, 4
      %v1334 = vrot.slane %v221, 5
      %v1335 = vsel %vm1237, %v1333, %v1334
      %v1336 = vrot.slane %v1201, 5
      %v1337 = vrot.slane %v1336, 4
      %v1338 = vrot.slane %v201, 5
      %v1339 = vsel %vm1237, %v1337, %v1338
      %v1340 = vrot.slane %v1338, 4
      %v1341 = vrot.slane %v222, 5
      %v1342 = vsel %vm1237, %v1340, %v1341
      %v1343 = vrot.slane %v1202, 5
      %v1344 = vrot.slane %v1343, 4
      %v1345 = vrot.slane %v203, 5
      %v1346 = vsel %vm1237, %v1344, %v1345
      %v1347 = vrot.slane %v1345, 4
      %v1348 = vrot.slane %v223, 5
      %v1349 = vsel %vm1237, %v1347, %v1348
      %s1350 = scalar_lea.vmem %s1, 32
      %v1351 = vld [vmem:[%s1350] sm:$0xf]
      %v1352 = vld [vmem:[%s1350 + $0x4] sm:$0xf]
      %v1353 = vld [vmem:[%s1350 + $0x8] sm:$0xf]
      %v1354 = vld [vmem:[%s1350 + $0xc] sm:$0xf]
      %v1355 = vunpack.c.l.b16 %v1241
      %v1356 = vunpack.c.l.b16 %v1244
      %v1357 = vunpack.c.l.b16 %v1248
      %v1358 = vunpack.c.l.b16 %v1251
      %v1359 = vunpack.c.l.b16 %v1255
      %v1360 = vunpack.c.l.b16 %v1258
      %v1361 = vunpack.c.l.b16 %v1262
      %v1362 = vunpack.c.l.b16 %v1265
      %v1363 = vunpack.c.l.b16 %v1269
      %v1364 = vunpack.c.l.b16 %v1272
      %v1365 = vunpack.c.l.b16 %v1276
      %v1366 = vunpack.c.l.b16 %v1279
      %v1367 = vunpack.c.l.b16 %v1283
      %v1368 = vunpack.c.l.b16 %v1286
      %v1369 = vunpack.c.l.b16 %v1290
      %v1370 = vunpack.c.l.b16 %v1293
      %v1371 = vunpack.c.l.b16 %v1297
      %v1372 = vunpack.c.l.b16 %v1300
      %v1373 = vunpack.c.l.b16 %v1304
      %v1374 = vunpack.c.l.b16 %v1307
      %v1375 = vunpack.c.l.b16 %v1311
      %v1376 = vunpack.c.l.b16 %v1314
      %v1377 = vunpack.c.l.b16 %v1318
      %v1378 = vunpack.c.l.b16 %v1321
      %v1379 = vunpack.c.l.b16 %v1325
      %v1380 = vunpack.c.l.b16 %v1328
      %v1381 = vunpack.c.l.b16 %v1332
      %v1382 = vunpack.c.l.b16 %v1335
      %v1383 = vunpack.c.l.b16 %v1339
      %v1384 = vunpack.c.l.b16 %v1342
      %v1385 = vunpack.c.l.b16 %v1346
      %v1386 = vunpack.c.l.b16 %v1349
      %v1387 = vpack.c.b16 %v1356, %v1355
      %v1388 = vpack.c.b16 %v1358, %v1357
      %v1389 = vpack.c.b16 %v1360, %v1359
      %v1390 = vpack.c.b16 %v1362, %v1361
      %v1391 = vpack.c.b16 %v1364, %v1363
      %v1392 = vpack.c.b16 %v1366, %v1365
      %v1393 = vpack.c.b16 %v1368, %v1367
      %v1394 = vpack.c.b16 %v1370, %v1369
      %v1395 = vpack.c.b16 %v1372, %v1371
      %v1396 = vpack.c.b16 %v1374, %v1373
      %v1397 = vpack.c.b16 %v1376, %v1375
      %v1398 = vpack.c.b16 %v1378, %v1377
      %v1399 = vpack.c.b16 %v1380, %v1379
      %v1400 = vpack.c.b16 %v1382, %v1381
      %v1401 = vpack.c.b16 %v1384, %v1383
      %v1402 = vpack.c.b16 %v1386, %v1385
      %v1407 = vunpack.c.l.b16 %v1351
      %v1408 = vunpack.c.l.b16 %v1352
      %v1409 = vunpack.c.l.b16 %v1353
      %v1410 = vunpack.c.l.b16 %v1354
      %v1411 = vpack.c.b16 %v1408, %v1407
      %v1412 = vpack.c.b16 %v1410, %v1409
      %v1416 = vsel %vm676, %v1387, 0
      %v1419 = vsel %vm676, %v1388, 0
      %v1422 = vsel %vm676, %v1389, 0
      %v1425 = vsel %vm676, %v1390, 0
      %v1428 = vsel %vm676, %v1391, 0
      %v1431 = vsel %vm676, %v1392, 0
      %v1434 = vsel %vm676, %v1393, 0
      %v1437 = vsel %vm676, %v1394, 0
      %v1440 = vsel %vm676, %v1395, 0
      %v1443 = vsel %vm676, %v1396, 0
      %v1446 = vsel %vm676, %v1397, 0
      %v1449 = vsel %vm676, %v1398, 0
      %v1452 = vsel %vm676, %v1399, 0
      %v1455 = vsel %vm676, %v1400, 0
      %v1458 = vsel %vm676, %v1401, 0
      %v1461 = vsel %vm676, %v1402, 0
      %1463 = vmatprep.subr.bf16.mxu0 0
      %1464 = vmatpush1.bf16.msra.mxu0 %v1411
      %1465 = vmatprep.subr.bf16.mxu0 0
      %1466 = vmatpush1.bf16.msra.mxu0 %v1412
      %1467 = vmatprep.subr.bf16.mxu0 0
      %1468 = vmatpush1.bf16.msra.mxu0 0
      %1469 = vmatprep.subr.bf16.mxu0 0
      %1470 = vmatpush1.bf16.msra.mxu0 0
      %1471 = vmatprep.subr.bf16.mxu0 0
      %1472 = vmatpush1.bf16.msra.mxu0 0
      %1473 = vmatprep.subr.bf16.mxu0 0
      %1474 = vmatpush1.bf16.msra.mxu0 0
      %1475 = vmatprep.subr.bf16.mxu0 0
      %1476 = vmatpush1.bf16.msra.mxu0 0
      %1477 = vmatprep.subr.bf16.mxu0 0
      %1478 = vmatpush1.bf16.msra.mxu0 0
      %1479 = vmatprep.subr.bf16.mxu0 0
      %1480 = vmatpush1.bf16.msra.mxu0 0
      %1481 = vmatprep.subr.bf16.mxu0 0
      %1482 = vmatpush1.bf16.msra.mxu0 0
      %1483 = vmatprep.subr.bf16.mxu0 0
      %1484 = vmatpush1.bf16.msra.mxu0 0
      %1485 = vmatprep.subr.bf16.mxu0 0
      %1486 = vmatpush1.bf16.msra.mxu0 0
      %1487 = vmatprep.subr.bf16.mxu0 0
      %1488 = vmatpush1.bf16.msra.mxu0 0
      %1489 = vmatprep.subr.bf16.mxu0 0
      %1490 = vmatpush1.bf16.msra.mxu0 0
      %1491 = vmatprep.subr.bf16.mxu0 0
      %1492 = vmatpush1.bf16.msra.mxu0 0
      %1493 = vmatprep.subr.bf16.mxu0 0
      %1494 = vmatpush1.bf16.msra.mxu0 0
      %1495 = vmatprep.mubr.bf16.mxu0 0
      %1496 = vmatmul.mubr.bf16.gmra.mrb[0].mxu0 %v1416
      %v1497 = vpop.f32.mrb[0].mxu0
      %v1498 = vadd.f32 0.0, %v1497
      %v1499 = vpop.f32.mrb[0].mxu0
      %v1500 = vpop.f32.mrb[0].mxu0
      %v1501 = vadd.f32 0.0, %v1500
      %v1502 = vpop.f32.mrb[0].mxu0
      %1503 = vmatprep.mubr.bf16.mxu0 0
      %1504 = vmatmul.mubr.bf16.gmra.mrb[0].mxu0 %v1419
      %v1505 = vpop.f32.mrb[0].mxu0
      %v1506 = vadd.f32 0.0, %v1505
      %v1507 = vpop.f32.mrb[0].mxu0
      %v1508 = vpop.f32.mrb[0].mxu0
      %v1509 = vadd.f32 0.0, %v1508
      %v1510 = vpop.f32.mrb[0].mxu0
      %1511 = vmatprep.mubr.bf16.mxu0 0
      %1512 = vmatmul.mubr.bf16.gmra.mrb[0].mxu0 %v1422
      %v1513 = vpop.f32.mrb[0].mxu0
      %v1514 = vadd.f32 0.0, %v1513
      %v1515 = vpop.f32.mrb[0].mxu0
      %v1516 = vpop.f32.mrb[0].mxu0
      %v1517 = vadd.f32 0.0, %v1516
      %v1518 = vpop.f32.mrb[0].mxu0
      %1519 = vmatprep.mubr.bf16.mxu0 0
      %1520 = vmatmul.mubr.bf16.gmra.mrb[0].mxu0 %v1425
      %v1521 = vpop.f32.mrb[0].mxu0
      %v1522 = vadd.f32 0.0, %v1521
      %v1523 = vpop.f32.mrb[0].mxu0
      %v1524 = vpop.f32.mrb[0].mxu0
      %v1525 = vadd.f32 0.0, %v1524
      %v1526 = vpop.f32.mrb[0].mxu0
      %1527 = vmatprep.mubr.bf16.mxu0 0
      %1528 = vmatmul.mubr.bf16.gmra.mrb[0].mxu0 %v1428
      %v1529 = vpop.f32.mrb[0].mxu0
      %v1530 = vadd.f32 0.0, %v1529
      %v1531 = vpop.f32.mrb[0].mxu0
      %v1532 = vpop.f32.mrb[0].mxu0
      %v1533 = vadd.f32 0.0, %v1532
      %v1534 = vpop.f32.mrb[0].mxu0
      %1535 = vmatprep.mubr.bf16.mxu0 0
      %1536 = vmatmul.mubr.bf16.gmra.mrb[0].mxu0 %v1431
      %v1537 = vpop.f32.mrb[0].mxu0
      %v1538 = vadd.f32 0.0, %v1537
      %v1539 = vpop.f32.mrb[0].mxu0
      %v1540 = vpop.f32.mrb[0].mxu0
      %v1541 = vadd.f32 0.0, %v1540
      %v1542 = vpop.f32.mrb[0].mxu0
      %1543 = vmatprep.mubr.bf16.mxu0 0
      %1544 = vmatmul.mubr.bf16.gmra.mrb[0].mxu0 %v1434
      %v1545 = vpop.f32.mrb[0].mxu0
      %v1546 = vadd.f32 0.0, %v1545
      %v1547 = vpop.f32.mrb[0].mxu0
      %v1548 = vpop.f32.mrb[0].mxu0
      %v1549 = vadd.f32 0.0, %v1548
      %v1550 = vpop.f32.mrb[0].mxu0
      %1551 = vmatprep.mubr.bf16.mxu0 0
      %1552 = vmatmul.mubr.bf16.gmra.mrb[0].mxu0 %v1437
      %v1553 = vpop.f32.mrb[0].mxu0
      %v1554 = vadd.f32 0.0, %v1553
      %v1555 = vpop.f32.mrb[0].mxu0
      %v1556 = vpop.f32.mrb[0].mxu0
      %v1557 = vadd.f32 0.0, %v1556
      %v1558 = vpop.f32.mrb[0].mxu0
      %1559 = vmatprep.mubr.bf16.mxu0 0
      %1560 = vmatmul.mubr.bf16.gmra.mrb[0].mxu0 %v1440
      %v1561 = vpop.f32.mrb[0].mxu0
      %v1562 = vadd.f32 0.0, %v1561
      %v1563 = vpop.f32.mrb[0].mxu0
      %v1564 = vpop.f32.mrb[0].mxu0
      %v1565 = vadd.f32 0.0, %v1564
      %v1566 = vpop.f32.mrb[0].mxu0
      %1567 = vmatprep.mubr.bf16.mxu0 0
      %1568 = vmatmul.mubr.bf16.gmra.mrb[0].mxu0 %v1443
      %v1569 = vpop.f32.mrb[0].mxu0
      %v1570 = vadd.f32 0.0, %v1569
      %v1571 = vpop.f32.mrb[0].mxu0
      %v1572 = vpop.f32.mrb[0].mxu0
      %v1573 = vadd.f32 0.0, %v1572
      %v1574 = vpop.f32.mrb[0].mxu0
      %1575 = vmatprep.mubr.bf16.mxu0 0
      %1576 = vmatmul.mubr.bf16.gmra.mrb[0].mxu0 %v1446
      %v1577 = vpop.f32.mrb[0].mxu0
      %v1578 = vadd.f32 0.0, %v1577
      %v1579 = vpop.f32.mrb[0].mxu0
      %v1580 = vpop.f32.mrb[0].mxu0
      %v1581 = vadd.f32 0.0, %v1580
      %v1582 = vpop.f32.mrb[0].mxu0
      %1583 = vmatprep.mubr.bf16.mxu0 0
      %1584 = vmatmul.mubr.bf16.gmra.mrb[0].mxu0 %v1449
      %v1585 = vpop.f32.mrb[0].mxu0
      %v1586 = vadd.f32 0.0, %v1585
      %v1587 = vpop.f32.mrb[0].mxu0
      %v1588 = vpop.f32.mrb[0].mxu0
      %v1589 = vadd.f32 0.0, %v1588
      %v1590 = vpop.f32.mrb[0].mxu0
      %1591 = vmatprep.mubr.bf16.mxu0 0
      %1592 = vmatmul.mubr.bf16.gmra.mrb[0].mxu0 %v1452
      %v1593 = vpop.f32.mrb[0].mxu0
      %v1594 = vadd.f32 0.0, %v1593
      %v1595 = vpop.f32.mrb[0].mxu0
      %v1596 = vpop.f32.mrb[0].mxu0
      %v1597 = vadd.f32 0.0, %v1596
      %v1598 = vpop.f32.mrb[0].mxu0
      %1599 = vmatprep.mubr.bf16.mxu0 0
      %1600 = vmatmul.mubr.bf16.gmra.mrb[0].mxu0 %v1455
      %v1601 = vpop.f32.mrb[0].mxu0
      %v1602 = vadd.f32 0.0, %v1601
      %v1603 = vpop.f32.mrb[0].mxu0
      %v1604 = vpop.f32.mrb[0].mxu0
      %v1605 = vadd.f32 0.0, %v1604
      %v1606 = vpop.f32.mrb[0].mxu0
      %1607 = vmatprep.mubr.bf16.mxu0 0
      %1608 = vmatmul.mubr.bf16.gmra.mrb[0].mxu0 %v1458
      %v1609 = vpop.f32.mrb[0].mxu0
      %v1610 = vadd.f32 0.0, %v1609
      %v1611 = vpop.f32.mrb[0].mxu0
      %v1612 = vpop.f32.mrb[0].mxu0
      %v1613 = vadd.f32 0.0, %v1612
      %v1614 = vpop.f32.mrb[0].mxu0
      %1615 = vmatprep.mubr.bf16.mxu0 0
      %1616 = vmatmul.mubr.bf16.gmra.mrb[0].mxu0 %v1461
      %v1617 = vpop.f32.mrb[0].mxu0
      %v1618 = vadd.f32 0.0, %v1617
      %v1619 = vpop.f32.mrb[0].mxu0
      %v1620 = vpop.f32.mrb[0].mxu0
      %v1621 = vadd.f32 0.0, %v1620
      %v1622 = vpop.f32.mrb[0].mxu0
      %1623 = vdwg.mxu0
      %v1624 = vadd.f32 %v1061, %v1498
      %v1625 = vadd.f32 %v1064, %v1501
      %v1626 = vadd.f32 %v1069, %v1506
      %v1627 = vadd.f32 %v1072, %v1509
      %v1628 = vadd.f32 %v1077, %v1514
      %v1629 = vadd.f32 %v1080, %v1517
      %v1630 = vadd.f32 %v1085, %v1522
      %v1631 = vadd.f32 %v1088, %v1525
      %v1632 = vadd.f32 %v1093, %v1530
      %v1633 = vadd.f32 %v1096, %v1533
      %v1634 = vadd.f32 %v1101, %v1538
      %v1635 = vadd.f32 %v1104, %v1541
      %v1636 = vadd.f32 %v1109, %v1546
      %v1637 = vadd.f32 %v1112, %v1549
      %v1638 = vadd.f32 %v1117, %v1554
      %v1639 = vadd.f32 %v1120, %v1557
      %v1640 = vadd.f32 %v1125, %v1562
      %v1641 = vadd.f32 %v1128, %v1565
      %v1642 = vadd.f32 %v1133, %v1570
      %v1643 = vadd.f32 %v1136, %v1573
      %v1644 = vadd.f32 %v1141, %v1578
      %v1645 = vadd.f32 %v1144, %v1581
      %v1646 = vadd.f32 %v1149, %v1586
      %v1647 = vadd.f32 %v1152, %v1589
      %v1648 = vadd.f32 %v1157, %v1594
      %v1649 = vadd.f32 %v1160, %v1597
      %v1650 = vadd.f32 %v1165, %v1602
      %v1651 = vadd.f32 %v1168, %v1605
      %v1652 = vadd.f32 %v1173, %v1610
      %v1653 = vadd.f32 %v1176, %v1613
      %v1654 = vadd.f32 %v1181, %v1618
      %v1655 = vadd.f32 %v1184, %v1621
      %s1656 = scalar_lea.vmem %s165, 12
      %v1657 = vld [vmem:[%s1656] sm:$0xf]
      %v1658 = vld [vmem:[%s1656 + $0x4] sm:$0xf]
      %v1659 = vld [vmem:[%s1656 + $0xc] sm:$0xf]
      %v1660 = vld [vmem:[%s1656 + $0x10] sm:$0xf]
      %v1661 = vld [vmem:[%s1656 + $0x18] sm:$0xf]
      %v1662 = vld [vmem:[%s1656 + $0x1c] sm:$0xf]
      %v1663 = vld [vmem:[%s1656 + $0x24] sm:$0xf]
      %v1664 = vld [vmem:[%s1656 + $0x28] sm:$0xf]
      %v1665 = vld [vmem:[%s1656 + $0x30] sm:$0xf]
      %v1666 = vld [vmem:[%s1656 + $0x34] sm:$0xf]
      %v1667 = vld [vmem:[%s1656 + $0x3c] sm:$0xf]
      %v1668 = vld [vmem:[%s1656 + $0x40] sm:$0xf]
      %v1669 = vld [vmem:[%s1656 + $0x48] sm:$0xf]
      %v1670 = vld [vmem:[%s1656 + $0x4c] sm:$0xf]
      %v1671 = vld [vmem:[%s1656 + $0x54] sm:$0xf]
      %v1672 = vld [vmem:[%s1656 + $0x58] sm:$0xf]
      %v1673 = vld [vmem:[%s1656 + $0x60] sm:$0xf]
      %v1674 = vld [vmem:[%s1656 + $0x64] sm:$0xf]
      %v1675 = vld [vmem:[%s1656 + $0x6c] sm:$0xf]
      %v1676 = vld [vmem:[%s1656 + $0x70] sm:$0xf]
      %v1677 = vld [vmem:[%s1656 + $0x78] sm:$0xf]
      %v1678 = vld [vmem:[%s1656 + $0x7c] sm:$0xf]
      %v1679 = vld [vmem:[%s1656 + $0x84] sm:$0xf]
      %v1680 = vld [vmem:[%s1656 + $0x88] sm:$0xf]
      %v1681 = vld [vmem:[%s1656 + $0x90] sm:$0xf]
      %v1682 = vld [vmem:[%s1656 + $0x94] sm:$0xf]
      %v1683 = vld [vmem:[%s1656 + $0x9c] sm:$0xf]
      %v1684 = vld [vmem:[%s1656 + $0xa0] sm:$0xf]
      %v1685 = vld [vmem:[%s1656 + $0xa8] sm:$0xf]
      %v1686 = vld [vmem:[%s1656 + $0xac] sm:$0xf]
      %v1687 = vld [vmem:[%s1656 + $0xb4] sm:$0xf]
      %v1688 = vld [vmem:[%s1656 + $0xb8] sm:$0xf]
      %s1689 = scalar_lea.vmem %s1, 48
      %v1690 = vld [vmem:[%s1689] sm:$0xf]
      %v1691 = vld [vmem:[%s1689 + $0x4] sm:$0xf]
      %v1692 = vld [vmem:[%s1689 + $0x8] sm:$0xf]
      %v1693 = vld [vmem:[%s1689 + $0xc] sm:$0xf]
      %v1726 = vunpack.c.l.b16 %v1657
      %v1727 = vunpack.c.l.b16 %v1658
      %v1728 = vunpack.c.l.b16 %v1659
      %v1729 = vunpack.c.l.b16 %v1660
      %v1730 = vunpack.c.l.b16 %v1661
      %v1731 = vunpack.c.l.b16 %v1662
      %v1732 = vunpack.c.l.b16 %v1663
      %v1733 = vunpack.c.l.b16 %v1664
      %v1734 = vunpack.c.l.b16 %v1665
      %v1735 = vunpack.c.l.b16 %v1666
      %v1736 = vunpack.c.l.b16 %v1667
      %v1737 = vunpack.c.l.b16 %v1668
      %v1738 = vunpack.c.l.b16 %v1669
      %v1739 = vunpack.c.l.b16 %v1670
      %v1740 = vunpack.c.l.b16 %v1671
      %v1741 = vunpack.c.l.b16 %v1672
      %v1742 = vunpack.c.l.b16 %v1673
      %v1743 = vunpack.c.l.b16 %v1674
      %v1744 = vunpack.c.l.b16 %v1675
      %v1745 = vunpack.c.l.b16 %v1676
      %v1746 = vunpack.c.l.b16 %v1677
      %v1747 = vunpack.c.l.b16 %v1678
      %v1748 = vunpack.c.l.b16 %v1679
      %v1749 = vunpack.c.l.b16 %v1680
      %v1750 = vunpack.c.l.b16 %v1681
      %v1751 = vunpack.c.l.b16 %v1682
      %v1752 = vunpack.c.l.b16 %v1683
      %v1753 = vunpack.c.l.b16 %v1684
      %v1754 = vunpack.c.l.b16 %v1685
      %v1755 = vunpack.c.l.b16 %v1686
      %v1756 = vunpack.c.l.b16 %v1687
      %v1757 = vunpack.c.l.b16 %v1688
      %v1758 = vpack.c.b16 %v1727, %v1726
      %v1759 = vpack.c.b16 %v1729, %v1728
      %v1760 = vpack.c.b16 %v1731, %v1730
      %v1761 = vpack.c.b16 %v1733, %v1732
      %v1762 = vpack.c.b16 %v1735, %v1734
      %v1763 = vpack.c.b16 %v1737, %v1736
      %v1764 = vpack.c.b16 %v1739, %v1738
      %v1765 = vpack.c.b16 %v1741, %v1740
      %v1766 = vpack.c.b16 %v1743, %v1742
      %v1767 = vpack.c.b16 %v1745, %v1744
      %v1768 = vpack.c.b16 %v1747, %v1746
      %v1769 = vpack.c.b16 %v1749, %v1748
      %v1770 = vpack.c.b16 %v1751, %v1750
      %v1771 = vpack.c.b16 %v1753, %v1752
      %v1772 = vpack.c.b16 %v1755, %v1754
      %v1773 = vpack.c.b16 %v1757, %v1756
      %v1778 = vunpack.c.l.b16 %v1690
      %v1779 = vunpack.c.l.b16 %v1691
      %v1780 = vunpack.c.l.b16 %v1692
      %v1781 = vunpack.c.l.b16 %v1693
      %v1782 = vpack.c.b16 %v1779, %v1778
      %v1783 = vpack.c.b16 %v1781, %v1780
      %v1787 = vsel %vm676, %v1758, 0
      %v1790 = vsel %vm676, %v1759, 0
      %v1793 = vsel %vm676, %v1760, 0
      %v1796 = vsel %vm676, %v1761, 0
      %v1799 = vsel %vm676, %v1762, 0
      %v1802 = vsel %vm676, %v1763, 0
      %v1805 = vsel %vm676, %v1764, 0
      %v1808 = vsel %vm676, %v1765, 0
      %v1811 = vsel %vm676, %v1766, 0
      %v1814 = vsel %vm676, %v1767, 0
      %v1817 = vsel %vm676, %v1768, 0
      %v1820 = vsel %vm676, %v1769, 0
      %v1823 = vsel %vm676, %v1770, 0
      %v1826 = vsel %vm676, %v1771, 0
      %v1829 = vsel %vm676, %v1772, 0
      %v1832 = vsel %vm676, %v1773, 0
      %1834 = vmatprep.subr.bf16.mxu0 0
      %1835 = vmatpush1.bf16.msra.mxu0 %v1782
      %1836 = vmatprep.subr.bf16.mxu0 0
      %1837 = vmatpush1.bf16.msra.mxu0 %v1783
      %1838 = vmatprep.subr.bf16.mxu0 0
      %1839 = vmatpush1.bf16.msra.mxu0 0
      %1840 = vmatprep.subr.bf16.mxu0 0
      %1841 = vmatpush1.bf16.msra.mxu0 0
      %1842 = vmatprep.subr.bf16.mxu0 0
      %1843 = vmatpush1.bf16.msra.mxu0 0
      %1844 = vmatprep.subr.bf16.mxu0 0
      %1845 = vmatpush1.bf16.msra.mxu0 0
      %1846 = vmatprep.subr.bf16.mxu0 0
      %1847 = vmatpush1.bf16.msra.mxu0 0
      %1848 = vmatprep.subr.bf16.mxu0 0
      %1849 = vmatpush1.bf16.msra.mxu0 0
      %1850 = vmatprep.subr.bf16.mxu0 0
      %1851 = vmatpush1.bf16.msra.mxu0 0
      %1852 = vmatprep.subr.bf16.mxu0 0
      %1853 = vmatpush1.bf16.msra.mxu0 0
      %1854 = vmatprep.subr.bf16.mxu0 0
      %1855 = vmatpush1.bf16.msra.mxu0 0
      %1856 = vmatprep.subr.bf16.mxu0 0
      %1857 = vmatpush1.bf16.msra.mxu0 0
      %1858 = vmatprep.subr.bf16.mxu0 0
      %1859 = vmatpush1.bf16.msra.mxu0 0
      %1860 = vmatprep.subr.bf16.mxu0 0
      %1861 = vmatpush1.bf16.msra.mxu0 0
      %1862 = vmatprep.subr.bf16.mxu0 0
      %1863 = vmatpush1.bf16.msra.mxu0 0
      %1864 = vmatprep.subr.bf16.mxu0 0
      %1865 = vmatpush1.bf16.msra.mxu0 0
      %1866 = vmatprep.mubr.bf16.mxu0 0
      %1867 = vmatmul.mubr.bf16.gmra.mrb[0].mxu0 %v1787
      %v1868 = vpop.f32.mrb[0].mxu0
      %v1869 = vadd.f32 0.0, %v1868
      %v1870 = vpop.f32.mrb[0].mxu0
      %v1871 = vpop.f32.mrb[0].mxu0
      %v1872 = vadd.f32 0.0, %v1871
      %v1873 = vpop.f32.mrb[0].mxu0
      %1874 = vmatprep.mubr.bf16.mxu0 0
      %1875 = vmatmul.mubr.bf16.gmra.mrb[0].mxu0 %v1790
      %v1876 = vpop.f32.mrb[0].mxu0
      %v1877 = vadd.f32 0.0, %v1876
      %v1878 = vpop.f32.mrb[0].mxu0
      %v1879 = vpop.f32.mrb[0].mxu0
      %v1880 = vadd.f32 0.0, %v1879
      %v1881 = vpop.f32.mrb[0].mxu0
      %1882 = vmatprep.mubr.bf16.mxu0 0
      %1883 = vmatmul.mubr.bf16.gmra.mrb[0].mxu0 %v1793
      %v1884 = vpop.f32.mrb[0].mxu0
      %v1885 = vadd.f32 0.0, %v1884
      %v1886 = vpop.f32.mrb[0].mxu0
      %v1887 = vpop.f32.mrb[0].mxu0
      %v1888 = vadd.f32 0.0, %v1887
      %v1889 = vpop.f32.mrb[0].mxu0
      %1890 = vmatprep.mubr.bf16.mxu0 0
      %1891 = vmatmul.mubr.bf16.gmra.mrb[0].mxu0 %v1796
      %v1892 = vpop.f32.mrb[0].mxu0
      %v1893 = vadd.f32 0.0, %v1892
      %v1894 = vpop.f32.mrb[0].mxu0
      %v1895 = vpop.f32.mrb[0].mxu0
      %v1896 = vadd.f32 0.0, %v1895
      %v1897 = vpop.f32.mrb[0].mxu0
      %1898 = vmatprep.mubr.bf16.mxu0 0
      %1899 = vmatmul.mubr.bf16.gmra.mrb[0].mxu0 %v1799
      %v1900 = vpop.f32.mrb[0].mxu0
      %v1901 = vadd.f32 0.0, %v1900
      %v1902 = vpop.f32.mrb[0].mxu0
      %v1903 = vpop.f32.mrb[0].mxu0
      %v1904 = vadd.f32 0.0, %v1903
      %v1905 = vpop.f32.mrb[0].mxu0
      %1906 = vmatprep.mubr.bf16.mxu0 0
      %1907 = vmatmul.mubr.bf16.gmra.mrb[0].mxu0 %v1802
      %v1908 = vpop.f32.mrb[0].mxu0
      %v1909 = vadd.f32 0.0, %v1908
      %v1910 = vpop.f32.mrb[0].mxu0
      %v1911 = vpop.f32.mrb[0].mxu0
      %v1912 = vadd.f32 0.0, %v1911
      %v1913 = vpop.f32.mrb[0].mxu0
      %1914 = vmatprep.mubr.bf16.mxu0 0
      %1915 = vmatmul.mubr.bf16.gmra.mrb[0].mxu0 %v1805
      %v1916 = vpop.f32.mrb[0].mxu0
      %v1917 = vadd.f32 0.0, %v1916
      %v1918 = vpop.f32.mrb[0].mxu0
      %v1919 = vpop.f32.mrb[0].mxu0
      %v1920 = vadd.f32 0.0, %v1919
      %v1921 = vpop.f32.mrb[0].mxu0
      %1922 = vmatprep.mubr.bf16.mxu0 0
      %1923 = vmatmul.mubr.bf16.gmra.mrb[0].mxu0 %v1808
      %v1924 = vpop.f32.mrb[0].mxu0
      %v1925 = vadd.f32 0.0, %v1924
      %v1926 = vpop.f32.mrb[0].mxu0
      %v1927 = vpop.f32.mrb[0].mxu0
      %v1928 = vadd.f32 0.0, %v1927
      %v1929 = vpop.f32.mrb[0].mxu0
      %1930 = vmatprep.mubr.bf16.mxu0 0
      %1931 = vmatmul.mubr.bf16.gmra.mrb[0].mxu0 %v1811
      %v1932 = vpop.f32.mrb[0].mxu0
      %v1933 = vadd.f32 0.0, %v1932
      %v1934 = vpop.f32.mrb[0].mxu0
      %v1935 = vpop.f32.mrb[0].mxu0
      %v1936 = vadd.f32 0.0, %v1935
      %v1937 = vpop.f32.mrb[0].mxu0
      %1938 = vmatprep.mubr.bf16.mxu0 0
      %1939 = vmatmul.mubr.bf16.gmra.mrb[0].mxu0 %v1814
      %v1940 = vpop.f32.mrb[0].mxu0
      %v1941 = vadd.f32 0.0, %v1940
      %v1942 = vpop.f32.mrb[0].mxu0
      %v1943 = vpop.f32.mrb[0].mxu0
      %v1944 = vadd.f32 0.0, %v1943
      %v1945 = vpop.f32.mrb[0].mxu0
      %1946 = vmatprep.mubr.bf16.mxu0 0
      %1947 = vmatmul.mubr.bf16.gmra.mrb[0].mxu0 %v1817
      %v1948 = vpop.f32.mrb[0].mxu0
      %v1949 = vadd.f32 0.0, %v1948
      %v1950 = vpop.f32.mrb[0].mxu0
      %v1951 = vpop.f32.mrb[0].mxu0
      %v1952 = vadd.f32 0.0, %v1951
      %v1953 = vpop.f32.mrb[0].mxu0
      %1954 = vmatprep.mubr.bf16.mxu0 0
      %1955 = vmatmul.mubr.bf16.gmra.mrb[0].mxu0 %v1820
      %v1956 = vpop.f32.mrb[0].mxu0
      %v1957 = vadd.f32 0.0, %v1956
      %v1958 = vpop.f32.mrb[0].mxu0
      %v1959 = vpop.f32.mrb[0].mxu0
      %v1960 = vadd.f32 0.0, %v1959
      %v1961 = vpop.f32.mrb[0].mxu0
      %1962 = vmatprep.mubr.bf16.mxu0 0
      %1963 = vmatmul.mubr.bf16.gmra.mrb[0].mxu0 %v1823
      %v1964 = vpop.f32.mrb[0].mxu0
      %v1965 = vadd.f32 0.0, %v1964
      %v1966 = vpop.f32.mrb[0].mxu0
      %v1967 = vpop.f32.mrb[0].mxu0
      %v1968 = vadd.f32 0.0, %v1967
      %v1969 = vpop.f32.mrb[0].mxu0
      %1970 = vmatprep.mubr.bf16.mxu0 0
      %1971 = vmatmul.mubr.bf16.gmra.mrb[0].mxu0 %v1826
      %v1972 = vpop.f32.mrb[0].mxu0
      %v1973 = vadd.f32 0.0, %v1972
      %v1974 = vpop.f32.mrb[0].mxu0
      %v1975 = vpop.f32.mrb[0].mxu0
      %v1976 = vadd.f32 0.0, %v1975
      %v1977 = vpop.f32.mrb[0].mxu0
      %1978 = vmatprep.mubr.bf16.mxu0 0
      %1979 = vmatmul.mubr.bf16.gmra.mrb[0].mxu0 %v1829
      %v1980 = vpop.f32.mrb[0].mxu0
      %v1981 = vadd.f32 0.0, %v1980
      %v1982 = vpop.f32.mrb[0].mxu0
      %v1983 = vpop.f32.mrb[0].mxu0
      %v1984 = vadd.f32 0.0, %v1983
      %v1985 = vpop.f32.mrb[0].mxu0
      %1986 = vmatprep.mubr.bf16.mxu0 0
      %1987 = vmatmul.mubr.bf16.gmra.mrb[0].mxu0 %v1832
      %v1988 = vpop.f32.mrb[0].mxu0
      %v1989 = vadd.f32 0.0, %v1988
      %v1990 = vpop.f32.mrb[0].mxu0
      %v1991 = vpop.f32.mrb[0].mxu0
      %v1992 = vadd.f32 0.0, %v1991
      %v1993 = vpop.f32.mrb[0].mxu0
      %1994 = vdwg.mxu0
      %v1995 = vadd.f32 %v1624, %v1869
      %v1996 = vadd.f32 %v1625, %v1872
      %v1997 = vadd.f32 %v1626, %v1877
      %v1998 = vadd.f32 %v1627, %v1880
      %v1999 = vadd.f32 %v1628, %v1885
      %v2000 = vadd.f32 %v1629, %v1888
      %v2001 = vadd.f32 %v1630, %v1893
      %v2002 = vadd.f32 %v1631, %v1896
      %v2003 = vadd.f32 %v1632, %v1901
      %v2004 = vadd.f32 %v1633, %v1904
      %v2005 = vadd.f32 %v1634, %v1909
      %v2006 = vadd.f32 %v1635, %v1912
      %v2007 = vadd.f32 %v1636, %v1917
      %v2008 = vadd.f32 %v1637, %v1920
      %v2009 = vadd.f32 %v1638, %v1925
      %v2010 = vadd.f32 %v1639, %v1928
      %v2011 = vadd.f32 %v1640, %v1933
      %v2012 = vadd.f32 %v1641, %v1936
      %v2013 = vadd.f32 %v1642, %v1941
      %v2014 = vadd.f32 %v1643, %v1944
      %v2015 = vadd.f32 %v1644, %v1949
      %v2016 = vadd.f32 %v1645, %v1952
      %v2017 = vadd.f32 %v1646, %v1957
      %v2018 = vadd.f32 %v1647, %v1960
      %v2019 = vadd.f32 %v1648, %v1965
      %v2020 = vadd.f32 %v1649, %v1968
      %v2021 = vadd.f32 %v1650, %v1973
      %v2022 = vadd.f32 %v1651, %v1976
      %v2023 = vadd.f32 %v1652, %v1981
      %v2024 = vadd.f32 %v1653, %v1984
      %v2025 = vadd.f32 %v1654, %v1989
      %v2026 = vadd.f32 %v1655, %v1992
      %v2027 = vld [vmem:[%s1656] sm:$0xf]
      %v2028 = vld [vmem:[%s1656 + $0x4] sm:$0xf]
      %v2029 = vld [vmem:[%s1656 + $0x8] sm:$0x1]
      %v2030 = vld [vmem:[%s1656 + $0xc] sm:$0xf]
      %v2031 = vld [vmem:[%s1656 + $0x10] sm:$0xf]
      %v2032 = vld [vmem:[%s1656 + $0x14] sm:$0x1]
      %v2033 = vld [vmem:[%s1656 + $0x18] sm:$0xf]
      %v2034 = vld [vmem:[%s1656 + $0x1c] sm:$0xf]
      %v2035 = vld [vmem:[%s1656 + $0x20] sm:$0x1]
      %v2036 = vld [vmem:[%s1656 + $0x24] sm:$0xf]
      %v2037 = vld [vmem:[%s1656 + $0x28] sm:$0xf]
      %v2038 = vld [vmem:[%s1656 + $0x2c] sm:$0x1]
      %v2039 = vld [vmem:[%s1656 + $0x30] sm:$0xf]
      %v2040 = vld [vmem:[%s1656 + $0x34] sm:$0xf]
      %v2041 = vld [vmem:[%s1656 + $0x38] sm:$0x1]
      %v2042 = vld [vmem:[%s1656 + $0x3c] sm:$0xf]
      %v2043 = vld [vmem:[%s1656 + $0x40] sm:$0xf]
      %v2044 = vld [vmem:[%s1656 + $0x44] sm:$0x1]
      %v2045 = vld [vmem:[%s1656 + $0x48] sm:$0xf]
      %v2046 = vld [vmem:[%s1656 + $0x4c] sm:$0xf]
      %v2047 = vld [vmem:[%s1656 + $0x50] sm:$0x1]
      %v2048 = vld [vmem:[%s1656 + $0x54] sm:$0xf]
      %v2049 = vld [vmem:[%s1656 + $0x58] sm:$0xf]
      %v2050 = vld [vmem:[%s1656 + $0x5c] sm:$0x1]
      %v2051 = vld [vmem:[%s1656 + $0x60] sm:$0xf]
      %v2052 = vld [vmem:[%s1656 + $0x64] sm:$0xf]
      %v2053 = vld [vmem:[%s1656 + $0x68] sm:$0x1]
      %v2054 = vld [vmem:[%s1656 + $0x6c] sm:$0xf]
      %v2055 = vld [vmem:[%s1656 + $0x70] sm:$0xf]
      %v2056 = vld [vmem:[%s1656 + $0x74] sm:$0x1]
      %v2057 = vld [vmem:[%s1656 + $0x78] sm:$0xf]
      %v2058 = vld [vmem:[%s1656 + $0x7c] sm:$0xf]
      %v2059 = vld [vmem:[%s1656 + $0x80] sm:$0x1]
      %v2060 = vld [vmem:[%s1656 + $0x84] sm:$0xf]
      %v2061 = vld [vmem:[%s1656 + $0x88] sm:$0xf]
      %v2062 = vld [vmem:[%s1656 + $0x8c] sm:$0x1]
      %v2063 = vld [vmem:[%s1656 + $0x90] sm:$0xf]
      %v2064 = vld [vmem:[%s1656 + $0x94] sm:$0xf]
      %v2065 = vld [vmem:[%s1656 + $0x98] sm:$0x1]
      %v2066 = vld [vmem:[%s1656 + $0x9c] sm:$0xf]
      %v2067 = vld [vmem:[%s1656 + $0xa0] sm:$0xf]
      %v2068 = vld [vmem:[%s1656 + $0xa4] sm:$0x1]
      %v2069 = vld [vmem:[%s1656 + $0xa8] sm:$0xf]
      %v2070 = vld [vmem:[%s1656 + $0xac] sm:$0xf]
      %v2071 = vld [vmem:[%s1656 + $0xb0] sm:$0x1]
      %v2072 = vld [vmem:[%s1656 + $0xb4] sm:$0xf]
      %v2073 = vld [vmem:[%s1656 + $0xb8] sm:$0xf]
      %v2074 = vld [vmem:[%s1656 + $0xbc] sm:$0x1]
      %v2076 = vshrl.u32 %v2027, 16
      %v2078 = vrot.slane %v2076, 4
      %v2079 = vshll.u32 %v2027, 16
      %v2081 = vrot.slane %v2079, 5
      %v2082 = vor.u32 %v2078, %v2081
      %v2083 = vrot.slane %v2082, 4
      %v2085 = vshll.u32 %v2028, 16
      %v2087 = vrot.slane %v2085, 5
      %v2088 = vsel %vm226, %v2083, %v2087
      %v2089 = vshrl.u32 %v2028, 16
      %v2091 = vrot.slane %v2089, 4
      %v2092 = vor.u32 %v2091, %v2087
      %v2093 = vrot.slane %v2092, 4
      %v2095 = vshll.u32 %v2029, 16
      %v2097 = vrot.slane %v2095, 5
      %v2098 = vsel %vm226, %v2093, %v2097
      %v2100 = vshrl.u32 %v2030, 16
      %v2102 = vrot.slane %v2100, 4
      %v2103 = vshll.u32 %v2030, 16
      %v2105 = vrot.slane %v2103, 5
      %v2106 = vor.u32 %v2102, %v2105
      %v2107 = vrot.slane %v2106, 4
      %v2109 = vshll.u32 %v2031, 16
      %v2111 = vrot.slane %v2109, 5
      %v2112 = vsel %vm226, %v2107, %v2111
      %v2113 = vshrl.u32 %v2031, 16
      %v2115 = vrot.slane %v2113, 4
      %v2116 = vor.u32 %v2115, %v2111
      %v2117 = vrot.slane %v2116, 4
      %v2119 = vshll.u32 %v2032, 16
      %v2121 = vrot.slane %v2119, 5
      %v2122 = vsel %vm226, %v2117, %v2121
      %v2124 = vshrl.u32 %v2033, 16
      %v2126 = vrot.slane %v2124, 4
      %v2127 = vshll.u32 %v2033, 16
      %v2129 = vrot.slane %v2127, 5
      %v2130 = vor.u32 %v2126, %v2129
      %v2131 = vrot.slane %v2130, 4
      %v2133 = vshll.u32 %v2034, 16
      %v2135 = vrot.slane %v2133, 5
      %v2136 = vsel %vm226, %v2131, %v2135
      %v2137 = vshrl.u32 %v2034, 16
      %v2139 = vrot.slane %v2137, 4
      %v2140 = vor.u32 %v2139, %v2135
      %v2141 = vrot.slane %v2140, 4
      %v2143 = vshll.u32 %v2035, 16
      %v2145 = vrot.slane %v2143, 5
      %v2146 = vsel %vm226, %v2141, %v2145
      %v2148 = vshrl.u32 %v2036, 16
      %v2150 = vrot.slane %v2148, 4
      %v2151 = vshll.u32 %v2036, 16
      %v2153 = vrot.slane %v2151, 5
      %v2154 = vor.u32 %v2150, %v2153
      %v2155 = vrot.slane %v2154, 4
      %v2157 = vshll.u32 %v2037, 16
      %v2159 = vrot.slane %v2157, 5
      %v2160 = vsel %vm226, %v2155, %v2159
      %v2161 = vshrl.u32 %v2037, 16
      %v2163 = vrot.slane %v2161, 4
      %v2164 = vor.u32 %v2163, %v2159
      %v2165 = vrot.slane %v2164, 4
      %v2167 = vshll.u32 %v2038, 16
      %v2169 = vrot.slane %v2167, 5
      %v2170 = vsel %vm226, %v2165, %v2169
      %v2172 = vshrl.u32 %v2039, 16
      %v2174 = vrot.slane %v2172, 4
      %v2175 = vshll.u32 %v2039, 16
      %v2177 = vrot.slane %v2175, 5
      %v2178 = vor.u32 %v2174, %v2177
      %v2179 = vrot.slane %v2178, 4
      %v2181 = vshll.u32 %v2040, 16
      %v2183 = vrot.slane %v2181, 5
      %v2184 = vsel %vm226, %v2179, %v2183
      %v2185 = vshrl.u32 %v2040, 16
      %v2187 = vrot.slane %v2185, 4
      %v2188 = vor.u32 %v2187, %v2183
      %v2189 = vrot.slane %v2188, 4
      %v2191 = vshll.u32 %v2041, 16
      %v2193 = vrot.slane %v2191, 5
      %v2194 = vsel %vm226, %v2189, %v2193
      %v2196 = vshrl.u32 %v2042, 16
      %v2198 = vrot.slane %v2196, 4
      %v2199 = vshll.u32 %v2042, 16
      %v2201 = vrot.slane %v2199, 5
      %v2202 = vor.u32 %v2198, %v2201
      %v2203 = vrot.slane %v2202, 4
      %v2205 = vshll.u32 %v2043, 16
      %v2207 = vrot.slane %v2205, 5
      %v2208 = vsel %vm226, %v2203, %v2207
      %v2209 = vshrl.u32 %v2043, 16
      %v2211 = vrot.slane %v2209, 4
      %v2212 = vor.u32 %v2211, %v2207
      %v2213 = vrot.slane %v2212, 4
      %v2215 = vshll.u32 %v2044, 16
      %v2217 = vrot.slane %v2215, 5
      %v2218 = vsel %vm226, %v2213, %v2217
      %v2220 = vshrl.u32 %v2045, 16
      %v2222 = vrot.slane %v2220, 4
      %v2223 = vshll.u32 %v2045, 16
      %v2225 = vrot.slane %v2223, 5
      %v2226 = vor.u32 %v2222, %v2225
      %v2227 = vrot.slane %v2226, 4
      %v2229 = vshll.u32 %v2046, 16
      %v2231 = vrot.slane %v2229, 5
      %v2232 = vsel %vm226, %v2227, %v2231
      %v2233 = vshrl.u32 %v2046, 16
      %v2235 = vrot.slane %v2233, 4
      %v2236 = vor.u32 %v2235, %v2231
      %v2237 = vrot.slane %v2236, 4
      %v2239 = vshll.u32 %v2047, 16
      %v2241 = vrot.slane %v2239, 5
      %v2242 = vsel %vm226, %v2237, %v2241
      %v2244 = vshrl.u32 %v2048, 16
      %v2246 = vrot.slane %v2244, 4
      %v2247 = vshll.u32 %v2048, 16
      %v2249 = vrot.slane %v2247, 5
      %v2250 = vor.u32 %v2246, %v2249
      %v2251 = vrot.slane %v2250, 4
      %v2253 = vshll.u32 %v2049, 16
      %v2255 = vrot.slane %v2253, 5
      %v2256 = vsel %vm226, %v2251, %v2255
      %v2257 = vshrl.u32 %v2049, 16
      %v2259 = vrot.slane %v2257, 4
      %v2260 = vor.u32 %v2259, %v2255
      %v2261 = vrot.slane %v2260, 4
      %v2263 = vshll.u32 %v2050, 16
      %v2265 = vrot.slane %v2263, 5
      %v2266 = vsel %vm226, %v2261, %v2265
      %v2268 = vshrl.u32 %v2051, 16
      %v2270 = vrot.slane %v2268, 4
      %v2271 = vshll.u32 %v2051, 16
      %v2273 = vrot.slane %v2271, 5
      %v2274 = vor.u32 %v2270, %v2273
      %v2275 = vrot.slane %v2274, 4
      %v2277 = vshll.u32 %v2052, 16
      %v2279 = vrot.slane %v2277, 5
      %v2280 = vsel %vm226, %v2275, %v2279
      %v2281 = vshrl.u32 %v2052, 16
      %v2283 = vrot.slane %v2281, 4
      %v2284 = vor.u32 %v2283, %v2279
      %v2285 = vrot.slane %v2284, 4
      %v2287 = vshll.u32 %v2053, 16
      %v2289 = vrot.slane %v2287, 5
      %v2290 = vsel %vm226, %v2285, %v2289
      %v2292 = vshrl.u32 %v2054, 16
      %v2294 = vrot.slane %v2292, 4
      %v2295 = vshll.u32 %v2054, 16
      %v2297 = vrot.slane %v2295, 5
      %v2298 = vor.u32 %v2294, %v2297
      %v2299 = vrot.slane %v2298, 4
      %v2301 = vshll.u32 %v2055, 16
      %v2303 = vrot.slane %v2301, 5
      %v2304 = vsel %vm226, %v2299, %v2303
      %v2305 = vshrl.u32 %v2055, 16
      %v2307 = vrot.slane %v2305, 4
      %v2308 = vor.u32 %v2307, %v2303
      %v2309 = vrot.slane %v2308, 4
      %v2311 = vshll.u32 %v2056, 16
      %v2313 = vrot.slane %v2311, 5
      %v2314 = vsel %vm226, %v2309, %v2313
      %v2316 = vshrl.u32 %v2057, 16
      %v2318 = vrot.slane %v2316, 4
      %v2319 = vshll.u32 %v2057, 16
      %v2321 = vrot.slane %v2319, 5
      %v2322 = vor.u32 %v2318, %v2321
      %v2323 = vrot.slane %v2322, 4
      %v2325 = vshll.u32 %v2058, 16
      %v2327 = vrot.slane %v2325, 5
      %v2328 = vsel %vm226, %v2323, %v2327
      %v2329 = vshrl.u32 %v2058, 16
      %v2331 = vrot.slane %v2329, 4
      %v2332 = vor.u32 %v2331, %v2327
      %v2333 = vrot.slane %v2332, 4
      %v2335 = vshll.u32 %v2059, 16
      %v2337 = vrot.slane %v2335, 5
      %v2338 = vsel %vm226, %v2333, %v2337
      %v2340 = vshrl.u32 %v2060, 16
      %v2342 = vrot.slane %v2340, 4
      %v2343 = vshll.u32 %v2060, 16
      %v2345 = vrot.slane %v2343, 5
      %v2346 = vor.u32 %v2342, %v2345
      %v2347 = vrot.slane %v2346, 4
      %v2349 = vshll.u32 %v2061, 16
      %v2351 = vrot.slane %v2349, 5
      %v2352 = vsel %vm226, %v2347, %v2351
      %v2353 = vshrl.u32 %v2061, 16
      %v2355 = vrot.slane %v2353, 4
      %v2356 = vor.u32 %v2355, %v2351
      %v2357 = vrot.slane %v2356, 4
      %v2359 = vshll.u32 %v2062, 16
      %v2361 = vrot.slane %v2359, 5
      %v2362 = vsel %vm226, %v2357, %v2361
      %v2364 = vshrl.u32 %v2063, 16
      %v2366 = vrot.slane %v2364, 4
      %v2367 = vshll.u32 %v2063, 16
      %v2369 = vrot.slane %v2367, 5
      %v2370 = vor.u32 %v2366, %v2369
      %v2371 = vrot.slane %v2370, 4
      %v2373 = vshll.u32 %v2064, 16
      %v2375 = vrot.slane %v2373, 5
      %v2376 = vsel %vm226, %v2371, %v2375
      %v2377 = vshrl.u32 %v2064, 16
      %v2379 = vrot.slane %v2377, 4
      %v2380 = vor.u32 %v2379, %v2375
      %v2381 = vrot.slane %v2380, 4
      %v2383 = vshll.u32 %v2065, 16
      %v2385 = vrot.slane %v2383, 5
      %v2386 = vsel %vm226, %v2381, %v2385
      %v2388 = vshrl.u32 %v2066, 16
      %v2390 = vrot.slane %v2388, 4
      %v2391 = vshll.u32 %v2066, 16
      %v2393 = vrot.slane %v2391, 5
      %v2394 = vor.u32 %v2390, %v2393
      %v2395 = vrot.slane %v2394, 4
      %v2397 = vshll.u32 %v2067, 16
      %v2399 = vrot.slane %v2397, 5
      %v2400 = vsel %vm226, %v2395, %v2399
      %v2401 = vshrl.u32 %v2067, 16
      %v2403 = vrot.slane %v2401, 4
      %v2404 = vor.u32 %v2403, %v2399
      %v2405 = vrot.slane %v2404, 4
      %v2407 = vshll.u32 %v2068, 16
      %v2409 = vrot.slane %v2407, 5
      %v2410 = vsel %vm226, %v2405, %v2409
      %v2412 = vshrl.u32 %v2069, 16
      %v2414 = vrot.slane %v2412, 4
      %v2415 = vshll.u32 %v2069, 16
      %v2417 = vrot.slane %v2415, 5
      %v2418 = vor.u32 %v2414, %v2417
      %v2419 = vrot.slane %v2418, 4
      %v2421 = vshll.u32 %v2070, 16
      %v2423 = vrot.slane %v2421, 5
      %v2424 = vsel %vm226, %v2419, %v2423
      %v2425 = vshrl.u32 %v2070, 16
      %v2427 = vrot.slane %v2425, 4
      %v2428 = vor.u32 %v2427, %v2423
      %v2429 = vrot.slane %v2428, 4
      %v2431 = vshll.u32 %v2071, 16
      %v2433 = vrot.slane %v2431, 5
      %v2434 = vsel %vm226, %v2429, %v2433
      %v2436 = vshrl.u32 %v2072, 16
      %v2438 = vrot.slane %v2436, 4
      %v2439 = vshll.u32 %v2072, 16
      %v2441 = vrot.slane %v2439, 5
      %v2442 = vor.u32 %v2438, %v2441
      %v2443 = vrot.slane %v2442, 4
      %v2445 = vshll.u32 %v2073, 16
      %v2447 = vrot.slane %v2445, 5
      %v2448 = vsel %vm226, %v2443, %v2447
      %v2449 = vshrl.u32 %v2073, 16
      %v2451 = vrot.slane %v2449, 4
      %v2452 = vor.u32 %v2451, %v2447
      %v2453 = vrot.slane %v2452, 4
      %v2455 = vshll.u32 %v2074, 16
      %v2457 = vrot.slane %v2455, 5
      %v2458 = vsel %vm226, %v2453, %v2457
      %s2459 = scalar_lea.vmem %s1, 64
      %v2460 = vld [vmem:[%s2459] sm:$0xf]
      %v2461 = vld [vmem:[%s2459 + $0x4] sm:$0xf]
      %v2462 = vld [vmem:[%s2459 + $0x8] sm:$0xf]
      %v2463 = vld [vmem:[%s2459 + $0xc] sm:$0xf]
      %v2464 = vunpack.c.l.b16 %v2088
      %v2465 = vunpack.c.l.b16 %v2098
      %v2466 = vunpack.c.l.b16 %v2112
      %v2467 = vunpack.c.l.b16 %v2122
      %v2468 = vunpack.c.l.b16 %v2136
      %v2469 = vunpack.c.l.b16 %v2146
      %v2470 = vunpack.c.l.b16 %v2160
      %v2471 = vunpack.c.l.b16 %v2170
      %v2472 = vunpack.c.l.b16 %v2184
      %v2473 = vunpack.c.l.b16 %v2194
      %v2474 = vunpack.c.l.b16 %v2208
      %v2475 = vunpack.c.l.b16 %v2218
      %v2476 = vunpack.c.l.b16 %v2232
      %v2477 = vunpack.c.l.b16 %v2242
      %v2478 = vunpack.c.l.b16 %v2256
      %v2479 = vunpack.c.l.b16 %v2266
      %v2480 = vunpack.c.l.b16 %v2280
      %v2481 = vunpack.c.l.b16 %v2290
      %v2482 = vunpack.c.l.b16 %v2304
      %v2483 = vunpack.c.l.b16 %v2314
      %v2484 = vunpack.c.l.b16 %v2328
      %v2485 = vunpack.c.l.b16 %v2338
      %v2486 = vunpack.c.l.b16 %v2352
      %v2487 = vunpack.c.l.b16 %v2362
      %v2488 = vunpack.c.l.b16 %v2376
      %v2489 = vunpack.c.l.b16 %v2386
      %v2490 = vunpack.c.l.b16 %v2400
      %v2491 = vunpack.c.l.b16 %v2410
      %v2492 = vunpack.c.l.b16 %v2424
      %v2493 = vunpack.c.l.b16 %v2434
      %v2494 = vunpack.c.l.b16 %v2448
      %v2495 = vunpack.c.l.b16 %v2458
      %v2496 = vpack.c.b16 %v2465, %v2464
      %v2497 = vpack.c.b16 %v2467, %v2466
      %v2498 = vpack.c.b16 %v2469, %v2468
      %v2499 = vpack.c.b16 %v2471, %v2470
      %v2500 = vpack.c.b16 %v2473, %v2472
      %v2501 = vpack.c.b16 %v2475, %v2474
      %v2502 = vpack.c.b16 %v2477, %v2476
      %v2503 = vpack.c.b16 %v2479, %v2478
      %v2504 = vpack.c.b16 %v2481, %v2480
      %v2505 = vpack.c.b16 %v2483, %v2482
      %v2506 = vpack.c.b16 %v2485, %v2484
      %v2507 = vpack.c.b16 %v2487, %v2486
      %v2508 = vpack.c.b16 %v2489, %v2488
      %v2509 = vpack.c.b16 %v2491, %v2490
      %v2510 = vpack.c.b16 %v2493, %v2492
      %v2511 = vpack.c.b16 %v2495, %v2494
      %v2516 = vunpack.c.l.b16 %v2460
      %v2517 = vunpack.c.l.b16 %v2461
      %v2518 = vunpack.c.l.b16 %v2462
      %v2519 = vunpack.c.l.b16 %v2463
      %v2520 = vpack.c.b16 %v2517, %v2516
      %v2521 = vpack.c.b16 %v2519, %v2518
      %v2525 = vsel %vm676, %v2496, 0
      %v2528 = vsel %vm676, %v2497, 0
      %v2531 = vsel %vm676, %v2498, 0
      %v2534 = vsel %vm676, %v2499, 0
      %v2537 = vsel %vm676, %v2500, 0
      %v2540 = vsel %vm676, %v2501, 0
      %v2543 = vsel %vm676, %v2502, 0
      %v2546 = vsel %vm676, %v2503, 0
      %v2549 = vsel %vm676, %v2504, 0
      %v2552 = vsel %vm676, %v2505, 0
      %v2555 = vsel %vm676, %v2506, 0
      %v2558 = vsel %vm676, %v2507, 0
      %v2561 = vsel %vm676, %v2508, 0
      %v2564 = vsel %vm676, %v2509, 0
      %v2567 = vsel %vm676, %v2510, 0
      %v2570 = vsel %vm676, %v2511, 0
      %2572 = vmatprep.subr.bf16.mxu0 0
      %2573 = vmatpush1.bf16.msra.mxu0 %v2520
      %2574 = vmatprep.subr.bf16.mxu0 0
      %2575 = vmatpush1.bf16.msra.mxu0 %v2521
      %2576 = vmatprep.subr.bf16.mxu0 0
      %2577 = vmatpush1.bf16.msra.mxu0 0
      %2578 = vmatprep.subr.bf16.mxu0 0
      %2579 = vmatpush1.bf16.msra.mxu0 0
      %2580 = vmatprep.subr.bf16.mxu0 0
      %2581 = vmatpush1.bf16.msra.mxu0 0
      %2582 = vmatprep.subr.bf16.mxu0 0
      %2583 = vmatpush1.bf16.msra.mxu0 0
      %2584 = vmatprep.subr.bf16.mxu0 0
      %2585 = vmatpush1.bf16.msra.mxu0 0
      %2586 = vmatprep.subr.bf16.mxu0 0
      %2587 = vmatpush1.bf16.msra.mxu0 0
      %2588 = vmatprep.subr.bf16.mxu0 0
      %2589 = vmatpush1.bf16.msra.mxu0 0
      %2590 = vmatprep.subr.bf16.mxu0 0
      %2591 = vmatpush1.bf16.msra.mxu0 0
      %2592 = vmatprep.subr.bf16.mxu0 0
      %2593 = vmatpush1.bf16.msra.mxu0 0
      %2594 = vmatprep.subr.bf16.mxu0 0
      %2595 = vmatpush1.bf16.msra.mxu0 0
      %2596 = vmatprep.subr.bf16.mxu0 0
      %2597 = vmatpush1.bf16.msra.mxu0 0
      %2598 = vmatprep.subr.bf16.mxu0 0
      %2599 = vmatpush1.bf16.msra.mxu0 0
      %2600 = vmatprep.subr.bf16.mxu0 0
      %2601 = vmatpush1.bf16.msra.mxu0 0
      %2602 = vmatprep.subr.bf16.mxu0 0
      %2603 = vmatpush1.bf16.msra.mxu0 0
      %2604 = vmatprep.mubr.bf16.mxu0 0
      %2605 = vmatmul.mubr.bf16.gmra.mrb[0].mxu0 %v2525
      %v2606 = vpop.f32.mrb[0].mxu0
      %v2607 = vadd.f32 0.0, %v2606
      %v2608 = vpop.f32.mrb[0].mxu0
      %v2609 = vpop.f32.mrb[0].mxu0
      %v2610 = vadd.f32 0.0, %v2609
      %v2611 = vpop.f32.mrb[0].mxu0
      %2612 = vmatprep.mubr.bf16.mxu0 0
      %2613 = vmatmul.mubr.bf16.gmra.mrb[0].mxu0 %v2528
      %v2614 = vpop.f32.mrb[0].mxu0
      %v2615 = vadd.f32 0.0, %v2614
      %v2616 = vpop.f32.mrb[0].mxu0
      %v2617 = vpop.f32.mrb[0].mxu0
      %v2618 = vadd.f32 0.0, %v2617
      %v2619 = vpop.f32.mrb[0].mxu0
      %2620 = vmatprep.mubr.bf16.mxu0 0
      %2621 = vmatmul.mubr.bf16.gmra.mrb[0].mxu0 %v2531
      %v2622 = vpop.f32.mrb[0].mxu0
      %v2623 = vadd.f32 0.0, %v2622
      %v2624 = vpop.f32.mrb[0].mxu0
      %v2625 = vpop.f32.mrb[0].mxu0
      %v2626 = vadd.f32 0.0, %v2625
      %v2627 = vpop.f32.mrb[0].mxu0
      %2628 = vmatprep.mubr.bf16.mxu0 0
      %2629 = vmatmul.mubr.bf16.gmra.mrb[0].mxu0 %v2534
      %v2630 = vpop.f32.mrb[0].mxu0
      %v2631 = vadd.f32 0.0, %v2630
      %v2632 = vpop.f32.mrb[0].mxu0
      %v2633 = vpop.f32.mrb[0].mxu0
      %v2634 = vadd.f32 0.0, %v2633
      %v2635 = vpop.f32.mrb[0].mxu0
      %2636 = vmatprep.mubr.bf16.mxu0 0
      %2637 = vmatmul.mubr.bf16.gmra.mrb[0].mxu0 %v2537
      %v2638 = vpop.f32.mrb[0].mxu0
      %v2639 = vadd.f32 0.0, %v2638
      %v2640 = vpop.f32.mrb[0].mxu0
      %v2641 = vpop.f32.mrb[0].mxu0
      %v2642 = vadd.f32 0.0, %v2641
      %v2643 = vpop.f32.mrb[0].mxu0
      %2644 = vmatprep.mubr.bf16.mxu0 0
      %2645 = vmatmul.mubr.bf16.gmra.mrb[0].mxu0 %v2540
      %v2646 = vpop.f32.mrb[0].mxu0
      %v2647 = vadd.f32 0.0, %v2646
      %v2648 = vpop.f32.mrb[0].mxu0
      %v2649 = vpop.f32.mrb[0].mxu0
      %v2650 = vadd.f32 0.0, %v2649
      %v2651 = vpop.f32.mrb[0].mxu0
      %2652 = vmatprep.mubr.bf16.mxu0 0
      %2653 = vmatmul.mubr.bf16.gmra.mrb[0].mxu0 %v2543
      %v2654 = vpop.f32.mrb[0].mxu0
      %v2655 = vadd.f32 0.0, %v2654
      %v2656 = vpop.f32.mrb[0].mxu0
      %v2657 = vpop.f32.mrb[0].mxu0
      %v2658 = vadd.f32 0.0, %v2657
      %v2659 = vpop.f32.mrb[0].mxu0
      %2660 = vmatprep.mubr.bf16.mxu0 0
      %2661 = vmatmul.mubr.bf16.gmra.mrb[0].mxu0 %v2546
      %v2662 = vpop.f32.mrb[0].mxu0
      %v2663 = vadd.f32 0.0, %v2662
      %v2664 = vpop.f32.mrb[0].mxu0
      %v2665 = vpop.f32.mrb[0].mxu0
      %v2666 = vadd.f32 0.0, %v2665
      %v2667 = vpop.f32.mrb[0].mxu0
      %2668 = vmatprep.mubr.bf16.mxu0 0
      %2669 = vmatmul.mubr.bf16.gmra.mrb[0].mxu0 %v2549
      %v2670 = vpop.f32.mrb[0].mxu0
      %v2671 = vadd.f32 0.0, %v2670
      %v2672 = vpop.f32.mrb[0].mxu0
      %v2673 = vpop.f32.mrb[0].mxu0
      %v2674 = vadd.f32 0.0, %v2673
      %v2675 = vpop.f32.mrb[0].mxu0
      %2676 = vmatprep.mubr.bf16.mxu0 0
      %2677 = vmatmul.mubr.bf16.gmra.mrb[0].mxu0 %v2552
      %v2678 = vpop.f32.mrb[0].mxu0
      %v2679 = vadd.f32 0.0, %v2678
      %v2680 = vpop.f32.mrb[0].mxu0
      %v2681 = vpop.f32.mrb[0].mxu0
      %v2682 = vadd.f32 0.0, %v2681
      %v2683 = vpop.f32.mrb[0].mxu0
      %2684 = vmatprep.mubr.bf16.mxu0 0
      %2685 = vmatmul.mubr.bf16.gmra.mrb[0].mxu0 %v2555
      %v2686 = vpop.f32.mrb[0].mxu0
      %v2687 = vadd.f32 0.0, %v2686
      %v2688 = vpop.f32.mrb[0].mxu0
      %v2689 = vpop.f32.mrb[0].mxu0
      %v2690 = vadd.f32 0.0, %v2689
      %v2691 = vpop.f32.mrb[0].mxu0
      %2692 = vmatprep.mubr.bf16.mxu0 0
      %2693 = vmatmul.mubr.bf16.gmra.mrb[0].mxu0 %v2558
      %v2694 = vpop.f32.mrb[0].mxu0
      %v2695 = vadd.f32 0.0, %v2694
      %v2696 = vpop.f32.mrb[0].mxu0
      %v2697 = vpop.f32.mrb[0].mxu0
      %v2698 = vadd.f32 0.0, %v2697
      %v2699 = vpop.f32.mrb[0].mxu0
      %2700 = vmatprep.mubr.bf16.mxu0 0
      %2701 = vmatmul.mubr.bf16.gmra.mrb[0].mxu0 %v2561
      %v2702 = vpop.f32.mrb[0].mxu0
      %v2703 = vadd.f32 0.0, %v2702
      %v2704 = vpop.f32.mrb[0].mxu0
      %v2705 = vpop.f32.mrb[0].mxu0
      %v2706 = vadd.f32 0.0, %v2705
      %v2707 = vpop.f32.mrb[0].mxu0
      %2708 = vmatprep.mubr.bf16.mxu0 0
      %2709 = vmatmul.mubr.bf16.gmra.mrb[0].mxu0 %v2564
      %v2710 = vpop.f32.mrb[0].mxu0
      %v2711 = vadd.f32 0.0, %v2710
      %v2712 = vpop.f32.mrb[0].mxu0
      %v2713 = vpop.f32.mrb[0].mxu0
      %v2714 = vadd.f32 0.0, %v2713
      %v2715 = vpop.f32.mrb[0].mxu0
      %2716 = vmatprep.mubr.bf16.mxu0 0
      %2717 = vmatmul.mubr.bf16.gmra.mrb[0].mxu0 %v2567
      %v2718 = vpop.f32.mrb[0].mxu0
      %v2719 = vadd.f32 0.0, %v2718
      %v2720 = vpop.f32.mrb[0].mxu0
      %v2721 = vpop.f32.mrb[0].mxu0
      %v2722 = vadd.f32 0.0, %v2721
      %v2723 = vpop.f32.mrb[0].mxu0
      %2724 = vmatprep.mubr.bf16.mxu0 0
      %2725 = vmatmul.mubr.bf16.gmra.mrb[0].mxu0 %v2570
      %v2726 = vpop.f32.mrb[0].mxu0
      %v2727 = vadd.f32 0.0, %v2726
      %v2728 = vpop.f32.mrb[0].mxu0
      %v2729 = vpop.f32.mrb[0].mxu0
      %v2730 = vadd.f32 0.0, %v2729
      %v2731 = vpop.f32.mrb[0].mxu0
      %2732 = vdwg.mxu0
      %v2733 = vadd.f32 %v1995, %v2607
      %v2734 = vadd.f32 %v1996, %v2610
      %v2735 = vadd.f32 %v1997, %v2615
      %v2736 = vadd.f32 %v1998, %v2618
      %v2737 = vadd.f32 %v1999, %v2623
      %v2738 = vadd.f32 %v2000, %v2626
      %v2739 = vadd.f32 %v2001, %v2631
      %v2740 = vadd.f32 %v2002, %v2634
      %v2741 = vadd.f32 %v2003, %v2639
      %v2742 = vadd.f32 %v2004, %v2642
      %v2743 = vadd.f32 %v2005, %v2647
      %v2744 = vadd.f32 %v2006, %v2650
      %v2745 = vadd.f32 %v2007, %v2655
      %v2746 = vadd.f32 %v2008, %v2658
      %v2747 = vadd.f32 %v2009, %v2663
      %v2748 = vadd.f32 %v2010, %v2666
      %v2749 = vadd.f32 %v2011, %v2671
      %v2750 = vadd.f32 %v2012, %v2674
      %v2751 = vadd.f32 %v2013, %v2679
      %v2752 = vadd.f32 %v2014, %v2682
      %v2753 = vadd.f32 %v2015, %v2687
      %v2754 = vadd.f32 %v2016, %v2690
      %v2755 = vadd.f32 %v2017, %v2695
      %v2756 = vadd.f32 %v2018, %v2698
      %v2757 = vadd.f32 %v2019, %v2703
      %v2758 = vadd.f32 %v2020, %v2706
      %v2759 = vadd.f32 %v2021, %v2711
      %v2760 = vadd.f32 %v2022, %v2714
      %v2761 = vadd.f32 %v2023, %v2719
      %v2762 = vadd.f32 %v2024, %v2722
      %v2763 = vadd.f32 %v2025, %v2727
      %v2764 = vadd.f32 %v2026, %v2730
      %v2765 = vld [vmem:[%s1656] sm:$0xe]
      %v2766 = vld [vmem:[%s1656 + $0xc] sm:$0xe]
      %v2767 = vld [vmem:[%s1656 + $0x18] sm:$0xe]
      %v2768 = vld [vmem:[%s1656 + $0x24] sm:$0xe]
      %v2769 = vld [vmem:[%s1656 + $0x30] sm:$0xe]
      %v2770 = vld [vmem:[%s1656 + $0x3c] sm:$0xe]
      %v2771 = vld [vmem:[%s1656 + $0x48] sm:$0xe]
      %v2772 = vld [vmem:[%s1656 + $0x54] sm:$0xe]
      %v2773 = vld [vmem:[%s1656 + $0x60] sm:$0xe]
      %v2774 = vld [vmem:[%s1656 + $0x6c] sm:$0xe]
      %v2775 = vld [vmem:[%s1656 + $0x78] sm:$0xe]
      %v2776 = vld [vmem:[%s1656 + $0x84] sm:$0xe]
      %v2777 = vld [vmem:[%s1656 + $0x90] sm:$0xe]
      %v2778 = vld [vmem:[%s1656 + $0x9c] sm:$0xe]
      %v2779 = vld [vmem:[%s1656 + $0xa8] sm:$0xe]
      %v2780 = vld [vmem:[%s1656 + $0xb4] sm:$0xe]
      %v2829 = vrot.slane %v2765, 5
      %v2830 = vrot.slane %v2829, 4
      %v2831 = vrot.slane %v2028, 5
      %v2832 = vsel %vm1237, %v2830, %v2831
      %v2833 = vrot.slane %v2831, 4
      %v2834 = vrot.slane %v2029, 5
      %v2835 = vsel %vm1237, %v2833, %v2834
      %v2836 = vrot.slane %v2766, 5
      %v2837 = vrot.slane %v2836, 4
      %v2838 = vrot.slane %v2031, 5
      %v2839 = vsel %vm1237, %v2837, %v2838
      %v2840 = vrot.slane %v2838, 4
      %v2841 = vrot.slane %v2032, 5
      %v2842 = vsel %vm1237, %v2840, %v2841
      %v2843 = vrot.slane %v2767, 5
      %v2844 = vrot.slane %v2843, 4
      %v2845 = vrot.slane %v2034, 5
      %v2846 = vsel %vm1237, %v2844, %v2845
      %v2847 = vrot.slane %v2845, 4
      %v2848 = vrot.slane %v2035, 5
      %v2849 = vsel %vm1237, %v2847, %v2848
      %v2850 = vrot.slane %v2768, 5
      %v2851 = vrot.slane %v2850, 4
      %v2852 = vrot.slane %v2037, 5
      %v2853 = vsel %vm1237, %v2851, %v2852
      %v2854 = vrot.slane %v2852, 4
      %v2855 = vrot.slane %v2038, 5
      %v2856 = vsel %vm1237, %v2854, %v2855
      %v2857 = vrot.slane %v2769, 5
      %v2858 = vrot.slane %v2857, 4
      %v2859 = vrot.slane %v2040, 5
      %v2860 = vsel %vm1237, %v2858, %v2859
      %v2861 = vrot.slane %v2859, 4
      %v2862 = vrot.slane %v2041, 5
      %v2863 = vsel %vm1237, %v2861, %v2862
      %v2864 = vrot.slane %v2770, 5
      %v2865 = vrot.slane %v2864, 4
      %v2866 = vrot.slane %v2043, 5
      %v2867 = vsel %vm1237, %v2865, %v2866
      %v2868 = vrot.slane %v2866, 4
      %v2869 = vrot.slane %v2044, 5
      %v2870 = vsel %vm1237, %v2868, %v2869
      %v2871 = vrot.slane %v2771, 5
      %v2872 = vrot.slane %v2871, 4
      %v2873 = vrot.slane %v2046, 5
      %v2874 = vsel %vm1237, %v2872, %v2873
      %v2875 = vrot.slane %v2873, 4
      %v2876 = vrot.slane %v2047, 5
      %v2877 = vsel %vm1237, %v2875, %v2876
      %v2878 = vrot.slane %v2772, 5
      %v2879 = vrot.slane %v2878, 4
      %v2880 = vrot.slane %v2049, 5
      %v2881 = vsel %vm1237, %v2879, %v2880
      %v2882 = vrot.slane %v2880, 4
      %v2883 = vrot.slane %v2050, 5
      %v2884 = vsel %vm1237, %v2882, %v2883
      %v2885 = vrot.slane %v2773, 5
      %v2886 = vrot.slane %v2885, 4
      %v2887 = vrot.slane %v2052, 5
      %v2888 = vsel %vm1237, %v2886, %v2887
      %v2889 = vrot.slane %v2887, 4
      %v2890 = vrot.slane %v2053, 5
      %v2891 = vsel %vm1237, %v2889, %v2890
      %v2892 = vrot.slane %v2774, 5
      %v2893 = vrot.slane %v2892, 4
      %v2894 = vrot.slane %v2055, 5
      %v2895 = vsel %vm1237, %v2893, %v2894
      %v2896 = vrot.slane %v2894, 4
      %v2897 = vrot.slane %v2056, 5
      %v2898 = vsel %vm1237, %v2896, %v2897
      %v2899 = vrot.slane %v2775, 5
      %v2900 = vrot.slane %v2899, 4
      %v2901 = vrot.slane %v2058, 5
      %v2902 = vsel %vm1237, %v2900, %v2901
      %v2903 = vrot.slane %v2901, 4
      %v2904 = vrot.slane %v2059, 5
      %v2905 = vsel %vm1237, %v2903, %v2904
      %v2906 = vrot.slane %v2776, 5
      %v2907 = vrot.slane %v2906, 4
      %v2908 = vrot.slane %v2061, 5
      %v2909 = vsel %vm1237, %v2907, %v2908
      %v2910 = vrot.slane %v2908, 4
      %v2911 = vrot.slane %v2062, 5
      %v2912 = vsel %vm1237, %v2910, %v2911
      %v2913 = vrot.slane %v2777, 5
      %v2914 = vrot.slane %v2913, 4
      %v2915 = vrot.slane %v2064, 5
      %v2916 = vsel %vm1237, %v2914, %v2915
      %v2917 = vrot.slane %v2915, 4
      %v2918 = vrot.slane %v2065, 5
      %v2919 = vsel %vm1237, %v2917, %v2918
      %v2920 = vrot.slane %v2778, 5
      %v2921 = vrot.slane %v2920, 4
      %v2922 = vrot.slane %v2067, 5
      %v2923 = vsel %vm1237, %v2921, %v2922
      %v2924 = vrot.slane %v2922, 4
      %v2925 = vrot.slane %v2068, 5
      %v2926 = vsel %vm1237, %v2924, %v2925
      %v2927 = vrot.slane %v2779, 5
      %v2928 = vrot.slane %v2927, 4
      %v2929 = vrot.slane %v2070, 5
      %v2930 = vsel %vm1237, %v2928, %v2929
      %v2931 = vrot.slane %v2929, 4
      %v2932 = vrot.slane %v2071, 5
      %v2933 = vsel %vm1237, %v2931, %v2932
      %v2934 = vrot.slane %v2780, 5
      %v2935 = vrot.slane %v2934, 4
      %v2936 = vrot.slane %v2073, 5
      %v2937 = vsel %vm1237, %v2935, %v2936
      %v2938 = vrot.slane %v2936, 4
      %v2939 = vrot.slane %v2074, 5
      %v2940 = vsel %vm1237, %v2938, %v2939
      %s2941 = scalar_lea.vmem %s1, 80
      %v2942 = vld [vmem:[%s2941] sm:$0xf]
      %v2943 = vld [vmem:[%s2941 + $0x4] sm:$0xf]
      %v2944 = vld [vmem:[%s2941 + $0x8] sm:$0xf]
      %v2945 = vld [vmem:[%s2941 + $0xc] sm:$0xf]
      %v2946 = vunpack.c.l.b16 %v2832
      %v2947 = vunpack.c.l.b16 %v2835
      %v2948 = vunpack.c.l.b16 %v2839
      %v2949 = vunpack.c.l.b16 %v2842
      %v2950 = vunpack.c.l.b16 %v2846
      %v2951 = vunpack.c.l.b16 %v2849
      %v2952 = vunpack.c.l.b16 %v2853
      %v2953 = vunpack.c.l.b16 %v2856
      %v2954 = vunpack.c.l.b16 %v2860
      %v2955 = vunpack.c.l.b16 %v2863
      %v2956 = vunpack.c.l.b16 %v2867
      %v2957 = vunpack.c.l.b16 %v2870
      %v2958 = vunpack.c.l.b16 %v2874
      %v2959 = vunpack.c.l.b16 %v2877
      %v2960 = vunpack.c.l.b16 %v2881
      %v2961 = vunpack.c.l.b16 %v2884
      %v2962 = vunpack.c.l.b16 %v2888
      %v2963 = vunpack.c.l.b16 %v2891
      %v2964 = vunpack.c.l.b16 %v2895
      %v2965 = vunpack.c.l.b16 %v2898
      %v2966 = vunpack.c.l.b16 %v2902
      %v2967 = vunpack.c.l.b16 %v2905
      %v2968 = vunpack.c.l.b16 %v2909
      %v2969 = vunpack.c.l.b16 %v2912
      %v2970 = vunpack.c.l.b16 %v2916
      %v2971 = vunpack.c.l.b16 %v2919
      %v2972 = vunpack.c.l.b16 %v2923
      %v2973 = vunpack.c.l.b16 %v2926
      %v2974 = vunpack.c.l.b16 %v2930
      %v2975 = vunpack.c.l.b16 %v2933
      %v2976 = vunpack.c.l.b16 %v2937
      %v2977 = vunpack.c.l.b16 %v2940
      %v2978 = vpack.c.b16 %v2947, %v2946
      %v2979 = vpack.c.b16 %v2949, %v2948
      %v2980 = vpack.c.b16 %v2951, %v2950
      %v2981 = vpack.c.b16 %v2953, %v2952
      %v2982 = vpack.c.b16 %v2955, %v2954
      %v2983 = vpack.c.b16 %v2957, %v2956
      %v2984 = vpack.c.b16 %v2959, %v2958
      %v2985 = vpack.c.b16 %v2961, %v2960
      %v2986 = vpack.c.b16 %v2963, %v2962
      %v2987 = vpack.c.b16 %v2965, %v2964
      %v2988 = vpack.c.b16 %v2967, %v2966
      %v2989 = vpack.c.b16 %v2969, %v2968
      %v2990 = vpack.c.b16 %v2971, %v2970
      %v2991 = vpack.c.b16 %v2973, %v2972
      %v2992 = vpack.c.b16 %v2975, %v2974
      %v2993 = vpack.c.b16 %v2977, %v2976
      %v2998 = vunpack.c.l.b16 %v2942
      %v2999 = vunpack.c.l.b16 %v2943
      %v3000 = vunpack.c.l.b16 %v2944
      %v3001 = vunpack.c.l.b16 %v2945
      %v3002 = vpack.c.b16 %v2999, %v2998
      %v3003 = vpack.c.b16 %v3001, %v3000
      %v3007 = vsel %vm676, %v2978, 0
      %v3010 = vsel %vm676, %v2979, 0
      %v3013 = vsel %vm676, %v2980, 0
      %v3016 = vsel %vm676, %v2981, 0
      %v3019 = vsel %vm676, %v2982, 0
      %v3022 = vsel %vm676, %v2983, 0
      %v3025 = vsel %vm676, %v2984, 0
      %v3028 = vsel %vm676, %v2985, 0
      %v3031 = vsel %vm676, %v2986, 0
      %v3034 = vsel %vm676, %v2987, 0
      %v3037 = vsel %vm676, %v2988, 0
      %v3040 = vsel %vm676, %v2989, 0
      %v3043 = vsel %vm676, %v2990, 0
      %v3046 = vsel %vm676, %v2991, 0
      %v3049 = vsel %vm676, %v2992, 0
      %v3052 = vsel %vm676, %v2993, 0
      %3054 = vmatprep.subr.bf16.mxu0 0
      %3055 = vmatpush1.bf16.msra.mxu0 %v3002
      %3056 = vmatprep.subr.bf16.mxu0 0
      %3057 = vmatpush1.bf16.msra.mxu0 %v3003
      %3058 = vmatprep.subr.bf16.mxu0 0
      %3059 = vmatpush1.bf16.msra.mxu0 0
      %3060 = vmatprep.subr.bf16.mxu0 0
      %3061 = vmatpush1.bf16.msra.mxu0 0
      %3062 = vmatprep.subr.bf16.mxu0 0
      %3063 = vmatpush1.bf16.msra.mxu0 0
      %3064 = vmatprep.subr.bf16.mxu0 0
      %3065 = vmatpush1.bf16.msra.mxu0 0
      %3066 = vmatprep.subr.bf16.mxu0 0
      %3067 = vmatpush1.bf16.msra.mxu0 0
      %3068 = vmatprep.subr.bf16.mxu0 0
      %3069 = vmatpush1.bf16.msra.mxu0 0
      %3070 = vmatprep.subr.bf16.mxu0 0
      %3071 = vmatpush1.bf16.msra.mxu0 0
      %3072 = vmatprep.subr.bf16.mxu0 0
      %3073 = vmatpush1.bf16.msra.mxu0 0
      %3074 = vmatprep.subr.bf16.mxu0 0
      %3075 = vmatpush1.bf16.msra.mxu0 0
      %3076 = vmatprep.subr.bf16.mxu0 0
      %3077 = vmatpush1.bf16.msra.mxu0 0
      %3078 = vmatprep.subr.bf16.mxu0 0
      %3079 = vmatpush1.bf16.msra.mxu0 0
      %3080 = vmatprep.subr.bf16.mxu0 0
      %3081 = vmatpush1.bf16.msra.mxu0 0
      %3082 = vmatprep.subr.bf16.mxu0 0
      %3083 = vmatpush1.bf16.msra.mxu0 0
      %3084 = vmatprep.subr.bf16.mxu0 0
      %3085 = vmatpush1.bf16.msra.mxu0 0
      %3086 = vmatprep.mubr.bf16.mxu0 0
      %3087 = vmatmul.mubr.bf16.gmra.mrb[0].mxu0 %v3007
      %v3088 = vpop.f32.mrb[0].mxu0
      %v3089 = vadd.f32 0.0, %v3088
      %v3090 = vpop.f32.mrb[0].mxu0
      %v3091 = vpop.f32.mrb[0].mxu0
      %v3092 = vadd.f32 0.0, %v3091
      %v3093 = vpop.f32.mrb[0].mxu0
      %3094 = vmatprep.mubr.bf16.mxu0 0
      %3095 = vmatmul.mubr.bf16.gmra.mrb[0].mxu0 %v3010
      %v3096 = vpop.f32.mrb[0].mxu0
      %v3097 = vadd.f32 0.0, %v3096
      %v3098 = vpop.f32.mrb[0].mxu0
      %v3099 = vpop.f32.mrb[0].mxu0
      %v3100 = vadd.f32 0.0, %v3099
      %v3101 = vpop.f32.mrb[0].mxu0
      %3102 = vmatprep.mubr.bf16.mxu0 0
      %3103 = vmatmul.mubr.bf16.gmra.mrb[0].mxu0 %v3013
      %v3104 = vpop.f32.mrb[0].mxu0
      %v3105 = vadd.f32 0.0, %v3104
      %v3106 = vpop.f32.mrb[0].mxu0
      %v3107 = vpop.f32.mrb[0].mxu0
      %v3108 = vadd.f32 0.0, %v3107
      %v3109 = vpop.f32.mrb[0].mxu0
      %3110 = vmatprep.mubr.bf16.mxu0 0
      %3111 = vmatmul.mubr.bf16.gmra.mrb[0].mxu0 %v3016
      %v3112 = vpop.f32.mrb[0].mxu0
      %v3113 = vadd.f32 0.0, %v3112
      %v3114 = vpop.f32.mrb[0].mxu0
      %v3115 = vpop.f32.mrb[0].mxu0
      %v3116 = vadd.f32 0.0, %v3115
      %v3117 = vpop.f32.mrb[0].mxu0
      %3118 = vmatprep.mubr.bf16.mxu0 0
      %3119 = vmatmul.mubr.bf16.gmra.mrb[0].mxu0 %v3019
      %v3120 = vpop.f32.mrb[0].mxu0
      %v3121 = vadd.f32 0.0, %v3120
      %v3122 = vpop.f32.mrb[0].mxu0
      %v3123 = vpop.f32.mrb[0].mxu0
      %v3124 = vadd.f32 0.0, %v3123
      %v3125 = vpop.f32.mrb[0].mxu0
      %3126 = vmatprep.mubr.bf16.mxu0 0
      %3127 = vmatmul.mubr.bf16.gmra.mrb[0].mxu0 %v3022
      %v3128 = vpop.f32.mrb[0].mxu0
      %v3129 = vadd.f32 0.0, %v3128
      %v3130 = vpop.f32.mrb[0].mxu0
      %v3131 = vpop.f32.mrb[0].mxu0
      %v3132 = vadd.f32 0.0, %v3131
      %v3133 = vpop.f32.mrb[0].mxu0
      %3134 = vmatprep.mubr.bf16.mxu0 0
      %3135 = vmatmul.mubr.bf16.gmra.mrb[0].mxu0 %v3025
      %v3136 = vpop.f32.mrb[0].mxu0
      %v3137 = vadd.f32 0.0, %v3136
      %v3138 = vpop.f32.mrb[0].mxu0
      %v3139 = vpop.f32.mrb[0].mxu0
      %v3140 = vadd.f32 0.0, %v3139
      %v3141 = vpop.f32.mrb[0].mxu0
      %3142 = vmatprep.mubr.bf16.mxu0 0
      %3143 = vmatmul.mubr.bf16.gmra.mrb[0].mxu0 %v3028
      %v3144 = vpop.f32.mrb[0].mxu0
      %v3145 = vadd.f32 0.0, %v3144
      %v3146 = vpop.f32.mrb[0].mxu0
      %v3147 = vpop.f32.mrb[0].mxu0
      %v3148 = vadd.f32 0.0, %v3147
      %v3149 = vpop.f32.mrb[0].mxu0
      %3150 = vmatprep.mubr.bf16.mxu0 0
      %3151 = vmatmul.mubr.bf16.gmra.mrb[0].mxu0 %v3031
      %v3152 = vpop.f32.mrb[0].mxu0
      %v3153 = vadd.f32 0.0, %v3152
      %v3154 = vpop.f32.mrb[0].mxu0
      %v3155 = vpop.f32.mrb[0].mxu0
      %v3156 = vadd.f32 0.0, %v3155
      %v3157 = vpop.f32.mrb[0].mxu0
      %3158 = vmatprep.mubr.bf16.mxu0 0
      %3159 = vmatmul.mubr.bf16.gmra.mrb[0].mxu0 %v3034
      %v3160 = vpop.f32.mrb[0].mxu0
      %v3161 = vadd.f32 0.0, %v3160
      %v3162 = vpop.f32.mrb[0].mxu0
      %v3163 = vpop.f32.mrb[0].mxu0
      %v3164 = vadd.f32 0.0, %v3163
      %v3165 = vpop.f32.mrb[0].mxu0
      %3166 = vmatprep.mubr.bf16.mxu0 0
      %3167 = vmatmul.mubr.bf16.gmra.mrb[0].mxu0 %v3037
      %v3168 = vpop.f32.mrb[0].mxu0
      %v3169 = vadd.f32 0.0, %v3168
      %v3170 = vpop.f32.mrb[0].mxu0
      %v3171 = vpop.f32.mrb[0].mxu0
      %v3172 = vadd.f32 0.0, %v3171
      %v3173 = vpop.f32.mrb[0].mxu0
      %3174 = vmatprep.mubr.bf16.mxu0 0
      %3175 = vmatmul.mubr.bf16.gmra.mrb[0].mxu0 %v3040
      %v3176 = vpop.f32.mrb[0].mxu0
      %v3177 = vadd.f32 0.0, %v3176
      %v3178 = vpop.f32.mrb[0].mxu0
      %v3179 = vpop.f32.mrb[0].mxu0
      %v3180 = vadd.f32 0.0, %v3179
      %v3181 = vpop.f32.mrb[0].mxu0
      %3182 = vmatprep.mubr.bf16.mxu0 0
      %3183 = vmatmul.mubr.bf16.gmra.mrb[0].mxu0 %v3043
      %v3184 = vpop.f32.mrb[0].mxu0
      %v3185 = vadd.f32 0.0, %v3184
      %v3186 = vpop.f32.mrb[0].mxu0
      %v3187 = vpop.f32.mrb[0].mxu0
      %v3188 = vadd.f32 0.0, %v3187
      %v3189 = vpop.f32.mrb[0].mxu0
      %3190 = vmatprep.mubr.bf16.mxu0 0
      %3191 = vmatmul.mubr.bf16.gmra.mrb[0].mxu0 %v3046
      %v3192 = vpop.f32.mrb[0].mxu0
      %v3193 = vadd.f32 0.0, %v3192
      %v3194 = vpop.f32.mrb[0].mxu0
      %v3195 = vpop.f32.mrb[0].mxu0
      %v3196 = vadd.f32 0.0, %v3195
      %v3197 = vpop.f32.mrb[0].mxu0
      %3198 = vmatprep.mubr.bf16.mxu0 0
      %3199 = vmatmul.mubr.bf16.gmra.mrb[0].mxu0 %v3049
      %v3200 = vpop.f32.mrb[0].mxu0
      %v3201 = vadd.f32 0.0, %v3200
      %v3202 = vpop.f32.mrb[0].mxu0
      %v3203 = vpop.f32.mrb[0].mxu0
      %v3204 = vadd.f32 0.0, %v3203
      %v3205 = vpop.f32.mrb[0].mxu0
      %3206 = vmatprep.mubr.bf16.mxu0 0
      %3207 = vmatmul.mubr.bf16.gmra.mrb[0].mxu0 %v3052
      %v3208 = vpop.f32.mrb[0].mxu0
      %v3209 = vadd.f32 0.0, %v3208
      %v3210 = vpop.f32.mrb[0].mxu0
      %v3211 = vpop.f32.mrb[0].mxu0
      %v3212 = vadd.f32 0.0, %v3211
      %v3213 = vpop.f32.mrb[0].mxu0
      %3214 = vdwg.mxu0
      %v3215 = vadd.f32 %v2733, %v3089
      %v3216 = vadd.f32 %v2734, %v3092
      %v3217 = vadd.f32 %v2735, %v3097
      %v3218 = vadd.f32 %v2736, %v3100
      %v3219 = vadd.f32 %v2737, %v3105
      %v3220 = vadd.f32 %v2738, %v3108
      %v3221 = vadd.f32 %v2739, %v3113
      %v3222 = vadd.f32 %v2740, %v3116
      %v3223 = vadd.f32 %v2741, %v3121
      %v3224 = vadd.f32 %v2742, %v3124
      %v3225 = vadd.f32 %v2743, %v3129
      %v3226 = vadd.f32 %v2744, %v3132
      %v3227 = vadd.f32 %v2745, %v3137
      %v3228 = vadd.f32 %v2746, %v3140
      %v3229 = vadd.f32 %v2747, %v3145
      %v3230 = vadd.f32 %v2748, %v3148
      %v3231 = vadd.f32 %v2749, %v3153
      %v3232 = vadd.f32 %v2750, %v3156
      %v3233 = vadd.f32 %v2751, %v3161
      %v3234 = vadd.f32 %v2752, %v3164
      %v3235 = vadd.f32 %v2753, %v3169
      %v3236 = vadd.f32 %v2754, %v3172
      %v3237 = vadd.f32 %v2755, %v3177
      %v3238 = vadd.f32 %v2756, %v3180
      %v3239 = vadd.f32 %v2757, %v3185
      %v3240 = vadd.f32 %v2758, %v3188
      %v3241 = vadd.f32 %v2759, %v3193
      %v3242 = vadd.f32 %v2760, %v3196
      %v3243 = vadd.f32 %v2761, %v3201
      %v3244 = vadd.f32 %v2762, %v3204
      %v3245 = vadd.f32 %v2763, %v3209
      %v3246 = vadd.f32 %v2764, %v3212
      %s3247 = scalar_lea.vmem %s165, 24
      %v3248 = vld [vmem:[%s3247] sm:$0xf]
      %v3249 = vld [vmem:[%s3247 + $0x4] sm:$0xf]
      %v3250 = vld [vmem:[%s3247 + $0xc] sm:$0xf]
      %v3251 = vld [vmem:[%s3247 + $0x10] sm:$0xf]
      %v3252 = vld [vmem:[%s3247 + $0x18] sm:$0xf]
      %v3253 = vld [vmem:[%s3247 + $0x1c] sm:$0xf]
      %v3254 = vld [vmem:[%s3247 + $0x24] sm:$0xf]
      %v3255 = vld [vmem:[%s3247 + $0x28] sm:$0xf]
      %v3256 = vld [vmem:[%s3247 + $0x30] sm:$0xf]
      %v3257 = vld [vmem:[%s3247 + $0x34] sm:$0xf]
      %v3258 = vld [vmem:[%s3247 + $0x3c] sm:$0xf]
      %v3259 = vld [vmem:[%s3247 + $0x40] sm:$0xf]
      %v3260 = vld [vmem:[%s3247 + $0x48] sm:$0xf]
      %v3261 = vld [vmem:[%s3247 + $0x4c] sm:$0xf]
      %v3262 = vld [vmem:[%s3247 + $0x54] sm:$0xf]
      %v3263 = vld [vmem:[%s3247 + $0x58] sm:$0xf]
      %v3264 = vld [vmem:[%s3247 + $0x60] sm:$0xf]
      %v3265 = vld [vmem:[%s3247 + $0x64] sm:$0xf]
      %v3266 = vld [vmem:[%s3247 + $0x6c] sm:$0xf]
      %v3267 = vld [vmem:[%s3247 + $0x70] sm:$0xf]
      %v3268 = vld [vmem:[%s3247 + $0x78] sm:$0xf]
      %v3269 = vld [vmem:[%s3247 + $0x7c] sm:$0xf]
      %v3270 = vld [vmem:[%s3247 + $0x84] sm:$0xf]
      %v3271 = vld [vmem:[%s3247 + $0x88] sm:$0xf]
      %v3272 = vld [vmem:[%s3247 + $0x90] sm:$0xf]
      %v3273 = vld [vmem:[%s3247 + $0x94] sm:$0xf]
      %v3274 = vld [vmem:[%s3247 + $0x9c] sm:$0xf]
      %v3275 = vld [vmem:[%s3247 + $0xa0] sm:$0xf]
      %v3276 = vld [vmem:[%s3247 + $0xa8] sm:$0xf]
      %v3277 = vld [vmem:[%s3247 + $0xac] sm:$0xf]
      %v3278 = vld [vmem:[%s3247 + $0xb4] sm:$0xf]
      %v3279 = vld [vmem:[%s3247 + $0xb8] sm:$0xf]
      %s3280 = scalar_lea.vmem %s1, 96
      %v3281 = vld [vmem:[%s3280] sm:$0xf]
      %v3282 = vld [vmem:[%s3280 + $0x4] sm:$0xf]
      %v3283 = vld [vmem:[%s3280 + $0x8] sm:$0xf]
      %v3284 = vld [vmem:[%s3280 + $0xc] sm:$0xf]
      %v3317 = vunpack.c.l.b16 %v3248
      %v3318 = vunpack.c.l.b16 %v3249
      %v3319 = vunpack.c.l.b16 %v3250
      %v3320 = vunpack.c.l.b16 %v3251
      %v3321 = vunpack.c.l.b16 %v3252
      %v3322 = vunpack.c.l.b16 %v3253
      %v3323 = vunpack.c.l.b16 %v3254
      %v3324 = vunpack.c.l.b16 %v3255
      %v3325 = vunpack.c.l.b16 %v3256
      %v3326 = vunpack.c.l.b16 %v3257
      %v3327 = vunpack.c.l.b16 %v3258
      %v3328 = vunpack.c.l.b16 %v3259
      %v3329 = vunpack.c.l.b16 %v3260
      %v3330 = vunpack.c.l.b16 %v3261
      %v3331 = vunpack.c.l.b16 %v3262
      %v3332 = vunpack.c.l.b16 %v3263
      %v3333 = vunpack.c.l.b16 %v3264
      %v3334 = vunpack.c.l.b16 %v3265
      %v3335 = vunpack.c.l.b16 %v3266
      %v3336 = vunpack.c.l.b16 %v3267
      %v3337 = vunpack.c.l.b16 %v3268
      %v3338 = vunpack.c.l.b16 %v3269
      %v3339 = vunpack.c.l.b16 %v3270
      %v3340 = vunpack.c.l.b16 %v3271
      %v3341 = vunpack.c.l.b16 %v3272
      %v3342 = vunpack.c.l.b16 %v3273
      %v3343 = vunpack.c.l.b16 %v3274
      %v3344 = vunpack.c.l.b16 %v3275
      %v3345 = vunpack.c.l.b16 %v3276
      %v3346 = vunpack.c.l.b16 %v3277
      %v3347 = vunpack.c.l.b16 %v3278
      %v3348 = vunpack.c.l.b16 %v3279
      %v3349 = vpack.c.b16 %v3318, %v3317
      %v3350 = vpack.c.b16 %v3320, %v3319
      %v3351 = vpack.c.b16 %v3322, %v3321
      %v3352 = vpack.c.b16 %v3324, %v3323
      %v3353 = vpack.c.b16 %v3326, %v3325
      %v3354 = vpack.c.b16 %v3328, %v3327
      %v3355 = vpack.c.b16 %v3330, %v3329
      %v3356 = vpack.c.b16 %v3332, %v3331
      %v3357 = vpack.c.b16 %v3334, %v3333
      %v3358 = vpack.c.b16 %v3336, %v3335
      %v3359 = vpack.c.b16 %v3338, %v3337
      %v3360 = vpack.c.b16 %v3340, %v3339
      %v3361 = vpack.c.b16 %v3342, %v3341
      %v3362 = vpack.c.b16 %v3344, %v3343
      %v3363 = vpack.c.b16 %v3346, %v3345
      %v3364 = vpack.c.b16 %v3348, %v3347
      %v3369 = vunpack.c.l.b16 %v3281
      %v3370 = vunpack.c.l.b16 %v3282
      %v3371 = vunpack.c.l.b16 %v3283
      %v3372 = vunpack.c.l.b16 %v3284
      %v3373 = vpack.c.b16 %v3370, %v3369
      %v3374 = vpack.c.b16 %v3372, %v3371
      %v3378 = vsel %vm676, %v3349, 0
      %v3381 = vsel %vm676, %v3350, 0
      %v3384 = vsel %vm676, %v3351, 0
      %v3387 = vsel %vm676, %v3352, 0
      %v3390 = vsel %vm676, %v3353, 0
      %v3393 = vsel %vm676, %v3354, 0
      %v3396 = vsel %vm676, %v3355, 0
      %v3399 = vsel %vm676, %v3356, 0
      %v3402 = vsel %vm676, %v3357, 0
      %v3405 = vsel %vm676, %v3358, 0
      %v3408 = vsel %vm676, %v3359, 0
      %v3411 = vsel %vm676, %v3360, 0
      %v3414 = vsel %vm676, %v3361, 0
      %v3417 = vsel %vm676, %v3362, 0
      %v3420 = vsel %vm676, %v3363, 0
      %v3423 = vsel %vm676, %v3364, 0
      %3425 = vmatprep.subr.bf16.mxu0 0
      %3426 = vmatpush1.bf16.msra.mxu0 %v3373
      %3427 = vmatprep.subr.bf16.mxu0 0
      %3428 = vmatpush1.bf16.msra.mxu0 %v3374
      %3429 = vmatprep.subr.bf16.mxu0 0
      %3430 = vmatpush1.bf16.msra.mxu0 0
      %3431 = vmatprep.subr.bf16.mxu0 0
      %3432 = vmatpush1.bf16.msra.mxu0 0
      %3433 = vmatprep.subr.bf16.mxu0 0
      %3434 = vmatpush1.bf16.msra.mxu0 0
      %3435 = vmatprep.subr.bf16.mxu0 0
      %3436 = vmatpush1.bf16.msra.mxu0 0
      %3437 = vmatprep.subr.bf16.mxu0 0
      %3438 = vmatpush1.bf16.msra.mxu0 0
      %3439 = vmatprep.subr.bf16.mxu0 0
      %3440 = vmatpush1.bf16.msra.mxu0 0
      %3441 = vmatprep.subr.bf16.mxu0 0
      %3442 = vmatpush1.bf16.msra.mxu0 0
      %3443 = vmatprep.subr.bf16.mxu0 0
      %3444 = vmatpush1.bf16.msra.mxu0 0
      %3445 = vmatprep.subr.bf16.mxu0 0
      %3446 = vmatpush1.bf16.msra.mxu0 0
      %3447 = vmatprep.subr.bf16.mxu0 0
      %3448 = vmatpush1.bf16.msra.mxu0 0
      %3449 = vmatprep.subr.bf16.mxu0 0
      %3450 = vmatpush1.bf16.msra.mxu0 0
      %3451 = vmatprep.subr.bf16.mxu0 0
      %3452 = vmatpush1.bf16.msra.mxu0 0
      %3453 = vmatprep.subr.bf16.mxu0 0
      %3454 = vmatpush1.bf16.msra.mxu0 0
      %3455 = vmatprep.subr.bf16.mxu0 0
      %3456 = vmatpush1.bf16.msra.mxu0 0
      %3457 = vmatprep.mubr.bf16.mxu0 0
      %3458 = vmatmul.mubr.bf16.gmra.mrb[0].mxu0 %v3378
      %v3459 = vpop.f32.mrb[0].mxu0
      %v3460 = vadd.f32 0.0, %v3459
      %v3461 = vpop.f32.mrb[0].mxu0
      %v3462 = vpop.f32.mrb[0].mxu0
      %v3463 = vadd.f32 0.0, %v3462
      %v3464 = vpop.f32.mrb[0].mxu0
      %3465 = vmatprep.mubr.bf16.mxu0 0
      %3466 = vmatmul.mubr.bf16.gmra.mrb[0].mxu0 %v3381
      %v3467 = vpop.f32.mrb[0].mxu0
      %v3468 = vadd.f32 0.0, %v3467
      %v3469 = vpop.f32.mrb[0].mxu0
      %v3470 = vpop.f32.mrb[0].mxu0
      %v3471 = vadd.f32 0.0, %v3470
      %v3472 = vpop.f32.mrb[0].mxu0
      %3473 = vmatprep.mubr.bf16.mxu0 0
      %3474 = vmatmul.mubr.bf16.gmra.mrb[0].mxu0 %v3384
      %v3475 = vpop.f32.mrb[0].mxu0
      %v3476 = vadd.f32 0.0, %v3475
      %v3477 = vpop.f32.mrb[0].mxu0
      %v3478 = vpop.f32.mrb[0].mxu0
      %v3479 = vadd.f32 0.0, %v3478
      %v3480 = vpop.f32.mrb[0].mxu0
      %3481 = vmatprep.mubr.bf16.mxu0 0
      %3482 = vmatmul.mubr.bf16.gmra.mrb[0].mxu0 %v3387
      %v3483 = vpop.f32.mrb[0].mxu0
      %v3484 = vadd.f32 0.0, %v3483
      %v3485 = vpop.f32.mrb[0].mxu0
      %v3486 = vpop.f32.mrb[0].mxu0
      %v3487 = vadd.f32 0.0, %v3486
      %v3488 = vpop.f32.mrb[0].mxu0
      %3489 = vmatprep.mubr.bf16.mxu0 0
      %3490 = vmatmul.mubr.bf16.gmra.mrb[0].mxu0 %v3390
      %v3491 = vpop.f32.mrb[0].mxu0
      %v3492 = vadd.f32 0.0, %v3491
      %v3493 = vpop.f32.mrb[0].mxu0
      %v3494 = vpop.f32.mrb[0].mxu0
      %v3495 = vadd.f32 0.0, %v3494
      %v3496 = vpop.f32.mrb[0].mxu0
      %3497 = vmatprep.mubr.bf16.mxu0 0
      %3498 = vmatmul.mubr.bf16.gmra.mrb[0].mxu0 %v3393
      %v3499 = vpop.f32.mrb[0].mxu0
      %v3500 = vadd.f32 0.0, %v3499
      %v3501 = vpop.f32.mrb[0].mxu0
      %v3502 = vpop.f32.mrb[0].mxu0
      %v3503 = vadd.f32 0.0, %v3502
      %v3504 = vpop.f32.mrb[0].mxu0
      %3505 = vmatprep.mubr.bf16.mxu0 0
      %3506 = vmatmul.mubr.bf16.gmra.mrb[0].mxu0 %v3396
      %v3507 = vpop.f32.mrb[0].mxu0
      %v3508 = vadd.f32 0.0, %v3507
      %v3509 = vpop.f32.mrb[0].mxu0
      %v3510 = vpop.f32.mrb[0].mxu0
      %v3511 = vadd.f32 0.0, %v3510
      %v3512 = vpop.f32.mrb[0].mxu0
      %3513 = vmatprep.mubr.bf16.mxu0 0
      %3514 = vmatmul.mubr.bf16.gmra.mrb[0].mxu0 %v3399
      %v3515 = vpop.f32.mrb[0].mxu0
      %v3516 = vadd.f32 0.0, %v3515
      %v3517 = vpop.f32.mrb[0].mxu0
      %v3518 = vpop.f32.mrb[0].mxu0
      %v3519 = vadd.f32 0.0, %v3518
      %v3520 = vpop.f32.mrb[0].mxu0
      %3521 = vmatprep.mubr.bf16.mxu0 0
      %3522 = vmatmul.mubr.bf16.gmra.mrb[0].mxu0 %v3402
      %v3523 = vpop.f32.mrb[0].mxu0
      %v3524 = vadd.f32 0.0, %v3523
      %v3525 = vpop.f32.mrb[0].mxu0
      %v3526 = vpop.f32.mrb[0].mxu0
      %v3527 = vadd.f32 0.0, %v3526
      %v3528 = vpop.f32.mrb[0].mxu0
      %3529 = vmatprep.mubr.bf16.mxu0 0
      %3530 = vmatmul.mubr.bf16.gmra.mrb[0].mxu0 %v3405
      %v3531 = vpop.f32.mrb[0].mxu0
      %v3532 = vadd.f32 0.0, %v3531
      %v3533 = vpop.f32.mrb[0].mxu0
      %v3534 = vpop.f32.mrb[0].mxu0
      %v3535 = vadd.f32 0.0, %v3534
      %v3536 = vpop.f32.mrb[0].mxu0
      %3537 = vmatprep.mubr.bf16.mxu0 0
      %3538 = vmatmul.mubr.bf16.gmra.mrb[0].mxu0 %v3408
      %v3539 = vpop.f32.mrb[0].mxu0
      %v3540 = vadd.f32 0.0, %v3539
      %v3541 = vpop.f32.mrb[0].mxu0
      %v3542 = vpop.f32.mrb[0].mxu0
      %v3543 = vadd.f32 0.0, %v3542
      %v3544 = vpop.f32.mrb[0].mxu0
      %3545 = vmatprep.mubr.bf16.mxu0 0
      %3546 = vmatmul.mubr.bf16.gmra.mrb[0].mxu0 %v3411
      %v3547 = vpop.f32.mrb[0].mxu0
      %v3548 = vadd.f32 0.0, %v3547
      %v3549 = vpop.f32.mrb[0].mxu0
      %v3550 = vpop.f32.mrb[0].mxu0
      %v3551 = vadd.f32 0.0, %v3550
      %v3552 = vpop.f32.mrb[0].mxu0
      %3553 = vmatprep.mubr.bf16.mxu0 0
      %3554 = vmatmul.mubr.bf16.gmra.mrb[0].mxu0 %v3414
      %v3555 = vpop.f32.mrb[0].mxu0
      %v3556 = vadd.f32 0.0, %v3555
      %v3557 = vpop.f32.mrb[0].mxu0
      %v3558 = vpop.f32.mrb[0].mxu0
      %v3559 = vadd.f32 0.0, %v3558
      %v3560 = vpop.f32.mrb[0].mxu0
      %3561 = vmatprep.mubr.bf16.mxu0 0
      %3562 = vmatmul.mubr.bf16.gmra.mrb[0].mxu0 %v3417
      %v3563 = vpop.f32.mrb[0].mxu0
      %v3564 = vadd.f32 0.0, %v3563
      %v3565 = vpop.f32.mrb[0].mxu0
      %v3566 = vpop.f32.mrb[0].mxu0
      %v3567 = vadd.f32 0.0, %v3566
      %v3568 = vpop.f32.mrb[0].mxu0
      %3569 = vmatprep.mubr.bf16.mxu0 0
      %3570 = vmatmul.mubr.bf16.gmra.mrb[0].mxu0 %v3420
      %v3571 = vpop.f32.mrb[0].mxu0
      %v3572 = vadd.f32 0.0, %v3571
      %v3573 = vpop.f32.mrb[0].mxu0
      %v3574 = vpop.f32.mrb[0].mxu0
      %v3575 = vadd.f32 0.0, %v3574
      %v3576 = vpop.f32.mrb[0].mxu0
      %3577 = vmatprep.mubr.bf16.mxu0 0
      %3578 = vmatmul.mubr.bf16.gmra.mrb[0].mxu0 %v3423
      %v3579 = vpop.f32.mrb[0].mxu0
      %v3580 = vadd.f32 0.0, %v3579
      %v3581 = vpop.f32.mrb[0].mxu0
      %v3582 = vpop.f32.mrb[0].mxu0
      %v3583 = vadd.f32 0.0, %v3582
      %v3584 = vpop.f32.mrb[0].mxu0
      %3585 = vdwg.mxu0
      %v3586 = vadd.f32 %v3215, %v3460
      %v3587 = vadd.f32 %v3216, %v3463
      %v3588 = vadd.f32 %v3217, %v3468
      %v3589 = vadd.f32 %v3218, %v3471
      %v3590 = vadd.f32 %v3219, %v3476
      %v3591 = vadd.f32 %v3220, %v3479
      %v3592 = vadd.f32 %v3221, %v3484
      %v3593 = vadd.f32 %v3222, %v3487
      %v3594 = vadd.f32 %v3223, %v3492
      %v3595 = vadd.f32 %v3224, %v3495
      %v3596 = vadd.f32 %v3225, %v3500
      %v3597 = vadd.f32 %v3226, %v3503
      %v3598 = vadd.f32 %v3227, %v3508
      %v3599 = vadd.f32 %v3228, %v3511
      %v3600 = vadd.f32 %v3229, %v3516
      %v3601 = vadd.f32 %v3230, %v3519
      %v3602 = vadd.f32 %v3231, %v3524
      %v3603 = vadd.f32 %v3232, %v3527
      %v3604 = vadd.f32 %v3233, %v3532
      %v3605 = vadd.f32 %v3234, %v3535
      %v3606 = vadd.f32 %v3235, %v3540
      %v3607 = vadd.f32 %v3236, %v3543
      %v3608 = vadd.f32 %v3237, %v3548
      %v3609 = vadd.f32 %v3238, %v3551
      %v3610 = vadd.f32 %v3239, %v3556
      %v3611 = vadd.f32 %v3240, %v3559
      %v3612 = vadd.f32 %v3241, %v3564
      %v3613 = vadd.f32 %v3242, %v3567
      %v3614 = vadd.f32 %v3243, %v3572
      %v3615 = vadd.f32 %v3244, %v3575
      %v3616 = vadd.f32 %v3245, %v3580
      %v3617 = vadd.f32 %v3246, %v3583
      %v3618 = vld [vmem:[%s3247] sm:$0xf]
      %v3619 = vld [vmem:[%s3247 + $0x4] sm:$0xf]
      %v3620 = vld [vmem:[%s3247 + $0x8] sm:$0x1]
      %v3621 = vld [vmem:[%s3247 + $0xc] sm:$0xf]
      %v3622 = vld [vmem:[%s3247 + $0x10] sm:$0xf]
      %v3623 = vld [vmem:[%s3247 + $0x14] sm:$0x1]
      %v3624 = vld [vmem:[%s3247 + $0x18] sm:$0xf]
      %v3625 = vld [vmem:[%s3247 + $0x1c] sm:$0xf]
      %v3626 = vld [vmem:[%s3247 + $0x20] sm:$0x1]
      %v3627 = vld [vmem:[%s3247 + $0x24] sm:$0xf]
      %v3628 = vld [vmem:[%s3247 + $0x28] sm:$0xf]
      %v3629 = vld [vmem:[%s3247 + $0x2c] sm:$0x1]
      %v3630 = vld [vmem:[%s3247 + $0x30] sm:$0xf]
      %v3631 = vld [vmem:[%s3247 + $0x34] sm:$0xf]
      %v3632 = vld [vmem:[%s3247 + $0x38] sm:$0x1]
      %v3633 = vld [vmem:[%s3247 + $0x3c] sm:$0xf]
      %v3634 = vld [vmem:[%s3247 + $0x40] sm:$0xf]
      %v3635 = vld [vmem:[%s3247 + $0x44] sm:$0x1]
      %v3636 = vld [vmem:[%s3247 + $0x48] sm:$0xf]
      %v3637 = vld [vmem:[%s3247 + $0x4c] sm:$0xf]
      %v3638 = vld [vmem:[%s3247 + $0x50] sm:$0x1]
      %v3639 = vld [vmem:[%s3247 + $0x54] sm:$0xf]
      %v3640 = vld [vmem:[%s3247 + $0x58] sm:$0xf]
      %v3641 = vld [vmem:[%s3247 + $0x5c] sm:$0x1]
      %v3642 = vld [vmem:[%s3247 + $0x60] sm:$0xf]
      %v3643 = vld [vmem:[%s3247 + $0x64] sm:$0xf]
      %v3644 = vld [vmem:[%s3247 + $0x68] sm:$0x1]
      %v3645 = vld [vmem:[%s3247 + $0x6c] sm:$0xf]
      %v3646 = vld [vmem:[%s3247 + $0x70] sm:$0xf]
      %v3647 = vld [vmem:[%s3247 + $0x74] sm:$0x1]
      %v3648 = vld [vmem:[%s3247 + $0x78] sm:$0xf]
      %v3649 = vld [vmem:[%s3247 + $0x7c] sm:$0xf]
      %v3650 = vld [vmem:[%s3247 + $0x80] sm:$0x1]
      %v3651 = vld [vmem:[%s3247 + $0x84] sm:$0xf]
      %v3652 = vld [vmem:[%s3247 + $0x88] sm:$0xf]
      %v3653 = vld [vmem:[%s3247 + $0x8c] sm:$0x1]
      %v3654 = vld [vmem:[%s3247 + $0x90] sm:$0xf]
      %v3655 = vld [vmem:[%s3247 + $0x94] sm:$0xf]
      %v3656 = vld [vmem:[%s3247 + $0x98] sm:$0x1]
      %v3657 = vld [vmem:[%s3247 + $0x9c] sm:$0xf]
      %v3658 = vld [vmem:[%s3247 + $0xa0] sm:$0xf]
      %v3659 = vld [vmem:[%s3247 + $0xa4] sm:$0x1]
      %v3660 = vld [vmem:[%s3247 + $0xa8] sm:$0xf]
      %v3661 = vld [vmem:[%s3247 + $0xac] sm:$0xf]
      %v3662 = vld [vmem:[%s3247 + $0xb0] sm:$0x1]
      %v3663 = vld [vmem:[%s3247 + $0xb4] sm:$0xf]
      %v3664 = vld [vmem:[%s3247 + $0xb8] sm:$0xf]
      %v3665 = vld [vmem:[%s3247 + $0xbc] sm:$0x1]
      %v3667 = vshrl.u32 %v3618, 16
      %v3669 = vrot.slane %v3667, 4
      %v3670 = vshll.u32 %v3618, 16
      %v3672 = vrot.slane %v3670, 5
      %v3673 = vor.u32 %v3669, %v3672
      %v3674 = vrot.slane %v3673, 4
      %v3676 = vshll.u32 %v3619, 16
      %v3678 = vrot.slane %v3676, 5
      %v3679 = vsel %vm226, %v3674, %v3678
      %v3680 = vshrl.u32 %v3619, 16
      %v3682 = vrot.slane %v3680, 4
      %v3683 = vor.u32 %v3682, %v3678
      %v3684 = vrot.slane %v3683, 4
      %v3686 = vshll.u32 %v3620, 16
      %v3688 = vrot.slane %v3686, 5
      %v3689 = vsel %vm226, %v3684, %v3688
      %v3691 = vshrl.u32 %v3621, 16
      %v3693 = vrot.slane %v3691, 4
      %v3694 = vshll.u32 %v3621, 16
      %v3696 = vrot.slane %v3694, 5
      %v3697 = vor.u32 %v3693, %v3696
      %v3698 = vrot.slane %v3697, 4
      %v3700 = vshll.u32 %v3622, 16
      %v3702 = vrot.slane %v3700, 5
      %v3703 = vsel %vm226, %v3698, %v3702
      %v3704 = vshrl.u32 %v3622, 16
      %v3706 = vrot.slane %v3704, 4
      %v3707 = vor.u32 %v3706, %v3702
      %v3708 = vrot.slane %v3707, 4
      %v3710 = vshll.u32 %v3623, 16
      %v3712 = vrot.slane %v3710, 5
      %v3713 = vsel %vm226, %v3708, %v3712
      %v3715 = vshrl.u32 %v3624, 16
      %v3717 = vrot.slane %v3715, 4
      %v3718 = vshll.u32 %v3624, 16
      %v3720 = vrot.slane %v3718, 5
      %v3721 = vor.u32 %v3717, %v3720
      %v3722 = vrot.slane %v3721, 4
      %v3724 = vshll.u32 %v3625, 16
      %v3726 = vrot.slane %v3724, 5
      %v3727 = vsel %vm226, %v3722, %v3726
      %v3728 = vshrl.u32 %v3625, 16
      %v3730 = vrot.slane %v3728, 4
      %v3731 = vor.u32 %v3730, %v3726
      %v3732 = vrot.slane %v3731, 4
      %v3734 = vshll.u32 %v3626, 16
      %v3736 = vrot.slane %v3734, 5
      %v3737 = vsel %vm226, %v3732, %v3736
      %v3739 = vshrl.u32 %v3627, 16
      %v3741 = vrot.slane %v3739, 4
      %v3742 = vshll.u32 %v3627, 16
      %v3744 = vrot.slane %v3742, 5
      %v3745 = vor.u32 %v3741, %v3744
      %v3746 = vrot.slane %v3745, 4
      %v3748 = vshll.u32 %v3628, 16
      %v3750 = vrot.slane %v3748, 5
      %v3751 = vsel %vm226, %v3746, %v3750
      %v3752 = vshrl.u32 %v3628, 16
      %v3754 = vrot.slane %v3752, 4
      %v3755 = vor.u32 %v3754, %v3750
      %v3756 = vrot.slane %v3755, 4
      %v3758 = vshll.u32 %v3629, 16
      %v3760 = vrot.slane %v3758, 5
      %v3761 = vsel %vm226, %v3756, %v3760
      %v3763 = vshrl.u32 %v3630, 16
      %v3765 = vrot.slane %v3763, 4
      %v3766 = vshll.u32 %v3630, 16
      %v3768 = vrot.slane %v3766, 5
      %v3769 = vor.u32 %v3765, %v3768
      %v3770 = vrot.slane %v3769, 4
      %v3772 = vshll.u32 %v3631, 16
      %v3774 = vrot.slane %v3772, 5
      %v3775 = vsel %vm226, %v3770, %v3774
      %v3776 = vshrl.u32 %v3631, 16
      %v3778 = vrot.slane %v3776, 4
      %v3779 = vor.u32 %v3778, %v3774
      %v3780 = vrot.slane %v3779, 4
      %v3782 = vshll.u32 %v3632, 16
      %v3784 = vrot.slane %v3782, 5
      %v3785 = vsel %vm226, %v3780, %v3784
      %v3787 = vshrl.u32 %v3633, 16
      %v3789 = vrot.slane %v3787, 4
      %v3790 = vshll.u32 %v3633, 16
      %v3792 = vrot.slane %v3790, 5
      %v3793 = vor.u32 %v3789, %v3792
      %v3794 = vrot.slane %v3793, 4
      %v3796 = vshll.u32 %v3634, 16
      %v3798 = vrot.slane %v3796, 5
      %v3799 = vsel %vm226, %v3794, %v3798
      %v3800 = vshrl.u32 %v3634, 16
      %v3802 = vrot.slane %v3800, 4
      %v3803 = vor.u32 %v3802, %v3798
      %v3804 = vrot.slane %v3803, 4
      %v3806 = vshll.u32 %v3635, 16
      %v3808 = vrot.slane %v3806, 5
      %v3809 = vsel %vm226, %v3804, %v3808
      %v3811 = vshrl.u32 %v3636, 16
      %v3813 = vrot.slane %v3811, 4
      %v3814 = vshll.u32 %v3636, 16
      %v3816 = vrot.slane %v3814, 5
      %v3817 = vor.u32 %v3813, %v3816
      %v3818 = vrot.slane %v3817, 4
      %v3820 = vshll.u32 %v3637, 16
      %v3822 = vrot.slane %v3820, 5
      %v3823 = vsel %vm226, %v3818, %v3822
      %v3824 = vshrl.u32 %v3637, 16
      %v3826 = vrot.slane %v3824, 4
      %v3827 = vor.u32 %v3826, %v3822
      %v3828 = vrot.slane %v3827, 4
      %v3830 = vshll.u32 %v3638, 16
      %v3832 = vrot.slane %v3830, 5
      %v3833 = vsel %vm226, %v3828, %v3832
      %v3835 = vshrl.u32 %v3639, 16
      %v3837 = vrot.slane %v3835, 4
      %v3838 = vshll.u32 %v3639, 16
      %v3840 = vrot.slane %v3838, 5
      %v3841 = vor.u32 %v3837, %v3840
      %v3842 = vrot.slane %v3841, 4
      %v3844 = vshll.u32 %v3640, 16
      %v3846 = vrot.slane %v3844, 5
      %v3847 = vsel %vm226, %v3842, %v3846
      %v3848 = vshrl.u32 %v3640, 16
      %v3850 = vrot.slane %v3848, 4
      %v3851 = vor.u32 %v3850, %v3846
      %v3852 = vrot.slane %v3851, 4
      %v3854 = vshll.u32 %v3641, 16
      %v3856 = vrot.slane %v3854, 5
      %v3857 = vsel %vm226, %v3852, %v3856
      %v3859 = vshrl.u32 %v3642, 16
      %v3861 = vrot.slane %v3859, 4
      %v3862 = vshll.u32 %v3642, 16
      %v3864 = vrot.slane %v3862, 5
      %v3865 = vor.u32 %v3861, %v3864
      %v3866 = vrot.slane %v3865, 4
      %v3868 = vshll.u32 %v3643, 16
      %v3870 = vrot.slane %v3868, 5
      %v3871 = vsel %vm226, %v3866, %v3870
      %v3872 = vshrl.u32 %v3643, 16
      %v3874 = vrot.slane %v3872, 4
      %v3875 = vor.u32 %v3874, %v3870
      %v3876 = vrot.slane %v3875, 4
      %v3878 = vshll.u32 %v3644, 16
      %v3880 = vrot.slane %v3878, 5
      %v3881 = vsel %vm226, %v3876, %v3880
      %v3883 = vshrl.u32 %v3645, 16
      %v3885 = vrot.slane %v3883, 4
      %v3886 = vshll.u32 %v3645, 16
      %v3888 = vrot.slane %v3886, 5
      %v3889 = vor.u32 %v3885, %v3888
      %v3890 = vrot.slane %v3889, 4
      %v3892 = vshll.u32 %v3646, 16
      %v3894 = vrot.slane %v3892, 5
      %v3895 = vsel %vm226, %v3890, %v3894
      %v3896 = vshrl.u32 %v3646, 16
      %v3898 = vrot.slane %v3896, 4
      %v3899 = vor.u32 %v3898, %v3894
      %v3900 = vrot.slane %v3899, 4
      %v3902 = vshll.u32 %v3647, 16
      %v3904 = vrot.slane %v3902, 5
      %v3905 = vsel %vm226, %v3900, %v3904
      %v3907 = vshrl.u32 %v3648, 16
      %v3909 = vrot.slane %v3907, 4
      %v3910 = vshll.u32 %v3648, 16
      %v3912 = vrot.slane %v3910, 5
      %v3913 = vor.u32 %v3909, %v3912
      %v3914 = vrot.slane %v3913, 4
      %v3916 = vshll.u32 %v3649, 16
      %v3918 = vrot.slane %v3916, 5
      %v3919 = vsel %vm226, %v3914, %v3918
      %v3920 = vshrl.u32 %v3649, 16
      %v3922 = vrot.slane %v3920, 4
      %v3923 = vor.u32 %v3922, %v3918
      %v3924 = vrot.slane %v3923, 4
      %v3926 = vshll.u32 %v3650, 16
      %v3928 = vrot.slane %v3926, 5
      %v3929 = vsel %vm226, %v3924, %v3928
      %v3931 = vshrl.u32 %v3651, 16
      %v3933 = vrot.slane %v3931, 4
      %v3934 = vshll.u32 %v3651, 16
      %v3936 = vrot.slane %v3934, 5
      %v3937 = vor.u32 %v3933, %v3936
      %v3938 = vrot.slane %v3937, 4
      %v3940 = vshll.u32 %v3652, 16
      %v3942 = vrot.slane %v3940, 5
      %v3943 = vsel %vm226, %v3938, %v3942
      %v3944 = vshrl.u32 %v3652, 16
      %v3946 = vrot.slane %v3944, 4
      %v3947 = vor.u32 %v3946, %v3942
      %v3948 = vrot.slane %v3947, 4
      %v3950 = vshll.u32 %v3653, 16
      %v3952 = vrot.slane %v3950, 5
      %v3953 = vsel %vm226, %v3948, %v3952
      %v3955 = vshrl.u32 %v3654, 16
      %v3957 = vrot.slane %v3955, 4
      %v3958 = vshll.u32 %v3654, 16
      %v3960 = vrot.slane %v3958, 5
      %v3961 = vor.u32 %v3957, %v3960
      %v3962 = vrot.slane %v3961, 4
      %v3964 = vshll.u32 %v3655, 16
      %v3966 = vrot.slane %v3964, 5
      %v3967 = vsel %vm226, %v3962, %v3966
      %v3968 = vshrl.u32 %v3655, 16
      %v3970 = vrot.slane %v3968, 4
      %v3971 = vor.u32 %v3970, %v3966
      %v3972 = vrot.slane %v3971, 4
      %v3974 = vshll.u32 %v3656, 16
      %v3976 = vrot.slane %v3974, 5
      %v3977 = vsel %vm226, %v3972, %v3976
      %v3979 = vshrl.u32 %v3657, 16
      %v3981 = vrot.slane %v3979, 4
      %v3982 = vshll.u32 %v3657, 16
      %v3984 = vrot.slane %v3982, 5
      %v3985 = vor.u32 %v3981, %v3984
      %v3986 = vrot.slane %v3985, 4
      %v3988 = vshll.u32 %v3658, 16
      %v3990 = vrot.slane %v3988, 5
      %v3991 = vsel %vm226, %v3986, %v3990
      %v3992 = vshrl.u32 %v3658, 16
      %v3994 = vrot.slane %v3992, 4
      %v3995 = vor.u32 %v3994, %v3990
      %v3996 = vrot.slane %v3995, 4
      %v3998 = vshll.u32 %v3659, 16
      %v4000 = vrot.slane %v3998, 5
      %v4001 = vsel %vm226, %v3996, %v4000
      %v4003 = vshrl.u32 %v3660, 16
      %v4005 = vrot.slane %v4003, 4
      %v4006 = vshll.u32 %v3660, 16
      %v4008 = vrot.slane %v4006, 5
      %v4009 = vor.u32 %v4005, %v4008
      %v4010 = vrot.slane %v4009, 4
      %v4012 = vshll.u32 %v3661, 16
      %v4014 = vrot.slane %v4012, 5
      %v4015 = vsel %vm226, %v4010, %v4014
      %v4016 = vshrl.u32 %v3661, 16
      %v4018 = vrot.slane %v4016, 4
      %v4019 = vor.u32 %v4018, %v4014
      %v4020 = vrot.slane %v4019, 4
      %v4022 = vshll.u32 %v3662, 16
      %v4024 = vrot.slane %v4022, 5
      %v4025 = vsel %vm226, %v4020, %v4024
      %v4027 = vshrl.u32 %v3663, 16
      %v4029 = vrot.slane %v4027, 4
      %v4030 = vshll.u32 %v3663, 16
      %v4032 = vrot.slane %v4030, 5
      %v4033 = vor.u32 %v4029, %v4032
      %v4034 = vrot.slane %v4033, 4
      %v4036 = vshll.u32 %v3664, 16
      %v4038 = vrot.slane %v4036, 5
      %v4039 = vsel %vm226, %v4034, %v4038
      %v4040 = vshrl.u32 %v3664, 16
      %v4042 = vrot.slane %v4040, 4
      %v4043 = vor.u32 %v4042, %v4038
      %v4044 = vrot.slane %v4043, 4
      %v4046 = vshll.u32 %v3665, 16
      %v4048 = vrot.slane %v4046, 5
      %v4049 = vsel %vm226, %v4044, %v4048
      %s4050 = scalar_lea.vmem %s1, 112
      %v4051 = vld [vmem:[%s4050] sm:$0xf]
      %v4052 = vld [vmem:[%s4050 + $0x4] sm:$0xf]
      %v4053 = vld [vmem:[%s4050 + $0x8] sm:$0xf]
      %v4054 = vld [vmem:[%s4050 + $0xc] sm:$0xf]
      %v4055 = vunpack.c.l.b16 %v3679
      %v4056 = vunpack.c.l.b16 %v3689
      %v4057 = vunpack.c.l.b16 %v3703
      %v4058 = vunpack.c.l.b16 %v3713
      %v4059 = vunpack.c.l.b16 %v3727
      %v4060 = vunpack.c.l.b16 %v3737
      %v4061 = vunpack.c.l.b16 %v3751
      %v4062 = vunpack.c.l.b16 %v3761
      %v4063 = vunpack.c.l.b16 %v3775
      %v4064 = vunpack.c.l.b16 %v3785
      %v4065 = vunpack.c.l.b16 %v3799
      %v4066 = vunpack.c.l.b16 %v3809
      %v4067 = vunpack.c.l.b16 %v3823
      %v4068 = vunpack.c.l.b16 %v3833
      %v4069 = vunpack.c.l.b16 %v3847
      %v4070 = vunpack.c.l.b16 %v3857
      %v4071 = vunpack.c.l.b16 %v3871
      %v4072 = vunpack.c.l.b16 %v3881
      %v4073 = vunpack.c.l.b16 %v3895
      %v4074 = vunpack.c.l.b16 %v3905
      %v4075 = vunpack.c.l.b16 %v3919
      %v4076 = vunpack.c.l.b16 %v3929
      %v4077 = vunpack.c.l.b16 %v3943
      %v4078 = vunpack.c.l.b16 %v3953
      %v4079 = vunpack.c.l.b16 %v3967
      %v4080 = vunpack.c.l.b16 %v3977
      %v4081 = vunpack.c.l.b16 %v3991
      %v4082 = vunpack.c.l.b16 %v4001
      %v4083 = vunpack.c.l.b16 %v4015
      %v4084 = vunpack.c.l.b16 %v4025
      %v4085 = vunpack.c.l.b16 %v4039
      %v4086 = vunpack.c.l.b16 %v4049
      %v4087 = vpack.c.b16 %v4056, %v4055
      %v4088 = vpack.c.b16 %v4058, %v4057
      %v4089 = vpack.c.b16 %v4060, %v4059
      %v4090 = vpack.c.b16 %v4062, %v4061
      %v4091 = vpack.c.b16 %v4064, %v4063
      %v4092 = vpack.c.b16 %v4066, %v4065
      %v4093 = vpack.c.b16 %v4068, %v4067
      %v4094 = vpack.c.b16 %v4070, %v4069
      %v4095 = vpack.c.b16 %v4072, %v4071
      %v4096 = vpack.c.b16 %v4074, %v4073
      %v4097 = vpack.c.b16 %v4076, %v4075
      %v4098 = vpack.c.b16 %v4078, %v4077
      %v4099 = vpack.c.b16 %v4080, %v4079
      %v4100 = vpack.c.b16 %v4082, %v4081
      %v4101 = vpack.c.b16 %v4084, %v4083
      %v4102 = vpack.c.b16 %v4086, %v4085
      %v4107 = vunpack.c.l.b16 %v4051
      %v4108 = vunpack.c.l.b16 %v4052
      %v4109 = vunpack.c.l.b16 %v4053
      %v4110 = vunpack.c.l.b16 %v4054
      %v4111 = vpack.c.b16 %v4108, %v4107
      %v4112 = vpack.c.b16 %v4110, %v4109
      %v4116 = vsel %vm676, %v4087, 0
      %v4119 = vsel %vm676, %v4088, 0
      %v4122 = vsel %vm676, %v4089, 0
      %v4125 = vsel %vm676, %v4090, 0
      %v4128 = vsel %vm676, %v4091, 0
      %v4131 = vsel %vm676, %v4092, 0
      %v4134 = vsel %vm676, %v4093, 0
      %v4137 = vsel %vm676, %v4094, 0
      %v4140 = vsel %vm676, %v4095, 0
      %v4143 = vsel %vm676, %v4096, 0
      %v4146 = vsel %vm676, %v4097, 0
      %v4149 = vsel %vm676, %v4098, 0
      %v4152 = vsel %vm676, %v4099, 0
      %v4155 = vsel %vm676, %v4100, 0
      %v4158 = vsel %vm676, %v4101, 0
      %v4161 = vsel %vm676, %v4102, 0
      %4163 = vmatprep.subr.bf16.mxu0 0
      %4164 = vmatpush1.bf16.msra.mxu0 %v4111
      %4165 = vmatprep.subr.bf16.mxu0 0
      %4166 = vmatpush1.bf16.msra.mxu0 %v4112
      %4167 = vmatprep.subr.bf16.mxu0 0
      %4168 = vmatpush1.bf16.msra.mxu0 0
      %4169 = vmatprep.subr.bf16.mxu0 0
      %4170 = vmatpush1.bf16.msra.mxu0 0
      %4171 = vmatprep.subr.bf16.mxu0 0
      %4172 = vmatpush1.bf16.msra.mxu0 0
      %4173 = vmatprep.subr.bf16.mxu0 0
      %4174 = vmatpush1.bf16.msra.mxu0 0
      %4175 = vmatprep.subr.bf16.mxu0 0
      %4176 = vmatpush1.bf16.msra.mxu0 0
      %4177 = vmatprep.subr.bf16.mxu0 0
      %4178 = vmatpush1.bf16.msra.mxu0 0
      %4179 = vmatprep.subr.bf16.mxu0 0
      %4180 = vmatpush1.bf16.msra.mxu0 0
      %4181 = vmatprep.subr.bf16.mxu0 0
      %4182 = vmatpush1.bf16.msra.mxu0 0
      %4183 = vmatprep.subr.bf16.mxu0 0
      %4184 = vmatpush1.bf16.msra.mxu0 0
      %4185 = vmatprep.subr.bf16.mxu0 0
      %4186 = vmatpush1.bf16.msra.mxu0 0
      %4187 = vmatprep.subr.bf16.mxu0 0
      %4188 = vmatpush1.bf16.msra.mxu0 0
      %4189 = vmatprep.subr.bf16.mxu0 0
      %4190 = vmatpush1.bf16.msra.mxu0 0
      %4191 = vmatprep.subr.bf16.mxu0 0
      %4192 = vmatpush1.bf16.msra.mxu0 0
      %4193 = vmatprep.subr.bf16.mxu0 0
      %4194 = vmatpush1.bf16.msra.mxu0 0
      %4195 = vmatprep.mubr.bf16.mxu0 0
      %4196 = vmatmul.mubr.bf16.gmra.mrb[0].mxu0 %v4116
      %v4197 = vpop.f32.mrb[0].mxu0
      %v4198 = vadd.f32 0.0, %v4197
      %v4199 = vpop.f32.mrb[0].mxu0
      %v4200 = vpop.f32.mrb[0].mxu0
      %v4201 = vadd.f32 0.0, %v4200
      %v4202 = vpop.f32.mrb[0].mxu0
      %4203 = vmatprep.mubr.bf16.mxu0 0
      %4204 = vmatmul.mubr.bf16.gmra.mrb[0].mxu0 %v4119
      %v4205 = vpop.f32.mrb[0].mxu0
      %v4206 = vadd.f32 0.0, %v4205
      %v4207 = vpop.f32.mrb[0].mxu0
      %v4208 = vpop.f32.mrb[0].mxu0
      %v4209 = vadd.f32 0.0, %v4208
      %v4210 = vpop.f32.mrb[0].mxu0
      %4211 = vmatprep.mubr.bf16.mxu0 0
      %4212 = vmatmul.mubr.bf16.gmra.mrb[0].mxu0 %v4122
      %v4213 = vpop.f32.mrb[0].mxu0
      %v4214 = vadd.f32 0.0, %v4213
      %v4215 = vpop.f32.mrb[0].mxu0
      %v4216 = vpop.f32.mrb[0].mxu0
      %v4217 = vadd.f32 0.0, %v4216
      %v4218 = vpop.f32.mrb[0].mxu0
      %4219 = vmatprep.mubr.bf16.mxu0 0
      %4220 = vmatmul.mubr.bf16.gmra.mrb[0].mxu0 %v4125
      %v4221 = vpop.f32.mrb[0].mxu0
      %v4222 = vadd.f32 0.0, %v4221
      %v4223 = vpop.f32.mrb[0].mxu0
      %v4224 = vpop.f32.mrb[0].mxu0
      %v4225 = vadd.f32 0.0, %v4224
      %v4226 = vpop.f32.mrb[0].mxu0
      %4227 = vmatprep.mubr.bf16.mxu0 0
      %4228 = vmatmul.mubr.bf16.gmra.mrb[0].mxu0 %v4128
      %v4229 = vpop.f32.mrb[0].mxu0
      %v4230 = vadd.f32 0.0, %v4229
      %v4231 = vpop.f32.mrb[0].mxu0
      %v4232 = vpop.f32.mrb[0].mxu0
      %v4233 = vadd.f32 0.0, %v4232
      %v4234 = vpop.f32.mrb[0].mxu0
      %4235 = vmatprep.mubr.bf16.mxu0 0
      %4236 = vmatmul.mubr.bf16.gmra.mrb[0].mxu0 %v4131
      %v4237 = vpop.f32.mrb[0].mxu0
      %v4238 = vadd.f32 0.0, %v4237
      %v4239 = vpop.f32.mrb[0].mxu0
      %v4240 = vpop.f32.mrb[0].mxu0
      %v4241 = vadd.f32 0.0, %v4240
      %v4242 = vpop.f32.mrb[0].mxu0
      %4243 = vmatprep.mubr.bf16.mxu0 0
      %4244 = vmatmul.mubr.bf16.gmra.mrb[0].mxu0 %v4134
      %v4245 = vpop.f32.mrb[0].mxu0
      %v4246 = vadd.f32 0.0, %v4245
      %v4247 = vpop.f32.mrb[0].mxu0
      %v4248 = vpop.f32.mrb[0].mxu0
      %v4249 = vadd.f32 0.0, %v4248
      %v4250 = vpop.f32.mrb[0].mxu0
      %4251 = vmatprep.mubr.bf16.mxu0 0
      %4252 = vmatmul.mubr.bf16.gmra.mrb[0].mxu0 %v4137
      %v4253 = vpop.f32.mrb[0].mxu0
      %v4254 = vadd.f32 0.0, %v4253
      %v4255 = vpop.f32.mrb[0].mxu0
      %v4256 = vpop.f32.mrb[0].mxu0
      %v4257 = vadd.f32 0.0, %v4256
      %v4258 = vpop.f32.mrb[0].mxu0
      %4259 = vmatprep.mubr.bf16.mxu0 0
      %4260 = vmatmul.mubr.bf16.gmra.mrb[0].mxu0 %v4140
      %v4261 = vpop.f32.mrb[0].mxu0
      %v4262 = vadd.f32 0.0, %v4261
      %v4263 = vpop.f32.mrb[0].mxu0
      %v4264 = vpop.f32.mrb[0].mxu0
      %v4265 = vadd.f32 0.0, %v4264
      %v4266 = vpop.f32.mrb[0].mxu0
      %4267 = vmatprep.mubr.bf16.mxu0 0
      %4268 = vmatmul.mubr.bf16.gmra.mrb[0].mxu0 %v4143
      %v4269 = vpop.f32.mrb[0].mxu0
      %v4270 = vadd.f32 0.0, %v4269
      %v4271 = vpop.f32.mrb[0].mxu0
      %v4272 = vpop.f32.mrb[0].mxu0
      %v4273 = vadd.f32 0.0, %v4272
      %v4274 = vpop.f32.mrb[0].mxu0
      %4275 = vmatprep.mubr.bf16.mxu0 0
      %4276 = vmatmul.mubr.bf16.gmra.mrb[0].mxu0 %v4146
      %v4277 = vpop.f32.mrb[0].mxu0
      %v4278 = vadd.f32 0.0, %v4277
      %v4279 = vpop.f32.mrb[0].mxu0
      %v4280 = vpop.f32.mrb[0].mxu0
      %v4281 = vadd.f32 0.0, %v4280
      %v4282 = vpop.f32.mrb[0].mxu0
      %4283 = vmatprep.mubr.bf16.mxu0 0
      %4284 = vmatmul.mubr.bf16.gmra.mrb[0].mxu0 %v4149
      %v4285 = vpop.f32.mrb[0].mxu0
      %v4286 = vadd.f32 0.0, %v4285
      %v4287 = vpop.f32.mrb[0].mxu0
      %v4288 = vpop.f32.mrb[0].mxu0
      %v4289 = vadd.f32 0.0, %v4288
      %v4290 = vpop.f32.mrb[0].mxu0
      %4291 = vmatprep.mubr.bf16.mxu0 0
      %4292 = vmatmul.mubr.bf16.gmra.mrb[0].mxu0 %v4152
      %v4293 = vpop.f32.mrb[0].mxu0
      %v4294 = vadd.f32 0.0, %v4293
      %v4295 = vpop.f32.mrb[0].mxu0
      %v4296 = vpop.f32.mrb[0].mxu0
      %v4297 = vadd.f32 0.0, %v4296
      %v4298 = vpop.f32.mrb[0].mxu0
      %4299 = vmatprep.mubr.bf16.mxu0 0
      %4300 = vmatmul.mubr.bf16.gmra.mrb[0].mxu0 %v4155
      %v4301 = vpop.f32.mrb[0].mxu0
      %v4302 = vadd.f32 0.0, %v4301
      %v4303 = vpop.f32.mrb[0].mxu0
      %v4304 = vpop.f32.mrb[0].mxu0
      %v4305 = vadd.f32 0.0, %v4304
      %v4306 = vpop.f32.mrb[0].mxu0
      %4307 = vmatprep.mubr.bf16.mxu0 0
      %4308 = vmatmul.mubr.bf16.gmra.mrb[0].mxu0 %v4158
      %v4309 = vpop.f32.mrb[0].mxu0
      %v4310 = vadd.f32 0.0, %v4309
      %v4311 = vpop.f32.mrb[0].mxu0
      %v4312 = vpop.f32.mrb[0].mxu0
      %v4313 = vadd.f32 0.0, %v4312
      %v4314 = vpop.f32.mrb[0].mxu0
      %4315 = vmatprep.mubr.bf16.mxu0 0
      %4316 = vmatmul.mubr.bf16.gmra.mrb[0].mxu0 %v4161
      %v4317 = vpop.f32.mrb[0].mxu0
      %v4318 = vadd.f32 0.0, %v4317
      %v4319 = vpop.f32.mrb[0].mxu0
      %v4320 = vpop.f32.mrb[0].mxu0
      %v4321 = vadd.f32 0.0, %v4320
      %v4322 = vpop.f32.mrb[0].mxu0
      %4323 = vdwg.mxu0
      %v4324 = vadd.f32 %v3586, %v4198
      %v4325 = vadd.f32 %v3587, %v4201
      %v4326 = vadd.f32 %v3588, %v4206
      %v4327 = vadd.f32 %v3589, %v4209
      %v4328 = vadd.f32 %v3590, %v4214
      %v4329 = vadd.f32 %v3591, %v4217
      %v4330 = vadd.f32 %v3592, %v4222
      %v4331 = vadd.f32 %v3593, %v4225
      %v4332 = vadd.f32 %v3594, %v4230
      %v4333 = vadd.f32 %v3595, %v4233
      %v4334 = vadd.f32 %v3596, %v4238
      %v4335 = vadd.f32 %v3597, %v4241
      %v4336 = vadd.f32 %v3598, %v4246
      %v4337 = vadd.f32 %v3599, %v4249
      %v4338 = vadd.f32 %v3600, %v4254
      %v4339 = vadd.f32 %v3601, %v4257
      %v4340 = vadd.f32 %v3602, %v4262
      %v4341 = vadd.f32 %v3603, %v4265
      %v4342 = vadd.f32 %v3604, %v4270
      %v4343 = vadd.f32 %v3605, %v4273
      %v4344 = vadd.f32 %v3606, %v4278
      %v4345 = vadd.f32 %v3607, %v4281
      %v4346 = vadd.f32 %v3608, %v4286
      %v4347 = vadd.f32 %v3609, %v4289
      %v4348 = vadd.f32 %v3610, %v4294
      %v4349 = vadd.f32 %v3611, %v4297
      %v4350 = vadd.f32 %v3612, %v4302
      %v4351 = vadd.f32 %v3613, %v4305
      %v4352 = vadd.f32 %v3614, %v4310
      %v4353 = vadd.f32 %v3615, %v4313
      %v4354 = vadd.f32 %v3616, %v4318
      %v4355 = vadd.f32 %v3617, %v4321
      %v4356 = vld [vmem:[%s3247] sm:$0xe]
      %v4357 = vld [vmem:[%s3247 + $0xc] sm:$0xe]
      %v4358 = vld [vmem:[%s3247 + $0x18] sm:$0xe]
      %v4359 = vld [vmem:[%s3247 + $0x24] sm:$0xe]
      %v4360 = vld [vmem:[%s3247 + $0x30] sm:$0xe]
      %v4361 = vld [vmem:[%s3247 + $0x3c] sm:$0xe]
      %v4362 = vld [vmem:[%s3247 + $0x48] sm:$0xe]
      %v4363 = vld [vmem:[%s3247 + $0x54] sm:$0xe]
      %v4364 = vld [vmem:[%s3247 + $0x60] sm:$0xe]
      %v4365 = vld [vmem:[%s3247 + $0x6c] sm:$0xe]
      %v4366 = vld [vmem:[%s3247 + $0x78] sm:$0xe]
      %v4367 = vld [vmem:[%s3247 + $0x84] sm:$0xe]
      %v4368 = vld [vmem:[%s3247 + $0x90] sm:$0xe]
      %v4369 = vld [vmem:[%s3247 + $0x9c] sm:$0xe]
      %v4370 = vld [vmem:[%s3247 + $0xa8] sm:$0xe]
      %v4371 = vld [vmem:[%s3247 + $0xb4] sm:$0xe]
      %v4420 = vrot.slane %v4356, 5
      %v4421 = vrot.slane %v4420, 4
      %v4422 = vrot.slane %v3619, 5
      %v4423 = vsel %vm1237, %v4421, %v4422
      %v4424 = vrot.slane %v4422, 4
      %v4425 = vrot.slane %v3620, 5
      %v4426 = vsel %vm1237, %v4424, %v4425
      %v4427 = vrot.slane %v4357, 5
      %v4428 = vrot.slane %v4427, 4
      %v4429 = vrot.slane %v3622, 5
      %v4430 = vsel %vm1237, %v4428, %v4429
      %v4431 = vrot.slane %v4429, 4
      %v4432 = vrot.slane %v3623, 5
      %v4433 = vsel %vm1237, %v4431, %v4432
      %v4434 = vrot.slane %v4358, 5
      %v4435 = vrot.slane %v4434, 4
      %v4436 = vrot.slane %v3625, 5
      %v4437 = vsel %vm1237, %v4435, %v4436
      %v4438 = vrot.slane %v4436, 4
      %v4439 = vrot.slane %v3626, 5
      %v4440 = vsel %vm1237, %v4438, %v4439
      %v4441 = vrot.slane %v4359, 5
      %v4442 = vrot.slane %v4441, 4
      %v4443 = vrot.slane %v3628, 5
      %v4444 = vsel %vm1237, %v4442, %v4443
      %v4445 = vrot.slane %v4443, 4
      %v4446 = vrot.slane %v3629, 5
      %v4447 = vsel %vm1237, %v4445, %v4446
      %v4448 = vrot.slane %v4360, 5
      %v4449 = vrot.slane %v4448, 4
      %v4450 = vrot.slane %v3631, 5
      %v4451 = vsel %vm1237, %v4449, %v4450
      %v4452 = vrot.slane %v4450, 4
      %v4453 = vrot.slane %v3632, 5
      %v4454 = vsel %vm1237, %v4452, %v4453
      %v4455 = vrot.slane %v4361, 5
      %v4456 = vrot.slane %v4455, 4
      %v4457 = vrot.slane %v3634, 5
      %v4458 = vsel %vm1237, %v4456, %v4457
      %v4459 = vrot.slane %v4457, 4
      %v4460 = vrot.slane %v3635, 5
      %v4461 = vsel %vm1237, %v4459, %v4460
      %v4462 = vrot.slane %v4362, 5
      %v4463 = vrot.slane %v4462, 4
      %v4464 = vrot.slane %v3637, 5
      %v4465 = vsel %vm1237, %v4463, %v4464
      %v4466 = vrot.slane %v4464, 4
      %v4467 = vrot.slane %v3638, 5
      %v4468 = vsel %vm1237, %v4466, %v4467
      %v4469 = vrot.slane %v4363, 5
      %v4470 = vrot.slane %v4469, 4
      %v4471 = vrot.slane %v3640, 5
      %v4472 = vsel %vm1237, %v4470, %v4471
      %v4473 = vrot.slane %v4471, 4
      %v4474 = vrot.slane %v3641, 5
      %v4475 = vsel %vm1237, %v4473, %v4474
      %v4476 = vrot.slane %v4364, 5
      %v4477 = vrot.slane %v4476, 4
      %v4478 = vrot.slane %v3643, 5
      %v4479 = vsel %vm1237, %v4477, %v4478
      %v4480 = vrot.slane %v4478, 4
      %v4481 = vrot.slane %v3644, 5
      %v4482 = vsel %vm1237, %v4480, %v4481
      %v4483 = vrot.slane %v4365, 5
      %v4484 = vrot.slane %v4483, 4
      %v4485 = vrot.slane %v3646, 5
      %v4486 = vsel %vm1237, %v4484, %v4485
      %v4487 = vrot.slane %v4485, 4
      %v4488 = vrot.slane %v3647, 5
      %v4489 = vsel %vm1237, %v4487, %v4488
      %v4490 = vrot.slane %v4366, 5
      %v4491 = vrot.slane %v4490, 4
      %v4492 = vrot.slane %v3649, 5
      %v4493 = vsel %vm1237, %v4491, %v4492
      %v4494 = vrot.slane %v4492, 4
      %v4495 = vrot.slane %v3650, 5
      %v4496 = vsel %vm1237, %v4494, %v4495
      %v4497 = vrot.slane %v4367, 5
      %v4498 = vrot.slane %v4497, 4
      %v4499 = vrot.slane %v3652, 5
      %v4500 = vsel %vm1237, %v4498, %v4499
      %v4501 = vrot.slane %v4499, 4
      %v4502 = vrot.slane %v3653, 5
      %v4503 = vsel %vm1237, %v4501, %v4502
      %v4504 = vrot.slane %v4368, 5
      %v4505 = vrot.slane %v4504, 4
      %v4506 = vrot.slane %v3655, 5
      %v4507 = vsel %vm1237, %v4505, %v4506
      %v4508 = vrot.slane %v4506, 4
      %v4509 = vrot.slane %v3656, 5
      %v4510 = vsel %vm1237, %v4508, %v4509
      %v4511 = vrot.slane %v4369, 5
      %v4512 = vrot.slane %v4511, 4
      %v4513 = vrot.slane %v3658, 5
      %v4514 = vsel %vm1237, %v4512, %v4513
      %v4515 = vrot.slane %v4513, 4
      %v4516 = vrot.slane %v3659, 5
      %v4517 = vsel %vm1237, %v4515, %v4516
      %v4518 = vrot.slane %v4370, 5
      %v4519 = vrot.slane %v4518, 4
      %v4520 = vrot.slane %v3661, 5
      %v4521 = vsel %vm1237, %v4519, %v4520
      %v4522 = vrot.slane %v4520, 4
      %v4523 = vrot.slane %v3662, 5
      %v4524 = vsel %vm1237, %v4522, %v4523
      %v4525 = vrot.slane %v4371, 5
      %v4526 = vrot.slane %v4525, 4
      %v4527 = vrot.slane %v3664, 5
      %v4528 = vsel %vm1237, %v4526, %v4527
      %v4529 = vrot.slane %v4527, 4
      %v4530 = vrot.slane %v3665, 5
      %v4531 = vsel %vm1237, %v4529, %v4530
      %s4532 = scalar_lea.vmem %s1, 128
      %v4533 = vld [vmem:[%s4532] sm:$0xf]
      %v4534 = vld [vmem:[%s4532 + $0x4] sm:$0xf]
      %v4535 = vld [vmem:[%s4532 + $0x8] sm:$0xf]
      %v4536 = vld [vmem:[%s4532 + $0xc] sm:$0xf]
      %v4537 = vunpack.c.l.b16 %v4423
      %v4538 = vunpack.c.l.b16 %v4426
      %v4539 = vunpack.c.l.b16 %v4430
      %v4540 = vunpack.c.l.b16 %v4433
      %v4541 = vunpack.c.l.b16 %v4437
      %v4542 = vunpack.c.l.b16 %v4440
      %v4543 = vunpack.c.l.b16 %v4444
      %v4544 = vunpack.c.l.b16 %v4447
      %v4545 = vunpack.c.l.b16 %v4451
      %v4546 = vunpack.c.l.b16 %v4454
      %v4547 = vunpack.c.l.b16 %v4458
      %v4548 = vunpack.c.l.b16 %v4461
      %v4549 = vunpack.c.l.b16 %v4465
      %v4550 = vunpack.c.l.b16 %v4468
      %v4551 = vunpack.c.l.b16 %v4472
      %v4552 = vunpack.c.l.b16 %v4475
      %v4553 = vunpack.c.l.b16 %v4479
      %v4554 = vunpack.c.l.b16 %v4482
      %v4555 = vunpack.c.l.b16 %v4486
      %v4556 = vunpack.c.l.b16 %v4489
      %v4557 = vunpack.c.l.b16 %v4493
      %v4558 = vunpack.c.l.b16 %v4496
      %v4559 = vunpack.c.l.b16 %v4500
      %v4560 = vunpack.c.l.b16 %v4503
      %v4561 = vunpack.c.l.b16 %v4507
      %v4562 = vunpack.c.l.b16 %v4510
      %v4563 = vunpack.c.l.b16 %v4514
      %v4564 = vunpack.c.l.b16 %v4517
      %v4565 = vunpack.c.l.b16 %v4521
      %v4566 = vunpack.c.l.b16 %v4524
      %v4567 = vunpack.c.l.b16 %v4528
      %v4568 = vunpack.c.l.b16 %v4531
      %v4569 = vpack.c.b16 %v4538, %v4537
      %v4570 = vpack.c.b16 %v4540, %v4539
      %v4571 = vpack.c.b16 %v4542, %v4541
      %v4572 = vpack.c.b16 %v4544, %v4543
      %v4573 = vpack.c.b16 %v4546, %v4545
      %v4574 = vpack.c.b16 %v4548, %v4547
      %v4575 = vpack.c.b16 %v4550, %v4549
      %v4576 = vpack.c.b16 %v4552, %v4551
      %v4577 = vpack.c.b16 %v4554, %v4553
      %v4578 = vpack.c.b16 %v4556, %v4555
      %v4579 = vpack.c.b16 %v4558, %v4557
      %v4580 = vpack.c.b16 %v4560, %v4559
      %v4581 = vpack.c.b16 %v4562, %v4561
      %v4582 = vpack.c.b16 %v4564, %v4563
      %v4583 = vpack.c.b16 %v4566, %v4565
      %v4584 = vpack.c.b16 %v4568, %v4567
      %v4589 = vunpack.c.l.b16 %v4533
      %v4590 = vunpack.c.l.b16 %v4534
      %v4591 = vunpack.c.l.b16 %v4535
      %v4592 = vunpack.c.l.b16 %v4536
      %v4593 = vpack.c.b16 %v4590, %v4589
      %v4594 = vpack.c.b16 %v4592, %v4591
      %v4598 = vsel %vm676, %v4569, 0
      %v4601 = vsel %vm676, %v4570, 0
      %v4604 = vsel %vm676, %v4571, 0
      %v4607 = vsel %vm676, %v4572, 0
      %v4610 = vsel %vm676, %v4573, 0
      %v4613 = vsel %vm676, %v4574, 0
      %v4616 = vsel %vm676, %v4575, 0
      %v4619 = vsel %vm676, %v4576, 0
      %v4622 = vsel %vm676, %v4577, 0
      %v4625 = vsel %vm676, %v4578, 0
      %v4628 = vsel %vm676, %v4579, 0
      %v4631 = vsel %vm676, %v4580, 0
      %v4634 = vsel %vm676, %v4581, 0
      %v4637 = vsel %vm676, %v4582, 0
      %v4640 = vsel %vm676, %v4583, 0
      %v4643 = vsel %vm676, %v4584, 0
      %4645 = vmatprep.subr.bf16.mxu0 0
      %4646 = vmatpush1.bf16.msra.mxu0 %v4593
      %4647 = vmatprep.subr.bf16.mxu0 0
      %4648 = vmatpush1.bf16.msra.mxu0 %v4594
      %4649 = vmatprep.subr.bf16.mxu0 0
      %4650 = vmatpush1.bf16.msra.mxu0 0
      %4651 = vmatprep.subr.bf16.mxu0 0
      %4652 = vmatpush1.bf16.msra.mxu0 0
      %4653 = vmatprep.subr.bf16.mxu0 0
      %4654 = vmatpush1.bf16.msra.mxu0 0
      %4655 = vmatprep.subr.bf16.mxu0 0
      %4656 = vmatpush1.bf16.msra.mxu0 0
      %4657 = vmatprep.subr.bf16.mxu0 0
      %4658 = vmatpush1.bf16.msra.mxu0 0
      %4659 = vmatprep.subr.bf16.mxu0 0
      %4660 = vmatpush1.bf16.msra.mxu0 0
      %4661 = vmatprep.subr.bf16.mxu0 0
      %4662 = vmatpush1.bf16.msra.mxu0 0
      %4663 = vmatprep.subr.bf16.mxu0 0
      %4664 = vmatpush1.bf16.msra.mxu0 0
      %4665 = vmatprep.subr.bf16.mxu0 0
      %4666 = vmatpush1.bf16.msra.mxu0 0
      %4667 = vmatprep.subr.bf16.mxu0 0
      %4668 = vmatpush1.bf16.msra.mxu0 0
      %4669 = vmatprep.subr.bf16.mxu0 0
      %4670 = vmatpush1.bf16.msra.mxu0 0
      %4671 = vmatprep.subr.bf16.mxu0 0
      %4672 = vmatpush1.bf16.msra.mxu0 0
      %4673 = vmatprep.subr.bf16.mxu0 0
      %4674 = vmatpush1.bf16.msra.mxu0 0
      %4675 = vmatprep.subr.bf16.mxu0 0
      %4676 = vmatpush1.bf16.msra.mxu0 0
      %4677 = vmatprep.mubr.bf16.mxu0 0
      %4678 = vmatmul.mubr.bf16.gmra.mrb[0].mxu0 %v4598
      %v4679 = vpop.f32.mrb[0].mxu0
      %v4680 = vadd.f32 0.0, %v4679
      %v4681 = vpop.f32.mrb[0].mxu0
      %v4682 = vpop.f32.mrb[0].mxu0
      %v4683 = vadd.f32 0.0, %v4682
      %v4684 = vpop.f32.mrb[0].mxu0
      %4685 = vmatprep.mubr.bf16.mxu0 0
      %4686 = vmatmul.mubr.bf16.gmra.mrb[0].mxu0 %v4601
      %v4687 = vpop.f32.mrb[0].mxu0
      %v4688 = vadd.f32 0.0, %v4687
      %v4689 = vpop.f32.mrb[0].mxu0
      %v4690 = vpop.f32.mrb[0].mxu0
      %v4691 = vadd.f32 0.0, %v4690
      %v4692 = vpop.f32.mrb[0].mxu0
      %4693 = vmatprep.mubr.bf16.mxu0 0
      %4694 = vmatmul.mubr.bf16.gmra.mrb[0].mxu0 %v4604
      %v4695 = vpop.f32.mrb[0].mxu0
      %v4696 = vadd.f32 0.0, %v4695
      %v4697 = vpop.f32.mrb[0].mxu0
      %v4698 = vpop.f32.mrb[0].mxu0
      %v4699 = vadd.f32 0.0, %v4698
      %v4700 = vpop.f32.mrb[0].mxu0
      %4701 = vmatprep.mubr.bf16.mxu0 0
      %4702 = vmatmul.mubr.bf16.gmra.mrb[0].mxu0 %v4607
      %v4703 = vpop.f32.mrb[0].mxu0
      %v4704 = vadd.f32 0.0, %v4703
      %v4705 = vpop.f32.mrb[0].mxu0
      %v4706 = vpop.f32.mrb[0].mxu0
      %v4707 = vadd.f32 0.0, %v4706
      %v4708 = vpop.f32.mrb[0].mxu0
      %4709 = vmatprep.mubr.bf16.mxu0 0
      %4710 = vmatmul.mubr.bf16.gmra.mrb[0].mxu0 %v4610
      %v4711 = vpop.f32.mrb[0].mxu0
      %v4712 = vadd.f32 0.0, %v4711
      %v4713 = vpop.f32.mrb[0].mxu0
      %v4714 = vpop.f32.mrb[0].mxu0
      %v4715 = vadd.f32 0.0, %v4714
      %v4716 = vpop.f32.mrb[0].mxu0
      %4717 = vmatprep.mubr.bf16.mxu0 0
      %4718 = vmatmul.mubr.bf16.gmra.mrb[0].mxu0 %v4613
      %v4719 = vpop.f32.mrb[0].mxu0
      %v4720 = vadd.f32 0.0, %v4719
      %v4721 = vpop.f32.mrb[0].mxu0
      %v4722 = vpop.f32.mrb[0].mxu0
      %v4723 = vadd.f32 0.0, %v4722
      %v4724 = vpop.f32.mrb[0].mxu0
      %4725 = vmatprep.mubr.bf16.mxu0 0
      %4726 = vmatmul.mubr.bf16.gmra.mrb[0].mxu0 %v4616
      %v4727 = vpop.f32.mrb[0].mxu0
      %v4728 = vadd.f32 0.0, %v4727
      %v4729 = vpop.f32.mrb[0].mxu0
      %v4730 = vpop.f32.mrb[0].mxu0
      %v4731 = vadd.f32 0.0, %v4730
      %v4732 = vpop.f32.mrb[0].mxu0
      %4733 = vmatprep.mubr.bf16.mxu0 0
      %4734 = vmatmul.mubr.bf16.gmra.mrb[0].mxu0 %v4619
      %v4735 = vpop.f32.mrb[0].mxu0
      %v4736 = vadd.f32 0.0, %v4735
      %v4737 = vpop.f32.mrb[0].mxu0
      %v4738 = vpop.f32.mrb[0].mxu0
      %v4739 = vadd.f32 0.0, %v4738
      %v4740 = vpop.f32.mrb[0].mxu0
      %4741 = vmatprep.mubr.bf16.mxu0 0
      %4742 = vmatmul.mubr.bf16.gmra.mrb[0].mxu0 %v4622
      %v4743 = vpop.f32.mrb[0].mxu0
      %v4744 = vadd.f32 0.0, %v4743
      %v4745 = vpop.f32.mrb[0].mxu0
      %v4746 = vpop.f32.mrb[0].mxu0
      %v4747 = vadd.f32 0.0, %v4746
      %v4748 = vpop.f32.mrb[0].mxu0
      %4749 = vmatprep.mubr.bf16.mxu0 0
      %4750 = vmatmul.mubr.bf16.gmra.mrb[0].mxu0 %v4625
      %v4751 = vpop.f32.mrb[0].mxu0
      %v4752 = vadd.f32 0.0, %v4751
      %v4753 = vpop.f32.mrb[0].mxu0
      %v4754 = vpop.f32.mrb[0].mxu0
      %v4755 = vadd.f32 0.0, %v4754
      %v4756 = vpop.f32.mrb[0].mxu0
      %4757 = vmatprep.mubr.bf16.mxu0 0
      %4758 = vmatmul.mubr.bf16.gmra.mrb[0].mxu0 %v4628
      %v4759 = vpop.f32.mrb[0].mxu0
      %v4760 = vadd.f32 0.0, %v4759
      %v4761 = vpop.f32.mrb[0].mxu0
      %v4762 = vpop.f32.mrb[0].mxu0
      %v4763 = vadd.f32 0.0, %v4762
      %v4764 = vpop.f32.mrb[0].mxu0
      %4765 = vmatprep.mubr.bf16.mxu0 0
      %4766 = vmatmul.mubr.bf16.gmra.mrb[0].mxu0 %v4631
      %v4767 = vpop.f32.mrb[0].mxu0
      %v4768 = vadd.f32 0.0, %v4767
      %v4769 = vpop.f32.mrb[0].mxu0
      %v4770 = vpop.f32.mrb[0].mxu0
      %v4771 = vadd.f32 0.0, %v4770
      %v4772 = vpop.f32.mrb[0].mxu0
      %4773 = vmatprep.mubr.bf16.mxu0 0
      %4774 = vmatmul.mubr.bf16.gmra.mrb[0].mxu0 %v4634
      %v4775 = vpop.f32.mrb[0].mxu0
      %v4776 = vadd.f32 0.0, %v4775
      %v4777 = vpop.f32.mrb[0].mxu0
      %v4778 = vpop.f32.mrb[0].mxu0
      %v4779 = vadd.f32 0.0, %v4778
      %v4780 = vpop.f32.mrb[0].mxu0
      %4781 = vmatprep.mubr.bf16.mxu0 0
      %4782 = vmatmul.mubr.bf16.gmra.mrb[0].mxu0 %v4637
      %v4783 = vpop.f32.mrb[0].mxu0
      %v4784 = vadd.f32 0.0, %v4783
      %v4785 = vpop.f32.mrb[0].mxu0
      %v4786 = vpop.f32.mrb[0].mxu0
      %v4787 = vadd.f32 0.0, %v4786
      %v4788 = vpop.f32.mrb[0].mxu0
      %4789 = vmatprep.mubr.bf16.mxu0 0
      %4790 = vmatmul.mubr.bf16.gmra.mrb[0].mxu0 %v4640
      %v4791 = vpop.f32.mrb[0].mxu0
      %v4792 = vadd.f32 0.0, %v4791
      %v4793 = vpop.f32.mrb[0].mxu0
      %v4794 = vpop.f32.mrb[0].mxu0
      %v4795 = vadd.f32 0.0, %v4794
      %v4796 = vpop.f32.mrb[0].mxu0
      %4797 = vmatprep.mubr.bf16.mxu0 0
      %4798 = vmatmul.mubr.bf16.gmra.mrb[0].mxu0 %v4643
      %v4799 = vpop.f32.mrb[0].mxu0
      %v4800 = vadd.f32 0.0, %v4799
      %v4801 = vpop.f32.mrb[0].mxu0
      %v4802 = vpop.f32.mrb[0].mxu0
      %v4803 = vadd.f32 0.0, %v4802
      %v4804 = vpop.f32.mrb[0].mxu0
      %4805 = vdwg.mxu0
      %v4806 = vadd.f32 %v4324, %v4680
      %v4807 = vadd.f32 %v4325, %v4683
      %v4808 = vadd.f32 %v4326, %v4688
      %v4809 = vadd.f32 %v4327, %v4691
      %v4810 = vadd.f32 %v4328, %v4696
      %v4811 = vadd.f32 %v4329, %v4699
      %v4812 = vadd.f32 %v4330, %v4704
      %v4813 = vadd.f32 %v4331, %v4707
      %v4814 = vadd.f32 %v4332, %v4712
      %v4815 = vadd.f32 %v4333, %v4715
      %v4816 = vadd.f32 %v4334, %v4720
      %v4817 = vadd.f32 %v4335, %v4723
      %v4818 = vadd.f32 %v4336, %v4728
      %v4819 = vadd.f32 %v4337, %v4731
      %v4820 = vadd.f32 %v4338, %v4736
      %v4821 = vadd.f32 %v4339, %v4739
      %v4822 = vadd.f32 %v4340, %v4744
      %v4823 = vadd.f32 %v4341, %v4747
      %v4824 = vadd.f32 %v4342, %v4752
      %v4825 = vadd.f32 %v4343, %v4755
      %v4826 = vadd.f32 %v4344, %v4760
      %v4827 = vadd.f32 %v4345, %v4763
      %v4828 = vadd.f32 %v4346, %v4768
      %v4829 = vadd.f32 %v4347, %v4771
      %v4830 = vadd.f32 %v4348, %v4776
      %v4831 = vadd.f32 %v4349, %v4779
      %v4832 = vadd.f32 %v4350, %v4784
      %v4833 = vadd.f32 %v4351, %v4787
      %v4834 = vadd.f32 %v4352, %v4792
      %v4835 = vadd.f32 %v4353, %v4795
      %v4836 = vadd.f32 %v4354, %v4800
      %v4837 = vadd.f32 %v4355, %v4803
      %v4838 = vld [vmem:[%s2] sm:$0x1]
      %v4840 = vlaneseq
      %v4841 = vshrl.u32 %v4840, 7
      %v4842 = vsub.s32 0, %v4841
      %v4843 = vrot.slane %v4838, %v4842
      %v4845 = vadd.f32 %v4806, %v4843
      %v4846 = vadd.f32 %v4807, %v4843
      %v4847 = vadd.f32 %v4808, %v4843
      %v4848 = vadd.f32 %v4809, %v4843
      %v4849 = vadd.f32 %v4810, %v4843
      %v4850 = vadd.f32 %v4811, %v4843
      %v4851 = vadd.f32 %v4812, %v4843
      %v4852 = vadd.f32 %v4813, %v4843
      %v4853 = vadd.f32 %v4814, %v4843
      %v4854 = vadd.f32 %v4815, %v4843
      %v4855 = vadd.f32 %v4816, %v4843
      %v4856 = vadd.f32 %v4817, %v4843
      %v4857 = vadd.f32 %v4818, %v4843
      %v4858 = vadd.f32 %v4819, %v4843
      %v4859 = vadd.f32 %v4820, %v4843
      %v4860 = vadd.f32 %v4821, %v4843
      %v4861 = vadd.f32 %v4822, %v4843
      %v4862 = vadd.f32 %v4823, %v4843
      %v4863 = vadd.f32 %v4824, %v4843
      %v4864 = vadd.f32 %v4825, %v4843
      %v4865 = vadd.f32 %v4826, %v4843
      %v4866 = vadd.f32 %v4827, %v4843
      %v4867 = vadd.f32 %v4828, %v4843
      %v4868 = vadd.f32 %v4829, %v4843
      %v4869 = vadd.f32 %v4830, %v4843
      %v4870 = vadd.f32 %v4831, %v4843
      %v4871 = vadd.f32 %v4832, %v4843
      %v4872 = vadd.f32 %v4833, %v4843
      %v4873 = vadd.f32 %v4834, %v4843
      %v4874 = vadd.f32 %v4835, %v4843
      %v4875 = vadd.f32 %v4836, %v4843
      %v4876 = vadd.f32 %v4837, %v4843
      %4877 = vst [vmem:[%s170] sm:$0xff] %v4845
      %4878 = vst [vmem:[%s170 + $0x8] sm:$0xff] %v4846
      %4879 = vst [vmem:[%s170 + $0x10] sm:$0xff] %v4847
      %4880 = vst [vmem:[%s170 + $0x18] sm:$0xff] %v4848
      %4881 = vst [vmem:[%s170 + $0x20] sm:$0xff] %v4849
      %4882 = vst [vmem:[%s170 + $0x28] sm:$0xff] %v4850
      %4883 = vst [vmem:[%s170 + $0x30] sm:$0xff] %v4851
      %4884 = vst [vmem:[%s170 + $0x38] sm:$0xff] %v4852
      %4885 = vst [vmem:[%s170 + $0x40] sm:$0xff] %v4853
      %4886 = vst [vmem:[%s170 + $0x48] sm:$0xff] %v4854
      %4887 = vst [vmem:[%s170 + $0x50] sm:$0xff] %v4855
      %4888 = vst [vmem:[%s170 + $0x58] sm:$0xff] %v4856
      %4889 = vst [vmem:[%s170 + $0x60] sm:$0xff] %v4857
      %4890 = vst [vmem:[%s170 + $0x68] sm:$0xff] %v4858
      %4891 = vst [vmem:[%s170 + $0x70] sm:$0xff] %v4859
      %4892 = vst [vmem:[%s170 + $0x78] sm:$0xff] %v4860
      %4893 = vst [vmem:[%s170 + $0x80] sm:$0xff] %v4861
      %4894 = vst [vmem:[%s170 + $0x88] sm:$0xff] %v4862
      %4895 = vst [vmem:[%s170 + $0x90] sm:$0xff] %v4863
      %4896 = vst [vmem:[%s170 + $0x98] sm:$0xff] %v4864
      %4897 = vst [vmem:[%s170 + $0xa0] sm:$0xff] %v4865
      %4898 = vst [vmem:[%s170 + $0xa8] sm:$0xff] %v4866
      %4899 = vst [vmem:[%s170 + $0xb0] sm:$0xff] %v4867
      %4900 = vst [vmem:[%s170 + $0xb8] sm:$0xff] %v4868
      %4901 = vst [vmem:[%s170 + $0xc0] sm:$0xff] %v4869
      %4902 = vst [vmem:[%s170 + $0xc8] sm:$0xff] %v4870
      %4903 = vst [vmem:[%s170 + $0xd0] sm:$0xff] %v4871
      %4904 = vst [vmem:[%s170 + $0xd8] sm:$0xff] %v4872
      %4905 = vst [vmem:[%s170 + $0xe0] sm:$0xff] %v4873
      %4906 = vst [vmem:[%s170 + $0xe8] sm:$0xff] %v4874
      %4907 = vst [vmem:[%s170 + $0xf0] sm:$0xff] %v4875
      %4908 = vst [vmem:[%s170 + $0xf8] sm:$0xff] %v4876
      %p4909 = scmp.lt.s32.totalorder %s14, 1
      %s4910 = scalar_select %p4909, %s14, 1
      %s4911 = smul.addr %s4910, 32
      %s4912 = smul.addr %s4911, 8
      %s4913 = scalar_lea.vmem %s3, %s4912
      // Predicated region
      $region33: #{output_proj.1} parent=31 // pred_check
        %p4914 = pneg %p100
      $region34: #{output_proj.1} parent=31 // pred_check_branch
        %4916 = sbr.rel (%p4914) target = $region36
      $region35: #{output_proj.1} parent=31 // pred_region
        _
      $region36: #{output_proj.1} parent=31 // pred_fallthru
        _
    $region32: #{output_proj.1} parent=5 // pred_fallthru
      _
    %p4917 = scmp.le.s32.totalorder 2, %s9
    // Predicated region
    $region37: #{output_proj.1} parent=5 // pred_check
      %p4918 = pneg %p4917
    $region38: #{output_proj.1} parent=5 // pred_check_branch
      %4920 = sbr.rel (%p4918) target = $region40
    $region39: #{output_proj.1} parent=5 // pred_region
      %s4921 = ssub.s32 %s9, 2
      // Predicated region
      $region41: #{output_proj.1} parent=39 // pred_check
        %p4922 = pneg %p106
      $region42: #{output_proj.1} parent=39 // pred_check_branch
        %4924 = sbr.rel (%p4922) target = $region44
      $region43: #{output_proj.1} parent=39 // pred_region
        %p4925 = scmp.lt.s32.totalorder %s15, 1
        %s4926 = scalar_select %p4925, %s15, 1
        %s4927 = smul.addr %s4926, 32
        %s4928 = smul.addr %s4927, 8
        %s4929 = scalar_lea.vmem %s3, %s4928
      $region44: #{output_proj.1} parent=39 // pred_fallthru
        _
    $region40: #{output_proj.1} parent=5 // pred_fallthru
      _
  $region6: #{output_proj.1} parent=0 // loop_footer
    %s13 = sadd.s32 1, %s9
  $region7: #{output_proj.1} parent=0 // loop_footer_branch
    %8 = sbr.rel target = $region3
  $region8: #{output_proj.1} parent=0 // loop_exit
    _

</llo_original>
